<compile_context>
chip_gen: v7x
topology: tpu7x:2x2x1
jax: 0.10.0
libtpu: 0.0.40
codegen_flags: <defaults>
</compile_context>

<pallas_src>
import functools

import jax
import jax.numpy as jnp
from jax.experimental import pallas as pl
from jax.experimental.pallas import tpu as pltpu


def _pick_tile_n(C, H, B, budget_bytes=24 * 1024 * 1024):
    """Largest streaming tile (512/256/128 node rows) whose double-buffered
    footprint fits a conservative VMEM budget (safe on v5e/v6e/v7x)."""
    resident = (2 * B * C + C * H + H * C + 2 * B * C) * 4   # accumulators + weights + y
    for tile in (512, 256, 128):
        streamed = 2 * 2 * tile * C * 4 + 4 * tile * 4       # dbl-buffered x-in + out tiles (+ batch)
        if streamed + resident <= budget_bytes:
            return tile
    return 128


# ---------------------------------------------------------------------------
# Pass 1: segment sum / max accumulation + fused MLP epilogue -> y [B, C]
# ---------------------------------------------------------------------------
def _reduce_mlp_kernel(x_ref, brow_ref, bcol_ref, w1_ref, w2_ref, y_ref,
                       sum_acc, max_acc, *, num_graphs, unroll_graphs):
    B = num_graphs
    i = pl.program_id(0)

    @pl.when(i == 0)
    def _init():
        sum_acc[...] = jnp.zeros_like(sum_acc)
        max_acc[...] = jnp.full_like(max_acc, -jnp.inf)

    x = x_ref[...]                      # [tile_n, C]; rows past N (ragged tail) are undefined
    brow = brow_ref[...]                # [1, tile_n] int32 (padded rows carry id == B)
    bcol = bcol_ref[...]                # [tile_n, 1] int32
    tile_n = x.shape[0]

    # Neutralize undefined / out-of-range rows: padded batch id == B marks them.
    valid = bcol < B                    # [tile_n, 1]
    xs = jnp.where(valid, x, 0.0)       # garbage (possibly NaN/Inf) rows -> exact 0

    # --- scatter-sum: one-hot [B, tile_n] @ xs (MXU, K = tile_n fills depth) --
    gids = jax.lax.broadcasted_iota(jnp.int32, (B, tile_n), 0)
    maskf = (gids == brow).astype(jnp.float32)     # id == B matches nothing -> zero column
    sum_acc[...] += jnp.dot(maskf, xs, preferred_element_type=jnp.float32)

    # --- scatter-max: per-graph masked max written into its accumulator row ---
    if unroll_graphs:
        for b in range(B):
            tile_max = jnp.max(jnp.where(bcol == b, x, -jnp.inf), axis=0, keepdims=True)
            max_acc[b:b + 1, :] = jnp.maximum(max_acc[b:b + 1, :], tile_max)
    else:
        # Bounded instruction footprint for large graph counts.
        def body(b, carry):
            tile_max = jnp.max(jnp.where(bcol == b, x, -jnp.inf), axis=0, keepdims=True)
            max_acc[pl.ds(b, 1), :] = jnp.maximum(max_acc[pl.ds(b, 1), :], tile_max)
            return carry
        jax.lax.fori_loop(0, B, body, 0)

    # --- epilogue: empty-segment fixup + fused MLP -> y ------------------------
    @pl.when(i == pl.num_programs(0) - 1)
    def _epilogue():
        # Graphs with no nodes keep -inf -> rewritten to 0 (scatter-max default
        # fill).  NOTE: a graph whose features are all literally -inf would also
        # be rewritten to 0 (degenerate case; documented contract).
        max_r = max_acc[...]
        max_r = jnp.where(max_r == -jnp.inf, 0.0, max_r)
        stacked = jnp.concatenate([max_r, sum_acc[...]], axis=0)           # [2B, C]
        h = jnp.maximum(
            jnp.dot(stacked, w1_ref[...], preferred_element_type=jnp.float32), 0.0)
        o = jnp.dot(h, w2_ref[...], preferred_element_type=jnp.float32)    # [2B, C]
        y_ref[...] = jnp.maximum(o[:B] + o[B:], 0.0).astype(y_ref.dtype)


# ---------------------------------------------------------------------------
# Pass 2: out = x * y[batch]   (gather + elementwise, parallel over node tiles)
# ---------------------------------------------------------------------------
def _gather_mul_kernel(x_ref, bcol_ref, y_ref, o_ref, *, num_graphs):
    B = num_graphs
    x = x_ref[...]                      # [tile_n, C]
    bcol = bcol_ref[...]                # [tile_n, 1]; padded/ragged rows carry id == B
    y = y_ref[...]                      # [B, C]
    tile_n = x.shape[0]

    if B <= 8:
        # Tiny B: pure select chain on the VPU (B selects, no adds).
        y_nodes = jnp.zeros_like(x)
        for b in range(B):
            y_nodes = jnp.where(bcol == b, y[b:b + 1, :], y_nodes)
    else:
        # Transposed one-hot built directly from iota (no XLU transpose) -> MXU gather.
        gid_iota = jax.lax.broadcasted_iota(jnp.int32, (tile_n, B), 1)
        mask_t = (gid_iota == bcol).astype(jnp.float32)        # [tile_n, B]
        y_nodes = jnp.dot(mask_t, y, preferred_element_type=jnp.float32)

    # Rows past N in the last partial tile compute garbage*0, but Pallas discards
    # writes to the padded region of a partial output block.
    o_ref[...] = (x * y_nodes).astype(o_ref.dtype)


# ---------------------------------------------------------------------------
# Wrapper
# ---------------------------------------------------------------------------
def feature_attention(x, batch, w1, w2, num_graphs, tile_n=None):
    N, C = x.shape
    H = w1.shape[1]
    B = int(num_graphs)

    if tile_n is None:
        tile_n = _pick_tile_n(C, H, B)
    num_tiles = (N + tile_n - 1) // tile_n
    n_pad = num_tiles * tile_n

    # Only the tiny 1-D batch array is padded (id == B never matches a graph);
    # x and out stay unpadded -> no [N, C] pad/slice HBM round trips.
    batch = batch.astype(jnp.int32)
    if n_pad != N:
        batch_p = jnp.pad(batch, (0, n_pad - N), constant_values=B)
    else:
        batch_p = batch
    batch_row = batch_p.reshape(1, n_pad)
    batch_col = batch_p.reshape(n_pad, 1)

    cparams_reduce = pltpu.CompilerParams(
        dimension_semantics=("arbitrary",),
        vmem_limit_bytes=32 * 1024 * 1024,
    )
    cparams_map = pltpu.CompilerParams(
        dimension_semantics=("parallel",),
        vmem_limit_bytes=32 * 1024 * 1024,
    )

    unroll_graphs = B <= 16

    # ---- pass 1: y = relu(mlp(max) + mlp(sum))  -> [B, C] -----------------
    reduce_kernel = functools.partial(
        _reduce_mlp_kernel, num_graphs=B, unroll_graphs=unroll_graphs)
    y = pl.pallas_call(
        reduce_kernel,
        out_shape=jax.ShapeDtypeStruct((B, C), jnp.float32),
        grid_spec=pltpu.PrefetchScalarGridSpec(
            num_scalar_prefetch=0,
            grid=(num_tiles,),
            in_specs=[
                pl.BlockSpec((tile_n, C), lambda i: (i, 0)),   # x tile (ragged last tile OK)
                pl.BlockSpec((1, tile_n), lambda i: (0, i)),   # batch row
                pl.BlockSpec((tile_n, 1), lambda i: (i, 0)),   # batch col
                pl.BlockSpec((C, H), lambda i: (0, 0)),        # w1 (resident)
                pl.BlockSpec((H, C), lambda i: (0, 0)),        # w2 (resident)
            ],
            out_specs=pl.BlockSpec((B, C), lambda i: (0, 0)),
            scratch_shapes=[
                pltpu.VMEM((B, C), jnp.float32),               # sum accumulator
                pltpu.VMEM((B, C), jnp.float32),               # max accumulator
            ],
        ),
        compiler_params=cparams_reduce,
    )(x, batch_row, batch_col, w1, w2)

    # ---- pass 2: out = x * y[batch] ---------------------------------------
    gather_kernel = functools.partial(_gather_mul_kernel, num_graphs=B)
    out = pl.pallas_call(
        gather_kernel,
        out_shape=jax.ShapeDtypeStruct((N, C), x.dtype),
        grid_spec=pltpu.PrefetchScalarGridSpec(
            num_scalar_prefetch=0,
            grid=(num_tiles,),
            in_specs=[
                pl.BlockSpec((tile_n, C), lambda i: (i, 0)),   # x tile
                pl.BlockSpec((tile_n, 1), lambda i: (i, 0)),   # batch col
                pl.BlockSpec((B, C), lambda i: (0, 0)),        # y (full, resident)
            ],
            out_specs=pl.BlockSpec((tile_n, C), lambda i: (i, 0)),
        ),
        compiler_params=cparams_map,
    )(x, batch_col, y)

    return out


# ---------------------------------------------------------------------------
# Pure-JAX reference
# ---------------------------------------------------------------------------
def reference(x, batch, w1, w2, num_graphs):
    sum_r = jax.ops.segment_sum(x, batch, num_segments=num_graphs)
    max_r = jax.ops.segment_max(x, batch, num_segments=num_graphs)
    counts = jax.ops.segment_sum(jnp.ones((x.shape[0],)), batch, num_segments=num_graphs)
    max_r = jnp.where(counts[:, None] > 0, max_r, 0.0)

    def mlp(v):
        return jnp.maximum(v @ w1, 0.0) @ w2

    y = jnp.maximum(mlp(max_r) + mlp(sum_r), 0.0)
    return x * y[batch]


if __name__ == "__main__":
    # Small, forward-consistent shapes.  N = 1200 with TILE_N = 512 exercises
    # multi-tile streaming AND the ragged (unpadded) last tile.
    C = 32            # channels
    REDUCTION = 4     # hidden = 8
    H = C // REDUCTION
    B = 4             # number of graphs
    SIZES = [300, 250, 400, 250]
    N = sum(SIZES)    # 1200

    key = jax.random.PRNGKey(0)
    kx, k1, k2 = jax.random.split(key, 3)

    x = jax.random.normal(kx, (N, C), dtype=jnp.float32)
    batch = jnp.repeat(jnp.arange(B, dtype=jnp.int32), jnp.array(SIZES, dtype=jnp.int32))

    # Deterministic Linear weights (kaiming-uniform-like bound = 1/sqrt(fan_in)), no bias.
    bound1 = 1.0 / jnp.sqrt(jnp.float32(C))
    bound2 = 1.0 / jnp.sqrt(jnp.float32(H))
    w1 = jax.random.uniform(k1, (C, H), minval=-bound1, maxval=bound1, dtype=jnp.float32)
    w2 = jax.random.uniform(k2, (H, C), minval=-bound2, maxval=bound2, dtype=jnp.float32)

    out = feature_attention(x, batch, w1, w2, num_graphs=B)
    out = jax.block_until_ready(out)

    ref = reference(x, batch, w1, w2, num_graphs=B)
    assert out.shape == ref.shape, f"shape mismatch {out.shape} vs {ref.shape}"
    assert bool(jnp.all(jnp.isfinite(out))), "non-finite values in kernel output"
    assert jnp.allclose(out, ref, atol=1e-4, rtol=1e-4), "mismatch vs reference"

    print("KERNEL_OK")
</pallas_src>

<mosaic_0001>
module attributes {stable_mosaic.version = 11 : i64} {
  func.func @_reduce_mlp_kernel(%arg0: i32, %arg1: memref<512x32xf32, #tpu.memory_space<vmem>>, %arg2: memref<1x512xi32, #tpu.memory_space<vmem>>, %arg3: memref<512x1xi32, #tpu.memory_space<vmem>>, %arg4: memref<32x8xf32, #tpu.memory_space<vmem>>, %arg5: memref<8x32xf32, #tpu.memory_space<vmem>>, %arg6: memref<4x32xf32, #tpu.memory_space<vmem>>, %arg7: memref<4x32xf32, #tpu.memory_space<vmem>>, %arg8: memref<4x32xf32, #tpu.memory_space<vmem>>) attributes {dimension_semantics = [#tpu.dimension_semantics<arbitrary>], iteration_bounds = array<i64: 3>, scalar_prefetch = 0 : i64, scratch_operands = 2 : i64, tpu.core_type = #tpu.core_type<tc>, window_params = [{transform_indices = @transform_0, window_bounds = array<i64: 512, 32>}, {transform_indices = @transform_1, window_bounds = array<i64: 1, 512>}, {transform_indices = @transform_2, window_bounds = array<i64: 512, 1>}, {pipeline_mode = #tpu.pipeline_mode<synchronous>, transform_indices = @transform_3, window_bounds = array<i64: 32, 8>}, {pipeline_mode = #tpu.pipeline_mode<synchronous>, transform_indices = @transform_4, window_bounds = array<i64: 8, 32>}, {pipeline_mode = #tpu.pipeline_mode<synchronous>, transform_indices = @transform_5, window_bounds = array<i64: 4, 32>}]} {
    %c0_i32 = arith.constant 0 : i32
    %0 = arith.cmpi eq, %arg0, %c0_i32 : i32
    %1 = arith.extui %0 : i1 to i32
    %c0_i32_0 = arith.constant 0 : i32
    %2 = arith.cmpi ne, %1, %c0_i32_0 : i32
    scf.if %2 {
      %cst_35 = arith.constant 0.000000e+00 : f32
      %68 = vector.broadcast %cst_35 : f32 to vector<4x32xf32>
      %c0_36 = arith.constant 0 : index
      %c0_37 = arith.constant 0 : index
      %69 = vector.load %arg7[%c0_36, %c0_37] : memref<4x32xf32, #tpu.memory_space<vmem>>, vector<4x32xf32>
      tpu.vector_store %arg7[%c0_36, %c0_37], %68 {strides = array<i32>} : memref<4x32xf32, #tpu.memory_space<vmem>>, vector<4x32xf32>,
      %cst_38 = arith.constant 0xFF800000 : f32
      %70 = vector.broadcast %cst_38 : f32 to vector<4x32xf32>
      %c0_39 = arith.constant 0 : index
      %c0_40 = arith.constant 0 : index
      %71 = vector.load %arg8[%c0_39, %c0_40] : memref<4x32xf32, #tpu.memory_space<vmem>>, vector<4x32xf32>
      tpu.vector_store %arg8[%c0_39, %c0_40], %70 {strides = array<i32>} : memref<4x32xf32, #tpu.memory_space<vmem>>, vector<4x32xf32>,
    } else {
    }
    %c0 = arith.constant 0 : index
    %c0_1 = arith.constant 0 : index
    %3 = vector.load %arg1[%c0, %c0_1] : memref<512x32xf32, #tpu.memory_space<vmem>>, vector<512x32xf32>
    %c0_2 = arith.constant 0 : index
    %c0_3 = arith.constant 0 : index
    %4 = vector.load %arg2[%c0_2, %c0_3] : memref<1x512xi32, #tpu.memory_space<vmem>>, vector<1x512xi32>
    %c0_4 = arith.constant 0 : index
    %c0_5 = arith.constant 0 : index
    %5 = vector.load %arg3[%c0_4, %c0_5] : memref<512x1xi32, #tpu.memory_space<vmem>>, vector<512x1xi32>
    %c4_i32 = arith.constant 4 : i32
    %6 = vector.broadcast %c4_i32 : i32 to vector<512x1xi32>
    %7 = arith.cmpi slt, %5, %6 : vector<512x1xi32>
    %cst = arith.constant 0.000000e+00 : f32
    %8 = vector.shape_cast %7 : vector<512x1xi1> to vector<512x1xi1>
    %9 = vector.broadcast %8 : vector<512x1xi1> to vector<512x32xi1>
    %10 = vector.broadcast %cst : f32 to vector<512x32xf32>
    %11 = arith.select %9, %3, %10 : vector<512x32xi1>, vector<512x32xf32>
    %12 = tpu.iota {dimensions = array<i32: 0>} : vector<4x512xi32>
    %13 = vector.broadcast %4 : vector<1x512xi32> to vector<4x512xi32>
    %14 = arith.cmpi eq, %12, %13 : vector<4x512xi32>
    %15 = arith.extui %14 : vector<4x512xi1> to vector<4x512xi32>
    %16 = arith.sitofp %15 : vector<4x512xi32> to vector<4x512xf32>
    %c0_6 = arith.constant 0 : index
    %c0_7 = arith.constant 0 : index
    %17 = vector.load %arg7[%c0_6, %c0_7] : memref<4x32xf32, #tpu.memory_space<vmem>>, vector<4x32xf32>
    %cst_8 = arith.constant dense<0.000000e+00> : vector<4x32xf32>
    %18 = tpu.matmul %16, %11, %cst_8 {dimension_numbers = #tpu.dot_dimension_numbers<[1], [0], [0], [1], [0, 0, 1, 1], [], []>} : vector<4x512xf32>, vector<512x32xf32>, vector<4x32xf32> -> vector<4x32xf32>
    %19 = arith.addf %17, %18 : vector<4x32xf32>
    %c0_9 = arith.constant 0 : index
    %c0_10 = arith.constant 0 : index
    %20 = vector.load %arg7[%c0_9, %c0_10] : memref<4x32xf32, #tpu.memory_space<vmem>>, vector<4x32xf32>
    tpu.vector_store %arg7[%c0_9, %c0_10], %19 {strides = array<i32>} : memref<4x32xf32, #tpu.memory_space<vmem>>, vector<4x32xf32>,
    %c0_i32_11 = arith.constant 0 : i32
    %21 = vector.broadcast %c0_i32_11 : i32 to vector<512x1xi32>
    %22 = arith.cmpi eq, %5, %21 : vector<512x1xi32>
    %cst_12 = arith.constant 0xFF800000 : f32
    %23 = vector.shape_cast %22 : vector<512x1xi1> to vector<512x1xi1>
    %24 = vector.broadcast %23 : vector<512x1xi1> to vector<512x32xi1>
    %25 = vector.broadcast %cst_12 : f32 to vector<512x32xf32>
    %26 = arith.select %24, %3, %25 : vector<512x32xi1>, vector<512x32xf32>
    %cst_13 = arith.constant dense<0xFF800000> : vector<32xf32>
    %27 = vector.multi_reduction <maximumf>, %26, %cst_13 [0] : vector<512x32xf32> to vector<32xf32>
    %28 = vector.shape_cast %27 : vector<32xf32> to vector<1x32xf32>
    %c0_14 = arith.constant 0 : index
    %c0_15 = arith.constant 0 : index
    %29 = vector.load %arg8[%c0_14, %c0_15] : memref<4x32xf32, #tpu.memory_space<vmem>>, vector<1x32xf32>
    %30 = arith.maximumf %29, %28 : vector<1x32xf32>
    %c0_16 = arith.constant 0 : index
    %c0_17 = arith.constant 0 : index
    %31 = vector.load %arg8[%c0_16, %c0_17] : memref<4x32xf32, #tpu.memory_space<vmem>>, vector<1x32xf32>
    tpu.vector_store %arg8[%c0_16, %c0_17], %30 {strides = array<i32>} : memref<4x32xf32, #tpu.memory_space<vmem>>, vector<1x32xf32>,
    %c1_i32 = arith.constant 1 : i32
    %32 = vector.broadcast %c1_i32 : i32 to vector<512x1xi32>
    %33 = arith.cmpi eq, %5, %32 : vector<512x1xi32>
    %cst_18 = arith.constant 0xFF800000 : f32
    %34 = vector.shape_cast %33 : vector<512x1xi1> to vector<512x1xi1>
    %35 = vector.broadcast %34 : vector<512x1xi1> to vector<512x32xi1>
    %36 = vector.broadcast %cst_18 : f32 to vector<512x32xf32>
    %37 = arith.select %35, %3, %36 : vector<512x32xi1>, vector<512x32xf32>
    %cst_19 = arith.constant dense<0xFF800000> : vector<32xf32>
    %38 = vector.multi_reduction <maximumf>, %37, %cst_19 [0] : vector<512x32xf32> to vector<32xf32>
    %39 = vector.shape_cast %38 : vector<32xf32> to vector<1x32xf32>
    %c1 = arith.constant 1 : index
    %c0_20 = arith.constant 0 : index
    %40 = vector.load %arg8[%c1, %c0_20] : memref<4x32xf32, #tpu.memory_space<vmem>>, vector<1x32xf32>
    %41 = arith.maximumf %40, %39 : vector<1x32xf32>
    %c1_21 = arith.constant 1 : index
    %c0_22 = arith.constant 0 : index
    %42 = vector.load %arg8[%c1_21, %c0_22] : memref<4x32xf32, #tpu.memory_space<vmem>>, vector<1x32xf32>
    tpu.vector_store %arg8[%c1_21, %c0_22], %41 {strides = array<i32>} : memref<4x32xf32, #tpu.memory_space<vmem>>, vector<1x32xf32>,
    %c2_i32 = arith.constant 2 : i32
    %43 = vector.broadcast %c2_i32 : i32 to vector<512x1xi32>
    %44 = arith.cmpi eq, %5, %43 : vector<512x1xi32>
    %cst_23 = arith.constant 0xFF800000 : f32
    %45 = vector.shape_cast %44 : vector<512x1xi1> to vector<512x1xi1>
    %46 = vector.broadcast %45 : vector<512x1xi1> to vector<512x32xi1>
    %47 = vector.broadcast %cst_23 : f32 to vector<512x32xf32>
    %48 = arith.select %46, %3, %47 : vector<512x32xi1>, vector<512x32xf32>
    %cst_24 = arith.constant dense<0xFF800000> : vector<32xf32>
    %49 = vector.multi_reduction <maximumf>, %48, %cst_24 [0] : vector<512x32xf32> to vector<32xf32>
    %50 = vector.shape_cast %49 : vector<32xf32> to vector<1x32xf32>
    %c2 = arith.constant 2 : index
    %c0_25 = arith.constant 0 : index
    %51 = vector.load %arg8[%c2, %c0_25] : memref<4x32xf32, #tpu.memory_space<vmem>>, vector<1x32xf32>
    %52 = arith.maximumf %51, %50 : vector<1x32xf32>
    %c2_26 = arith.constant 2 : index
    %c0_27 = arith.constant 0 : index
    %53 = vector.load %arg8[%c2_26, %c0_27] : memref<4x32xf32, #tpu.memory_space<vmem>>, vector<1x32xf32>
    tpu.vector_store %arg8[%c2_26, %c0_27], %52 {strides = array<i32>} : memref<4x32xf32, #tpu.memory_space<vmem>>, vector<1x32xf32>,
    %c3_i32 = arith.constant 3 : i32
    %54 = vector.broadcast %c3_i32 : i32 to vector<512x1xi32>
    %55 = arith.cmpi eq, %5, %54 : vector<512x1xi32>
    %cst_28 = arith.constant 0xFF800000 : f32
    %56 = vector.shape_cast %55 : vector<512x1xi1> to vector<512x1xi1>
    %57 = vector.broadcast %56 : vector<512x1xi1> to vector<512x32xi1>
    %58 = vector.broadcast %cst_28 : f32 to vector<512x32xf32>
    %59 = arith.select %57, %3, %58 : vector<512x32xi1>, vector<512x32xf32>
    %cst_29 = arith.constant dense<0xFF800000> : vector<32xf32>
    %60 = vector.multi_reduction <maximumf>, %59, %cst_29 [0] : vector<512x32xf32> to vector<32xf32>
    %61 = vector.shape_cast %60 : vector<32xf32> to vector<1x32xf32>
    %c3 = arith.constant 3 : index
    %c0_30 = arith.constant 0 : index
    %62 = vector.load %arg8[%c3, %c0_30] : memref<4x32xf32, #tpu.memory_space<vmem>>, vector<1x32xf32>
    %63 = arith.maximumf %62, %61 : vector<1x32xf32>
    %c3_31 = arith.constant 3 : index
    %c0_32 = arith.constant 0 : index
    %64 = vector.load %arg8[%c3_31, %c0_32] : memref<4x32xf32, #tpu.memory_space<vmem>>, vector<1x32xf32>
    tpu.vector_store %arg8[%c3_31, %c0_32], %63 {strides = array<i32>} : memref<4x32xf32, #tpu.memory_space<vmem>>, vector<1x32xf32>,
    %c2_i32_33 = arith.constant 2 : i32
    %65 = arith.cmpi eq, %arg0, %c2_i32_33 : i32
    %66 = arith.extui %65 : i1 to i32
    %c0_i32_34 = arith.constant 0 : i32
    %67 = arith.cmpi ne, %66, %c0_i32_34 : i32
    scf.if %67 {
      %c0_35 = arith.constant 0 : index
      %c0_36 = arith.constant 0 : index
      %68 = vector.load %arg8[%c0_35, %c0_36] : memref<4x32xf32, #tpu.memory_space<vmem>>, vector<4x32xf32>
      %cst_37 = arith.constant 0xFF800000 : f32
      %69 = vector.broadcast %cst_37 : f32 to vector<4x32xf32>
      %70 = arith.cmpf oeq, %68, %69 : vector<4x32xf32>
      %cst_38 = arith.constant 0.000000e+00 : f32
      %71 = vector.broadcast %cst_38 : f32 to vector<4x32xf32>
      %72 = arith.select %70, %71, %68 : vector<4x32xi1>, vector<4x32xf32>
      %c0_39 = arith.constant 0 : index
      %c0_40 = arith.constant 0 : index
      %73 = vector.load %arg7[%c0_39, %c0_40] : memref<4x32xf32, #tpu.memory_space<vmem>>, vector<4x32xf32>
      %74 = tpu.concatenate %72, %73 in 0 : vector<4x32xf32>, vector<4x32xf32> -> vector<8x32xf32>
      %c0_41 = arith.constant 0 : index
      %c0_42 = arith.constant 0 : index
      %75 = vector.load %arg4[%c0_41, %c0_42] : memref<32x8xf32, #tpu.memory_space<vmem>>, vector<32x8xf32>
      %cst_43 = arith.constant dense<0.000000e+00> : vector<8x8xf32>
      %76 = tpu.matmul %74, %75, %cst_43 {dimension_numbers = #tpu.dot_dimension_numbers<[1], [0], [0], [1], [0, 0, 1, 1], [], []>} : vector<8x32xf32>, vector<32x8xf32>, vector<8x8xf32> -> vector<8x8xf32>
      %cst_44 = arith.constant 0.000000e+00 : f32
      %77 = vector.broadcast %cst_44 : f32 to vector<8x8xf32>
      %78 = arith.maximumf %76, %77 : vector<8x8xf32>
      %c0_45 = arith.constant 0 : index
      %c0_46 = arith.constant 0 : index
      %79 = vector.load %arg5[%c0_45, %c0_46] : memref<8x32xf32, #tpu.memory_space<vmem>>, vector<8x32xf32>
      %cst_47 = arith.constant dense<0.000000e+00> : vector<8x32xf32>
      %80 = tpu.matmul %78, %79, %cst_47 {dimension_numbers = #tpu.dot_dimension_numbers<[1], [0], [0], [1], [0, 0, 1, 1], [], []>} : vector<8x8xf32>, vector<8x32xf32>, vector<8x32xf32> -> vector<8x32xf32>
      %81 = vector.extract_strided_slice %80 {offsets = [0, 0], sizes = [4, 32], strides = [1, 1]} : vector<8x32xf32> to vector<4x32xf32>
      %82 = vector.extract_strided_slice %80 {offsets = [4, 0], sizes = [4, 32], strides = [1, 1]} : vector<8x32xf32> to vector<4x32xf32>
      %83 = arith.addf %81, %82 : vector<4x32xf32>
      %cst_48 = arith.constant 0.000000e+00 : f32
      %84 = vector.broadcast %cst_48 : f32 to vector<4x32xf32>
      %85 = arith.maximumf %83, %84 : vector<4x32xf32>
      %c0_49 = arith.constant 0 : index
      %c0_50 = arith.constant 0 : index
      %86 = vector.load %arg6[%c0_49, %c0_50] : memref<4x32xf32, #tpu.memory_space<vmem>>, vector<4x32xf32>
      tpu.vector_store %arg6[%c0_49, %c0_50], %85 {strides = array<i32>} : memref<4x32xf32, #tpu.memory_space<vmem>>, vector<4x32xf32>,
    } else {
    }
    return
  }
  func.func @transform_0(%arg0: i32) -> (i32, i32) {
    %c0_i32 = arith.constant 0 : i32
    %c0_i32_0 = arith.constant 0 : i32
    return %arg0, %c0_i32 : i32, i32
  }
  func.func @transform_1(%arg0: i32) -> (i32, i32) {
    %c0_i32 = arith.constant 0 : i32
    %c0_i32_0 = arith.constant 0 : i32
    return %c0_i32, %arg0 : i32, i32
  }
  func.func @transform_2(%arg0: i32) -> (i32, i32) {
    %c0_i32 = arith.constant 0 : i32
    %c0_i32_0 = arith.constant 0 : i32
    return %arg0, %c0_i32 : i32, i32
  }
  func.func @transform_3(%arg0: i32) -> (i32, i32) {
    %c0_i32 = arith.constant 0 : i32
    %c0_i32_0 = arith.constant 0 : i32
    %c0_i32_1 = arith.constant 0 : i32
    return %c0_i32, %c0_i32_0 : i32, i32
  }
  func.func @transform_4(%arg0: i32) -> (i32, i32) {
    %c0_i32 = arith.constant 0 : i32
    %c0_i32_0 = arith.constant 0 : i32
    %c0_i32_1 = arith.constant 0 : i32
    return %c0_i32, %c0_i32_0 : i32, i32
  }
  func.func @transform_5(%arg0: i32) -> (i32, i32) {
    %c0_i32 = arith.constant 0 : i32
    %c0_i32_0 = arith.constant 0 : i32
    %c0_i32_1 = arith.constant 0 : i32
    return %c0_i32, %c0_i32_0 : i32, i32
  }
}

</mosaic_0001>

<llo_original>
// kernel: tpu_custom_call.1
$region0: #{tpu_custom_call.1}
  #allocation0 [shape = 'u32[]', space=smem, size = 0x4, offset = 0x4, fixed_abs, tag = 'smem constant byte address 0x4 - core index']
  #allocation1 [shape = 'u32[144,128]{1,0:T(1,128)}', space=vmem, size = 0x12000, scoped, tag = 'internal scratch']
  #allocation2 [shape = 'f32[4,32]{1,0:T(4,128)}', space=vmem, size = 0x800, scoped, tag = 'scratch operand']
  #allocation3 [shape = 'f32[4,32]{1,0:T(4,128)}', space=vmem, size = 0x800, scoped, tag = 'scratch operand']
  %s0 = inlined_call_operand.vmem [shape: f32[1200,32], index: 0, kind: input, shape index: {}]
  %s1 = inlined_call_operand.vmem [shape: s32[1,1536], index: 1, kind: input, shape index: {}]
  %s2 = inlined_call_operand.vmem [shape: s32[1536,1], index: 2, kind: input, shape index: {}]
  %s3 = inlined_call_operand.vmem [shape: f32[32,8], index: 3, kind: input, shape index: {}]
  %s4 = inlined_call_operand.vmem [shape: f32[8,32], index: 4, kind: input, shape index: {}]
  %s5 = inlined_call_operand.hbm [shape: f32[4,32], index: 5, kind: output, shape index: {}]
  %s6 = sld [smem:[#allocation0]]
  $region61: #{tpu_custom_call.1} parent=0
    _
  %s8 = ssub.s32 1, %s6
  %s9 = scalar_select 0, %s8, %s6
  $region1: #{tpu_custom_call.1} parent=0
    #allocation4 [shape = 'u8[2048]{0}', space=vmem, size = 0x800, scoped, tag = 'output window, operand 0, single buffered']
    #allocation5 [shape = 's32[2]{0}', space=sflag, size = 0x8, scoped, tag = 'scoped memory for tpu_custom_call.1']
    %10 = vsyncpa [#allocation5], 0
    loop: start=0, step=1, limit=5
    $region2: #{tpu_custom_call.1} parent=1 // loop_pre_header
      _
    $region3: #{tpu_custom_call.1} parent=1 // loop_header
      %s12 = sphi 0, %s16
      %p13 = scmp.ge.s32.totalorder %s12, 5
      %s22 = sphi 0, %s24
      %s25 = sphi 0, %s22
      %s26 = sphi 0, %s25
      %s42 = sphi 0, %s26
      %s48 = sphi 0, %s50
      %s51 = sphi 0, %s48
      %s52 = sphi 0, %s51
      %s68 = sphi 0, %s52
      %s74 = sphi 0, %s76
      %s77 = sphi 0, %s74
      %s78 = sphi 0, %s77
      %s94 = sphi 0, %s78
      %s98 = sphi 0, %s98
      %s100 = sphi 0, %s98
      %s101 = sphi 0, %s100
      %s115 = sphi 0, %s101
      %s119 = sphi 0, %s119
      %s121 = sphi 0, %s119
      %s122 = sphi 0, %s121
      %s136 = sphi 0, %s122
      %s140 = sphi 0, %s140
      %s142 = sphi 0, %s140
      %s143 = sphi 0, %s142
      %s157 = sphi 0, %s143
    $region4: #{tpu_custom_call.1} parent=1 // loop_header_branch
      %15 = sbr.rel (%p13) target = $region8
    $region5: #{tpu_custom_call.1} parent=1 // loop_body
      %s17 = ssub.s32 %s12, 1
      %s18 = ssub.s32 %s12, 2
      %s19 = sadd.s32 %s12, 1
      %s20 = ssub.s32 %s12, %s19
      %p21 = scmp.eq.s32.totalorder %s20, 0
      %s23 = sadd.s32 %s22, 1
      %s24 = scalar_select %p21, %s22, %s23
      %p27 = pneg %p21
      %p28 = scmp.eq.s32.totalorder %s12, 2
      %p29 = por %p27, %p28
      %p30 = scmp.ne.s32.totalorder %s22, %s25
      %p31 = scmp.eq.s32.totalorder %s12, 0
      %p32 = por %p30, %p31
      %p33 = scmp.ne.s32.totalorder %s22, %s25
      %p34 = scmp.eq.s32.totalorder %s17, 2
      %p35 = por %p33, %p34
      %p36 = scmp.ne.s32.totalorder %s25, %s26
      %p37 = scmp.eq.s32.totalorder %s17, 0
      %p38 = por %p36, %p37
      %p39 = scmp.ne.s32.totalorder %s25, %s26
      %p40 = scmp.eq.s32.totalorder %s18, 2
      %p41 = por %p39, %p40
      %p43 = scmp.ne.s32.totalorder %s26, %s42
      %p44 = scmp.eq.s32.totalorder %s18, 0
      %p45 = por %p43, %p44
      %s46 = ssub.s32 %s12, %s19
      %p47 = scmp.eq.s32.totalorder %s46, 0
      %s49 = sadd.s32 %s48, 1
      %s50 = scalar_select %p47, %s48, %s49
      %p53 = pneg %p47
      %p54 = scmp.eq.s32.totalorder %s12, 2
      %p55 = por %p53, %p54
      %p56 = scmp.ne.s32.totalorder %s48, %s51
      %p57 = scmp.eq.s32.totalorder %s12, 0
      %p58 = por %p56, %p57
      %p59 = scmp.ne.s32.totalorder %s48, %s51
      %p60 = scmp.eq.s32.totalorder %s17, 2
      %p61 = por %p59, %p60
      %p62 = scmp.ne.s32.totalorder %s51, %s52
      %p63 = scmp.eq.s32.totalorder %s17, 0
      %p64 = por %p62, %p63
      %p65 = scmp.ne.s32.totalorder %s51, %s52
      %p66 = scmp.eq.s32.totalorder %s18, 2
      %p67 = por %p65, %p66
      %p69 = scmp.ne.s32.totalorder %s52, %s68
      %p70 = scmp.eq.s32.totalorder %s18, 0
      %p71 = por %p69, %p70
      %s72 = ssub.s32 %s12, %s19
      %p73 = scmp.eq.s32.totalorder %s72, 0
      %s75 = sadd.s32 %s74, 1
      %s76 = scalar_select %p73, %s74, %s75
      %p79 = pneg %p73
      %p80 = scmp.eq.s32.totalorder %s12, 2
      %p81 = por %p79, %p80
      %p82 = scmp.ne.s32.totalorder %s74, %s77
      %p83 = scmp.eq.s32.totalorder %s12, 0
      %p84 = por %p82, %p83
      %p85 = scmp.ne.s32.totalorder %s74, %s77
      %p86 = scmp.eq.s32.totalorder %s17, 2
      %p87 = por %p85, %p86
      %p88 = scmp.ne.s32.totalorder %s77, %s78
      %p89 = scmp.eq.s32.totalorder %s17, 0
      %p90 = por %p88, %p89
      %p91 = scmp.ne.s32.totalorder %s77, %s78
      %p92 = scmp.eq.s32.totalorder %s18, 2
      %p93 = por %p91, %p92
      %p95 = scmp.ne.s32.totalorder %s78, %s94
      %p96 = scmp.eq.s32.totalorder %s18, 0
      %p97 = por %p95, %p96
      %s99 = sadd.s32 %s98, 1
      %p102 = scmp.eq.s32.totalorder %s12, 2
      %p103 = scmp.ne.s32.totalorder %s98, %s100
      %p104 = scmp.eq.s32.totalorder %s12, 0
      %p105 = por %p103, %p104
      %p106 = scmp.ne.s32.totalorder %s98, %s100
      %p107 = scmp.eq.s32.totalorder %s17, 2
      %p108 = por %p106, %p107
      %p109 = scmp.ne.s32.totalorder %s100, %s101
      %p110 = scmp.eq.s32.totalorder %s17, 0
      %p111 = por %p109, %p110
      %p112 = scmp.ne.s32.totalorder %s100, %s101
      %p113 = scmp.eq.s32.totalorder %s18, 2
      %p114 = por %p112, %p113
      %p116 = scmp.ne.s32.totalorder %s101, %s115
      %p117 = scmp.eq.s32.totalorder %s18, 0
      %p118 = por %p116, %p117
      %s120 = sadd.s32 %s119, 1
      %p123 = scmp.eq.s32.totalorder %s12, 2
      %p124 = scmp.ne.s32.totalorder %s119, %s121
      %p125 = scmp.eq.s32.totalorder %s12, 0
      %p126 = por %p124, %p125
      %p127 = scmp.ne.s32.totalorder %s119, %s121
      %p128 = scmp.eq.s32.totalorder %s17, 2
      %p129 = por %p127, %p128
      %p130 = scmp.ne.s32.totalorder %s121, %s122
      %p131 = scmp.eq.s32.totalorder %s17, 0
      %p132 = por %p130, %p131
      %p133 = scmp.ne.s32.totalorder %s121, %s122
      %p134 = scmp.eq.s32.totalorder %s18, 2
      %p135 = por %p133, %p134
      %p137 = scmp.ne.s32.totalorder %s122, %s136
      %p138 = scmp.eq.s32.totalorder %s18, 0
      %p139 = por %p137, %p138
      %s141 = sadd.s32 %s140, 1
      %p144 = scmp.eq.s32.totalorder %s12, 2
      %p145 = scmp.ne.s32.totalorder %s140, %s142
      %p146 = scmp.eq.s32.totalorder %s12, 0
      %p147 = por %p145, %p146
      %p148 = scmp.ne.s32.totalorder %s140, %s142
      %p149 = scmp.eq.s32.totalorder %s17, 2
      %p150 = por %p148, %p149
      %p151 = scmp.ne.s32.totalorder %s142, %s143
      %p152 = scmp.eq.s32.totalorder %s17, 0
      %p153 = por %p151, %p152
      %p154 = scmp.ne.s32.totalorder %s142, %s143
      %p155 = scmp.eq.s32.totalorder %s18, 2
      %p156 = por %p154, %p155
      %p158 = scmp.ne.s32.totalorder %s143, %s157
      %p159 = scmp.eq.s32.totalorder %s18, 0
      %p160 = por %p158, %p159
      %p161 = scmp.le.s32.totalorder 1, %s12
      %p162 = scmp.lt.s32.totalorder %s12, 4
      %p163 = pnand %p161, %p162
      %p164 = pneg %p163
      // Predicated region
      $region9: #{tpu_custom_call.1} parent=5 // pred_check
        _
      $region10: #{tpu_custom_call.1} parent=5 // pred_check_branch
        %166 = sbr.rel (%p163) target = $region12
      $region11: #{tpu_custom_call.1} parent=5 // pred_region
        %s167 = ssub.s32 %s12, 1
        // Predicated region
        $region13: #{tpu_custom_call.1} parent=11 // pred_check
          %p168 = pneg %p111
        $region14: #{tpu_custom_call.1} parent=11 // pred_check_branch
          %170 = sbr.rel (%p168) target = $region16
        $region15: #{tpu_custom_call.1} parent=11 // pred_region
          _
        $region16: #{tpu_custom_call.1} parent=11 // pred_fallthru
          _
        // Predicated region
        $region17: #{tpu_custom_call.1} parent=11 // pred_check
          %p171 = pneg %p132
        $region18: #{tpu_custom_call.1} parent=11 // pred_check_branch
          %173 = sbr.rel (%p171) target = $region20
        $region19: #{tpu_custom_call.1} parent=11 // pred_region
          _
        $region20: #{tpu_custom_call.1} parent=11 // pred_fallthru
          _
      $region12: #{tpu_custom_call.1} parent=5 // pred_fallthru
        _
      %p174 = scmp.lt.s32.totalorder %s12, 3
      // Predicated region
      $region21: #{tpu_custom_call.1} parent=5 // pred_check
        %p175 = pneg %p174
      $region22: #{tpu_custom_call.1} parent=5 // pred_check_branch
        %177 = sbr.rel (%p175) target = $region24
      $region23: #{tpu_custom_call.1} parent=5 // pred_region
        // Predicated region
        $region25: #{tpu_custom_call.1} parent=23 // pred_check
          %p178 = pneg %p32
        $region26: #{tpu_custom_call.1} parent=23 // pred_check_branch
          %180 = sbr.rel (%p178) target = $region28
        $region27: #{tpu_custom_call.1} parent=23 // pred_region
          %s181 = smul.u32 64, %s12
          %s182 = ssub.s32 150, %s181
          %p183 = scmp.lt.s32.totalorder %s182, 64
          %s184 = scalar_select %p183, %s182, 64
          %s185 = smul.u32 128, %s184
          %p186 = scmp.lt.s32.totalorder %s181, 149
          %s187 = scalar_select %p186, %s181, 149
          %s188 = smul.addr %s187, 8
          %s189 = scalar_lea.vmem %s0, %s188
          %s190 = smul.u32 64, %s12
          %s191 = ssub.s32 150, %s190
          %p192 = scmp.lt.s32.totalorder %s191, 64
          %s193 = scalar_select %p192, %s191, 64
          %s194 = smul.u32 128, %s193
        $region28: #{tpu_custom_call.1} parent=23 // pred_fallthru
          _
        // Predicated region
        $region29: #{tpu_custom_call.1} parent=23 // pred_check
          %p195 = pneg %p58
        $region30: #{tpu_custom_call.1} parent=23 // pred_check_branch
          %197 = sbr.rel (%p195) target = $region32
        $region31: #{tpu_custom_call.1} parent=23 // pred_region
          %s198 = smul.u32 4, %s12
          %p199 = scmp.lt.s32.totalorder %s198, 11
          %s200 = scalar_select %p199, %s198, 11
          %s201 = scalar_lea.vmem %s1, %s200
          %s202 = smul.u32 4, %s12
        $region32: #{tpu_custom_call.1} parent=23 // pred_fallthru
          _
        // Predicated region
        $region33: #{tpu_custom_call.1} parent=23 // pred_check
          %p203 = pneg %p84
        $region34: #{tpu_custom_call.1} parent=23 // pred_check_branch
          %205 = sbr.rel (%p203) target = $region36
        $region35: #{tpu_custom_call.1} parent=23 // pred_region
          %s206 = smul.u32 64, %s12
          %p207 = scmp.lt.s32.totalorder %s206, 191
          %s208 = scalar_select %p207, %s206, 191
          %s209 = smul.addr %s208, 8
          %s210 = scalar_lea.vmem %s2, %s209
          %s211 = smul.u32 64, %s12
        $region36: #{tpu_custom_call.1} parent=23 // pred_fallthru
          _
      $region24: #{tpu_custom_call.1} parent=5 // pred_fallthru
        _
      %p212 = scmp.le.s32.totalorder 1, %s12
      %p213 = scmp.lt.s32.totalorder %s12, 4
      %p214 = pnand %p212, %p213
      %p215 = pneg %p214
      // Predicated region
      $region37: #{tpu_custom_call.1} parent=5 // pred_check
        _
      $region38: #{tpu_custom_call.1} parent=5 // pred_check_branch
        %217 = sbr.rel (%p214) target = $region40
      $region39: #{tpu_custom_call.1} parent=5 // pred_region
        %s218 = ssub.s32 %s12, 1
        %s219 = smul.u32 64, %s17
        %s220 = ssub.s32 150, %s219
        %p221 = scmp.lt.s32.totalorder %s220, 64
        %s222 = scalar_select %p221, %s220, 64
        %s223 = smul.u32 128, %s222
        %p224 = scmp.lt.s32.totalorder %s219, 149
        %s225 = scalar_select %p224, %s219, 149
        %s226 = smul.addr %s225, 8
        %s227 = scalar_lea.vmem %s0, %s226
        %p228 = pneg %p38
        %p229 = pneg %p35
        %s230 = smul.u32 4, %s17
        %p231 = scmp.lt.s32.totalorder %s230, 11
        %s232 = scalar_select %p231, %s230, 11
        %s233 = scalar_lea.vmem %s1, %s232
        %p234 = pneg %p64
        %p235 = pneg %p61
        %s236 = smul.u32 64, %s17
        %p237 = scmp.lt.s32.totalorder %s236, 191
        %s238 = scalar_select %p237, %s236, 191
        %s239 = smul.addr %s238, 8
        %s240 = scalar_lea.vmem %s2, %s239
        %p241 = pneg %p90
        %p242 = pneg %p87
        %p243 = pneg %p111
        %p244 = pneg %p108
        %p245 = pneg %p132
        %p246 = pneg %p129
        %p247 = pneg %p153
        %p248 = pneg %p150
        %s249 = smul.u32 64, %s17
        %s250 = ssub.s32 150, %s249
        %p251 = scmp.lt.s32.totalorder %s250, 64
        %s252 = scalar_select %p251, %s250, 64
        %s253 = smul.u32 128, %s252
        %p254 = scmp.lt.s32.totalorder %s249, 149
        %s255 = scalar_select %p254, %s249, 149
        %s256 = smul.addr %s255, 8
        %s257 = scalar_lea.vmem %s0, %s256
        %s258 = smul.u32 64, %s17
        %s259 = ssub.s32 150, %s258
        %p260 = scmp.lt.s32.totalorder %s259, 64
        %s261 = scalar_select %p260, %s259, 64
        %s262 = smul.u32 128, %s261
        %s263 = smul.u32 4, %s17
        %p264 = scmp.lt.s32.totalorder %s263, 11
        %s265 = scalar_select %p264, %s263, 11
        %s266 = scalar_lea.vmem %s1, %s265
        %s267 = smul.u32 4, %s17
        %s268 = smul.u32 64, %s17
        %p269 = scmp.lt.s32.totalorder %s268, 191
        %s270 = scalar_select %p269, %s268, 191
        %s271 = smul.addr %s270, 8
        %s272 = scalar_lea.vmem %s2, %s271
        %s273 = smul.u32 64, %s17
        %p274 = scmp.eq.s32.totalorder %s17, 0
        // Predicated region
        $region41: #{tpu_custom_call.1} parent=39 // pred_check
          %p275 = pneg %p274
        $region42: #{tpu_custom_call.1} parent=39 // pred_check_branch
          %277 = sbr.rel (%p275) target = $region44
        $region43: #{tpu_custom_call.1} parent=39 // pred_region
          %vm278 = vcmask 257024
          %279 = vst.msk [vmem:[#allocation2] sm:$0xf] %vm278, 0.0
          %280 = vst.msk [vmem:[#allocation3] sm:$0xf] %vm278, -inf
        $region44: #{tpu_custom_call.1} parent=39 // pred_fallthru
          _
        %v281 = vld [vmem:[%s257] sm:$0xff]
        %v282 = vld [vmem:[%s257 + $0x8] sm:$0xff]
        %v283 = vld [vmem:[%s257 + $0x10] sm:$0xff]
        %v284 = vld [vmem:[%s257 + $0x18] sm:$0xff]
        %v285 = vld [vmem:[%s257 + $0x20] sm:$0xff]
        %v286 = vld [vmem:[%s257 + $0x28] sm:$0xff]
        %v287 = vld [vmem:[%s257 + $0x30] sm:$0xff]
        %v288 = vld [vmem:[%s257 + $0x38] sm:$0xff]
        %v289 = vld [vmem:[%s257 + $0x40] sm:$0xff]
        %v290 = vld [vmem:[%s257 + $0x48] sm:$0xff]
        %v291 = vld [vmem:[%s257 + $0x50] sm:$0xff]
        %v292 = vld [vmem:[%s257 + $0x58] sm:$0xff]
        %v293 = vld [vmem:[%s257 + $0x60] sm:$0xff]
        %v294 = vld [vmem:[%s257 + $0x68] sm:$0xff]
        %v295 = vld [vmem:[%s257 + $0x70] sm:$0xff]
        %v296 = vld [vmem:[%s257 + $0x78] sm:$0xff]
        %v297 = vld [vmem:[%s257 + $0x80] sm:$0xff]
        %v298 = vld [vmem:[%s257 + $0x88] sm:$0xff]
        %v299 = vld [vmem:[%s257 + $0x90] sm:$0xff]
        %v300 = vld [vmem:[%s257 + $0x98] sm:$0xff]
        %v301 = vld [vmem:[%s257 + $0xa0] sm:$0xff]
        %v302 = vld [vmem:[%s257 + $0xa8] sm:$0xff]
        %v303 = vld [vmem:[%s257 + $0xb0] sm:$0xff]
        %v304 = vld [vmem:[%s257 + $0xb8] sm:$0xff]
        %v305 = vld [vmem:[%s257 + $0xc0] sm:$0xff]
        %v306 = vld [vmem:[%s257 + $0xc8] sm:$0xff]
        %v307 = vld [vmem:[%s257 + $0xd0] sm:$0xff]
        %v308 = vld [vmem:[%s257 + $0xd8] sm:$0xff]
        %v309 = vld [vmem:[%s257 + $0xe0] sm:$0xff]
        %v310 = vld [vmem:[%s257 + $0xe8] sm:$0xff]
        %v311 = vld [vmem:[%s257 + $0xf0] sm:$0xff]
        %v312 = vld [vmem:[%s257 + $0xf8] sm:$0xff]
        %v313 = vld [vmem:[%s257 + $0x100] sm:$0xff]
        %v314 = vld [vmem:[%s257 + $0x108] sm:$0xff]
        %v315 = vld [vmem:[%s257 + $0x110] sm:$0xff]
        %v316 = vld [vmem:[%s257 + $0x118] sm:$0xff]
        %v317 = vld [vmem:[%s257 + $0x120] sm:$0xff]
        %v318 = vld [vmem:[%s257 + $0x128] sm:$0xff]
        %v319 = vld [vmem:[%s257 + $0x130] sm:$0xff]
        %v320 = vld [vmem:[%s257 + $0x138] sm:$0xff]
        %v321 = vld [vmem:[%s257 + $0x140] sm:$0xff]
        %v322 = vld [vmem:[%s257 + $0x148] sm:$0xff]
        %v323 = vld [vmem:[%s257 + $0x150] sm:$0xff]
        %v324 = vld [vmem:[%s257 + $0x158] sm:$0xff]
        %v325 = vld [vmem:[%s257 + $0x160] sm:$0xff]
        %v326 = vld [vmem:[%s257 + $0x168] sm:$0xff]
        %v327 = vld [vmem:[%s257 + $0x170] sm:$0xff]
        %v328 = vld [vmem:[%s257 + $0x178] sm:$0xff]
        %v329 = vld [vmem:[%s257 + $0x180] sm:$0xff]
        %v330 = vld [vmem:[%s257 + $0x188] sm:$0xff]
        %v331 = vld [vmem:[%s257 + $0x190] sm:$0xff]
        %v332 = vld [vmem:[%s257 + $0x198] sm:$0xff]
        %v333 = vld [vmem:[%s257 + $0x1a0] sm:$0xff]
        %v334 = vld [vmem:[%s257 + $0x1a8] sm:$0xff]
        %v335 = vld [vmem:[%s257 + $0x1b0] sm:$0xff]
        %v336 = vld [vmem:[%s257 + $0x1b8] sm:$0xff]
        %v337 = vld [vmem:[%s257 + $0x1c0] sm:$0xff]
        %v338 = vld [vmem:[%s257 + $0x1c8] sm:$0xff]
        %v339 = vld [vmem:[%s257 + $0x1d0] sm:$0xff]
        %v340 = vld [vmem:[%s257 + $0x1d8] sm:$0xff]
        %v341 = vld [vmem:[%s257 + $0x1e0] sm:$0xff]
        %v342 = vld [vmem:[%s257 + $0x1e8] sm:$0xff]
        %v343 = vld [vmem:[%s257 + $0x1f0] sm:$0xff]
        %v344 = vld [vmem:[%s257 + $0x1f8] sm:$0xff]
        %v345 = vld [vmem:[%s266] sm:$0xf]
        %v346 = vld [vmem:[%s272] sm:$0xff]
        %v347 = vld [vmem:[%s272 + $0x8] sm:$0xff]
        %v348 = vld [vmem:[%s272 + $0x10] sm:$0xff]
        %v349 = vld [vmem:[%s272 + $0x18] sm:$0xff]
        %v350 = vld [vmem:[%s272 + $0x20] sm:$0xff]
        %v351 = vld [vmem:[%s272 + $0x28] sm:$0xff]
        %v352 = vld [vmem:[%s272 + $0x30] sm:$0xff]
        %v353 = vld [vmem:[%s272 + $0x38] sm:$0xff]
        %v354 = vld [vmem:[%s272 + $0x40] sm:$0xff]
        %v355 = vld [vmem:[%s272 + $0x48] sm:$0xff]
        %v356 = vld [vmem:[%s272 + $0x50] sm:$0xff]
        %v357 = vld [vmem:[%s272 + $0x58] sm:$0xff]
        %v358 = vld [vmem:[%s272 + $0x60] sm:$0xff]
        %v359 = vld [vmem:[%s272 + $0x68] sm:$0xff]
        %v360 = vld [vmem:[%s272 + $0x70] sm:$0xff]
        %v361 = vld [vmem:[%s272 + $0x78] sm:$0xff]
        %v362 = vld [vmem:[%s272 + $0x80] sm:$0xff]
        %v363 = vld [vmem:[%s272 + $0x88] sm:$0xff]
        %v364 = vld [vmem:[%s272 + $0x90] sm:$0xff]
        %v365 = vld [vmem:[%s272 + $0x98] sm:$0xff]
        %v366 = vld [vmem:[%s272 + $0xa0] sm:$0xff]
        %v367 = vld [vmem:[%s272 + $0xa8] sm:$0xff]
        %v368 = vld [vmem:[%s272 + $0xb0] sm:$0xff]
        %v369 = vld [vmem:[%s272 + $0xb8] sm:$0xff]
        %v370 = vld [vmem:[%s272 + $0xc0] sm:$0xff]
        %v371 = vld [vmem:[%s272 + $0xc8] sm:$0xff]
        %v372 = vld [vmem:[%s272 + $0xd0] sm:$0xff]
        %v373 = vld [vmem:[%s272 + $0xd8] sm:$0xff]
        %v374 = vld [vmem:[%s272 + $0xe0] sm:$0xff]
        %v375 = vld [vmem:[%s272 + $0xe8] sm:$0xff]
        %v376 = vld [vmem:[%s272 + $0xf0] sm:$0xff]
        %v377 = vld [vmem:[%s272 + $0xf8] sm:$0xff]
        %v378 = vld [vmem:[%s272 + $0x100] sm:$0xff]
        %v379 = vld [vmem:[%s272 + $0x108] sm:$0xff]
        %v380 = vld [vmem:[%s272 + $0x110] sm:$0xff]
        %v381 = vld [vmem:[%s272 + $0x118] sm:$0xff]
        %v382 = vld [vmem:[%s272 + $0x120] sm:$0xff]
        %v383 = vld [vmem:[%s272 + $0x128] sm:$0xff]
        %v384 = vld [vmem:[%s272 + $0x130] sm:$0xff]
        %v385 = vld [vmem:[%s272 + $0x138] sm:$0xff]
        %v386 = vld [vmem:[%s272 + $0x140] sm:$0xff]
        %v387 = vld [vmem:[%s272 + $0x148] sm:$0xff]
        %v388 = vld [vmem:[%s272 + $0x150] sm:$0xff]
        %v389 = vld [vmem:[%s272 + $0x158] sm:$0xff]
        %v390 = vld [vmem:[%s272 + $0x160] sm:$0xff]
        %v391 = vld [vmem:[%s272 + $0x168] sm:$0xff]
        %v392 = vld [vmem:[%s272 + $0x170] sm:$0xff]
        %v393 = vld [vmem:[%s272 + $0x178] sm:$0xff]
        %v394 = vld [vmem:[%s272 + $0x180] sm:$0xff]
        %v395 = vld [vmem:[%s272 + $0x188] sm:$0xff]
        %v396 = vld [vmem:[%s272 + $0x190] sm:$0xff]
        %v397 = vld [vmem:[%s272 + $0x198] sm:$0xff]
        %v398 = vld [vmem:[%s272 + $0x1a0] sm:$0xff]
        %v399 = vld [vmem:[%s272 + $0x1a8] sm:$0xff]
        %v400 = vld [vmem:[%s272 + $0x1b0] sm:$0xff]
        %v401 = vld [vmem:[%s272 + $0x1b8] sm:$0xff]
        %v402 = vld [vmem:[%s272 + $0x1c0] sm:$0xff]
        %v403 = vld [vmem:[%s272 + $0x1c8] sm:$0xff]
        %v404 = vld [vmem:[%s272 + $0x1d0] sm:$0xff]
        %v405 = vld [vmem:[%s272 + $0x1d8] sm:$0xff]
        %v406 = vld [vmem:[%s272 + $0x1e0] sm:$0xff]
        %v407 = vld [vmem:[%s272 + $0x1e8] sm:$0xff]
        %v408 = vld [vmem:[%s272 + $0x1f0] sm:$0xff]
        %v409 = vld [vmem:[%s272 + $0x1f8] sm:$0xff]
        %vm410 = vcmp.lt.s32.totalorder %v346, 4
        %vm411 = vcmp.lt.s32.totalorder %v347, 4
        %vm412 = vcmp.lt.s32.totalorder %v348, 4
        %vm413 = vcmp.lt.s32.totalorder %v349, 4
        %vm414 = vcmp.lt.s32.totalorder %v350, 4
        %vm415 = vcmp.lt.s32.totalorder %v351, 4
        %vm416 = vcmp.lt.s32.totalorder %v352, 4
        %vm417 = vcmp.lt.s32.totalorder %v353, 4
        %vm418 = vcmp.lt.s32.totalorder %v354, 4
        %vm419 = vcmp.lt.s32.totalorder %v355, 4
        %vm420 = vcmp.lt.s32.totalorder %v356, 4
        %vm421 = vcmp.lt.s32.totalorder %v357, 4
        %vm422 = vcmp.lt.s32.totalorder %v358, 4
        %vm423 = vcmp.lt.s32.totalorder %v359, 4
        %vm424 = vcmp.lt.s32.totalorder %v360, 4
        %vm425 = vcmp.lt.s32.totalorder %v361, 4
        %vm426 = vcmp.lt.s32.totalorder %v362, 4
        %vm427 = vcmp.lt.s32.totalorder %v363, 4
        %vm428 = vcmp.lt.s32.totalorder %v364, 4
        %vm429 = vcmp.lt.s32.totalorder %v365, 4
        %vm430 = vcmp.lt.s32.totalorder %v366, 4
        %vm431 = vcmp.lt.s32.totalorder %v367, 4
        %vm432 = vcmp.lt.s32.totalorder %v368, 4
        %vm433 = vcmp.lt.s32.totalorder %v369, 4
        %vm434 = vcmp.lt.s32.totalorder %v370, 4
        %vm435 = vcmp.lt.s32.totalorder %v371, 4
        %vm436 = vcmp.lt.s32.totalorder %v372, 4
        %vm437 = vcmp.lt.s32.totalorder %v373, 4
        %vm438 = vcmp.lt.s32.totalorder %v374, 4
        %vm439 = vcmp.lt.s32.totalorder %v375, 4
        %vm440 = vcmp.lt.s32.totalorder %v376, 4
        %vm441 = vcmp.lt.s32.totalorder %v377, 4
        %vm442 = vcmp.lt.s32.totalorder %v378, 4
        %vm443 = vcmp.lt.s32.totalorder %v379, 4
        %vm444 = vcmp.lt.s32.totalorder %v380, 4
        %vm445 = vcmp.lt.s32.totalorder %v381, 4
        %vm446 = vcmp.lt.s32.totalorder %v382, 4
        %vm447 = vcmp.lt.s32.totalorder %v383, 4
        %vm448 = vcmp.lt.s32.totalorder %v384, 4
        %vm449 = vcmp.lt.s32.totalorder %v385, 4
        %vm450 = vcmp.lt.s32.totalorder %v386, 4
        %vm451 = vcmp.lt.s32.totalorder %v387, 4
        %vm452 = vcmp.lt.s32.totalorder %v388, 4
        %vm453 = vcmp.lt.s32.totalorder %v389, 4
        %vm454 = vcmp.lt.s32.totalorder %v390, 4
        %vm455 = vcmp.lt.s32.totalorder %v391, 4
        %vm456 = vcmp.lt.s32.totalorder %v392, 4
        %vm457 = vcmp.lt.s32.totalorder %v393, 4
        %vm458 = vcmp.lt.s32.totalorder %v394, 4
        %vm459 = vcmp.lt.s32.totalorder %v395, 4
        %vm460 = vcmp.lt.s32.totalorder %v396, 4
        %vm461 = vcmp.lt.s32.totalorder %v397, 4
        %vm462 = vcmp.lt.s32.totalorder %v398, 4
        %vm463 = vcmp.lt.s32.totalorder %v399, 4
        %vm464 = vcmp.lt.s32.totalorder %v400, 4
        %vm465 = vcmp.lt.s32.totalorder %v401, 4
        %vm466 = vcmp.lt.s32.totalorder %v402, 4
        %vm467 = vcmp.lt.s32.totalorder %v403, 4
        %vm468 = vcmp.lt.s32.totalorder %v404, 4
        %vm469 = vcmp.lt.s32.totalorder %v405, 4
        %vm470 = vcmp.lt.s32.totalorder %v406, 4
        %vm471 = vcmp.lt.s32.totalorder %v407, 4
        %vm472 = vcmp.lt.s32.totalorder %v408, 4
        %vm473 = vcmp.lt.s32.totalorder %v409, 4
        %v474 = vsel %vm410, 1, 0
        %v475 = vsel %vm411, 1, 0
        %v476 = vsel %vm412, 1, 0
        %v477 = vsel %vm413, 1, 0
        %v478 = vsel %vm414, 1, 0
        %v479 = vsel %vm415, 1, 0
        %v480 = vsel %vm416, 1, 0
        %v481 = vsel %vm417, 1, 0
        %v482 = vsel %vm418, 1, 0
        %v483 = vsel %vm419, 1, 0
        %v484 = vsel %vm420, 1, 0
        %v485 = vsel %vm421, 1, 0
        %v486 = vsel %vm422, 1, 0
        %v487 = vsel %vm423, 1, 0
        %v488 = vsel %vm424, 1, 0
        %v489 = vsel %vm425, 1, 0
        %v490 = vsel %vm426, 1, 0
        %v491 = vsel %vm427, 1, 0
        %v492 = vsel %vm428, 1, 0
        %v493 = vsel %vm429, 1, 0
        %v494 = vsel %vm430, 1, 0
        %v495 = vsel %vm431, 1, 0
        %v496 = vsel %vm432, 1, 0
        %v497 = vsel %vm433, 1, 0
        %v498 = vsel %vm434, 1, 0
        %v499 = vsel %vm435, 1, 0
        %v500 = vsel %vm436, 1, 0
        %v501 = vsel %vm437, 1, 0
        %v502 = vsel %vm438, 1, 0
        %v503 = vsel %vm439, 1, 0
        %v504 = vsel %vm440, 1, 0
        %v505 = vsel %vm441, 1, 0
        %v506 = vsel %vm442, 1, 0
        %v507 = vsel %vm443, 1, 0
        %v508 = vsel %vm444, 1, 0
        %v509 = vsel %vm445, 1, 0
        %v510 = vsel %vm446, 1, 0
        %v511 = vsel %vm447, 1, 0
        %v512 = vsel %vm448, 1, 0
        %v513 = vsel %vm449, 1, 0
        %v514 = vsel %vm450, 1, 0
        %v515 = vsel %vm451, 1, 0
        %v516 = vsel %vm452, 1, 0
        %v517 = vsel %vm453, 1, 0
        %v518 = vsel %vm454, 1, 0
        %v519 = vsel %vm455, 1, 0
        %v520 = vsel %vm456, 1, 0
        %v521 = vsel %vm457, 1, 0
        %v522 = vsel %vm458, 1, 0
        %v523 = vsel %vm459, 1, 0
        %v524 = vsel %vm460, 1, 0
        %v525 = vsel %vm461, 1, 0
        %v526 = vsel %vm462, 1, 0
        %v527 = vsel %vm463, 1, 0
        %v528 = vsel %vm464, 1, 0
        %v529 = vsel %vm465, 1, 0
        %v530 = vsel %vm466, 1, 0
        %v531 = vsel %vm467, 1, 0
        %v532 = vsel %vm468, 1, 0
        %v533 = vsel %vm469, 1, 0
        %v534 = vsel %vm470, 1, 0
        %v535 = vsel %vm471, 1, 0
        %v536 = vsel %vm472, 1, 0
        %v537 = vsel %vm473, 1, 0
        %538 = vset.pattern.permute.xlu0 0
        %539 = vperm.xlu0 %538, %v474
        %v540 = vpop.permute.xlu0 %539
        %541 = vset.pattern.permute.xlu0 0
        %542 = vperm.xlu0 %541, %v475
        %v543 = vpop.permute.xlu0 %542
        %544 = vset.pattern.permute.xlu0 0
        %545 = vperm.xlu0 %544, %v476
        %v546 = vpop.permute.xlu0 %545
        %547 = vset.pattern.permute.xlu0 0
        %548 = vperm.xlu0 %547, %v477
        %v549 = vpop.permute.xlu0 %548
        %550 = vset.pattern.permute.xlu0 0
        %551 = vperm.xlu0 %550, %v478
        %v552 = vpop.permute.xlu0 %551
        %553 = vset.pattern.permute.xlu0 0
        %554 = vperm.xlu0 %553, %v479
        %v555 = vpop.permute.xlu0 %554
        %556 = vset.pattern.permute.xlu0 0
        %557 = vperm.xlu0 %556, %v480
        %v558 = vpop.permute.xlu0 %557
        %559 = vset.pattern.permute.xlu0 0
        %560 = vperm.xlu0 %559, %v481
        %v561 = vpop.permute.xlu0 %560
        %562 = vset.pattern.permute.xlu0 0
        %563 = vperm.xlu0 %562, %v482
        %v564 = vpop.permute.xlu0 %563
        %565 = vset.pattern.permute.xlu0 0
        %566 = vperm.xlu0 %565, %v483
        %v567 = vpop.permute.xlu0 %566
        %568 = vset.pattern.permute.xlu0 0
        %569 = vperm.xlu0 %568, %v484
        %v570 = vpop.permute.xlu0 %569
        %571 = vset.pattern.permute.xlu0 0
        %572 = vperm.xlu0 %571, %v485
        %v573 = vpop.permute.xlu0 %572
        %574 = vset.pattern.permute.xlu0 0
        %575 = vperm.xlu0 %574, %v486
        %v576 = vpop.permute.xlu0 %575
        %577 = vset.pattern.permute.xlu0 0
        %578 = vperm.xlu0 %577, %v487
        %v579 = vpop.permute.xlu0 %578
        %580 = vset.pattern.permute.xlu0 0
        %581 = vperm.xlu0 %580, %v488
        %v582 = vpop.permute.xlu0 %581
        %583 = vset.pattern.permute.xlu0 0
        %584 = vperm.xlu0 %583, %v489
        %v585 = vpop.permute.xlu0 %584
        %586 = vset.pattern.permute.xlu0 0
        %587 = vperm.xlu0 %586, %v490
        %v588 = vpop.permute.xlu0 %587
        %589 = vset.pattern.permute.xlu0 0
        %590 = vperm.xlu0 %589, %v491
        %v591 = vpop.permute.xlu0 %590
        %592 = vset.pattern.permute.xlu0 0
        %593 = vperm.xlu0 %592, %v492
        %v594 = vpop.permute.xlu0 %593
        %595 = vset.pattern.permute.xlu0 0
        %596 = vperm.xlu0 %595, %v493
        %v597 = vpop.permute.xlu0 %596
        %598 = vset.pattern.permute.xlu0 0
        %599 = vperm.xlu0 %598, %v494
        %v600 = vpop.permute.xlu0 %599
        %601 = vset.pattern.permute.xlu0 0
        %602 = vperm.xlu0 %601, %v495
        %v603 = vpop.permute.xlu0 %602
        %604 = vset.pattern.permute.xlu0 0
        %605 = vperm.xlu0 %604, %v496
        %v606 = vpop.permute.xlu0 %605
        %607 = vset.pattern.permute.xlu0 0
        %608 = vperm.xlu0 %607, %v497
        %v609 = vpop.permute.xlu0 %608
        %610 = vset.pattern.permute.xlu0 0
        %611 = vperm.xlu0 %610, %v498
        %v612 = vpop.permute.xlu0 %611
        %613 = vset.pattern.permute.xlu0 0
        %614 = vperm.xlu0 %613, %v499
        %v615 = vpop.permute.xlu0 %614
        %616 = vset.pattern.permute.xlu0 0
        %617 = vperm.xlu0 %616, %v500
        %v618 = vpop.permute.xlu0 %617
        %619 = vset.pattern.permute.xlu0 0
        %620 = vperm.xlu0 %619, %v501
        %v621 = vpop.permute.xlu0 %620
        %622 = vset.pattern.permute.xlu0 0
        %623 = vperm.xlu0 %622, %v502
        %v624 = vpop.permute.xlu0 %623
        %625 = vset.pattern.permute.xlu0 0
        %626 = vperm.xlu0 %625, %v503
        %v627 = vpop.permute.xlu0 %626
        %628 = vset.pattern.permute.xlu0 0
        %629 = vperm.xlu0 %628, %v504
        %v630 = vpop.permute.xlu0 %629
        %631 = vset.pattern.permute.xlu0 0
        %632 = vperm.xlu0 %631, %v505
        %v633 = vpop.permute.xlu0 %632
        %634 = vset.pattern.permute.xlu0 0
        %635 = vperm.xlu0 %634, %v506
        %v636 = vpop.permute.xlu0 %635
        %637 = vset.pattern.permute.xlu0 0
        %638 = vperm.xlu0 %637, %v507
        %v639 = vpop.permute.xlu0 %638
        %640 = vset.pattern.permute.xlu0 0
        %641 = vperm.xlu0 %640, %v508
        %v642 = vpop.permute.xlu0 %641
        %643 = vset.pattern.permute.xlu0 0
        %644 = vperm.xlu0 %643, %v509
        %v645 = vpop.permute.xlu0 %644
        %646 = vset.pattern.permute.xlu0 0
        %647 = vperm.xlu0 %646, %v510
        %v648 = vpop.permute.xlu0 %647
        %649 = vset.pattern.permute.xlu0 0
        %650 = vperm.xlu0 %649, %v511
        %v651 = vpop.permute.xlu0 %650
        %652 = vset.pattern.permute.xlu0 0
        %653 = vperm.xlu0 %652, %v512
        %v654 = vpop.permute.xlu0 %653
        %655 = vset.pattern.permute.xlu0 0
        %656 = vperm.xlu0 %655, %v513
        %v657 = vpop.permute.xlu0 %656
        %658 = vset.pattern.permute.xlu0 0
        %659 = vperm.xlu0 %658, %v514
        %v660 = vpop.permute.xlu0 %659
        %661 = vset.pattern.permute.xlu0 0
        %662 = vperm.xlu0 %661, %v515
        %v663 = vpop.permute.xlu0 %662
        %664 = vset.pattern.permute.xlu0 0
        %665 = vperm.xlu0 %664, %v516
        %v666 = vpop.permute.xlu0 %665
        %667 = vset.pattern.permute.xlu0 0
        %668 = vperm.xlu0 %667, %v517
        %v669 = vpop.permute.xlu0 %668
        %670 = vset.pattern.permute.xlu0 0
        %671 = vperm.xlu0 %670, %v518
        %v672 = vpop.permute.xlu0 %671
        %673 = vset.pattern.permute.xlu0 0
        %674 = vperm.xlu0 %673, %v519
        %v675 = vpop.permute.xlu0 %674
        %676 = vset.pattern.permute.xlu0 0
        %677 = vperm.xlu0 %676, %v520
        %v678 = vpop.permute.xlu0 %677
        %679 = vset.pattern.permute.xlu0 0
        %680 = vperm.xlu0 %679, %v521
        %v681 = vpop.permute.xlu0 %680
        %682 = vset.pattern.permute.xlu0 0
        %683 = vperm.xlu0 %682, %v522
        %v684 = vpop.permute.xlu0 %683
        %685 = vset.pattern.permute.xlu0 0
        %686 = vperm.xlu0 %685, %v523
        %v687 = vpop.permute.xlu0 %686
        %688 = vset.pattern.permute.xlu0 0
        %689 = vperm.xlu0 %688, %v524
        %v690 = vpop.permute.xlu0 %689
        %691 = vset.pattern.permute.xlu0 0
        %692 = vperm.xlu0 %691, %v525
        %v693 = vpop.permute.xlu0 %692
        %694 = vset.pattern.permute.xlu0 0
        %695 = vperm.xlu0 %694, %v526
        %v696 = vpop.permute.xlu0 %695
        %697 = vset.pattern.permute.xlu0 0
        %698 = vperm.xlu0 %697, %v527
        %v699 = vpop.permute.xlu0 %698
        %700 = vset.pattern.permute.xlu0 0
        %701 = vperm.xlu0 %700, %v528
        %v702 = vpop.permute.xlu0 %701
        %703 = vset.pattern.permute.xlu0 0
        %704 = vperm.xlu0 %703, %v529
        %v705 = vpop.permute.xlu0 %704
        %706 = vset.pattern.permute.xlu0 0
        %707 = vperm.xlu0 %706, %v530
        %v708 = vpop.permute.xlu0 %707
        %709 = vset.pattern.permute.xlu0 0
        %710 = vperm.xlu0 %709, %v531
        %v711 = vpop.permute.xlu0 %710
        %712 = vset.pattern.permute.xlu0 0
        %713 = vperm.xlu0 %712, %v532
        %v714 = vpop.permute.xlu0 %713
        %715 = vset.pattern.permute.xlu0 0
        %716 = vperm.xlu0 %715, %v533
        %v717 = vpop.permute.xlu0 %716
        %718 = vset.pattern.permute.xlu0 0
        %719 = vperm.xlu0 %718, %v534
        %v720 = vpop.permute.xlu0 %719
        %721 = vset.pattern.permute.xlu0 0
        %722 = vperm.xlu0 %721, %v535
        %v723 = vpop.permute.xlu0 %722
        %724 = vset.pattern.permute.xlu0 0
        %725 = vperm.xlu0 %724, %v536
        %v726 = vpop.permute.xlu0 %725
        %727 = vset.pattern.permute.xlu0 0
        %728 = vperm.xlu0 %727, %v537
        %v729 = vpop.permute.xlu0 %728
        %vm730 = vcmp.eq.s32.totalorder %v540, 1
        %vm731 = vcmp.eq.s32.totalorder %v543, 1
        %vm732 = vcmp.eq.s32.totalorder %v546, 1
        %vm733 = vcmp.eq.s32.totalorder %v549, 1
        %vm734 = vcmp.eq.s32.totalorder %v552, 1
        %vm735 = vcmp.eq.s32.totalorder %v555, 1
        %vm736 = vcmp.eq.s32.totalorder %v558, 1
        %vm737 = vcmp.eq.s32.totalorder %v561, 1
        %vm738 = vcmp.eq.s32.totalorder %v564, 1
        %vm739 = vcmp.eq.s32.totalorder %v567, 1
        %vm740 = vcmp.eq.s32.totalorder %v570, 1
        %vm741 = vcmp.eq.s32.totalorder %v573, 1
        %vm742 = vcmp.eq.s32.totalorder %v576, 1
        %vm743 = vcmp.eq.s32.totalorder %v579, 1
        %vm744 = vcmp.eq.s32.totalorder %v582, 1
        %vm745 = vcmp.eq.s32.totalorder %v585, 1
        %vm746 = vcmp.eq.s32.totalorder %v588, 1
        %vm747 = vcmp.eq.s32.totalorder %v591, 1
        %vm748 = vcmp.eq.s32.totalorder %v594, 1
        %vm749 = vcmp.eq.s32.totalorder %v597, 1
        %vm750 = vcmp.eq.s32.totalorder %v600, 1
        %vm751 = vcmp.eq.s32.totalorder %v603, 1
        %vm752 = vcmp.eq.s32.totalorder %v606, 1
        %vm753 = vcmp.eq.s32.totalorder %v609, 1
        %vm754 = vcmp.eq.s32.totalorder %v612, 1
        %vm755 = vcmp.eq.s32.totalorder %v615, 1
        %vm756 = vcmp.eq.s32.totalorder %v618, 1
        %vm757 = vcmp.eq.s32.totalorder %v621, 1
        %vm758 = vcmp.eq.s32.totalorder %v624, 1
        %vm759 = vcmp.eq.s32.totalorder %v627, 1
        %vm760 = vcmp.eq.s32.totalorder %v630, 1
        %vm761 = vcmp.eq.s32.totalorder %v633, 1
        %vm762 = vcmp.eq.s32.totalorder %v636, 1
        %vm763 = vcmp.eq.s32.totalorder %v639, 1
        %vm764 = vcmp.eq.s32.totalorder %v642, 1
        %vm765 = vcmp.eq.s32.totalorder %v645, 1
        %vm766 = vcmp.eq.s32.totalorder %v648, 1
        %vm767 = vcmp.eq.s32.totalorder %v651, 1
        %vm768 = vcmp.eq.s32.totalorder %v654, 1
        %vm769 = vcmp.eq.s32.totalorder %v657, 1
        %vm770 = vcmp.eq.s32.totalorder %v660, 1
        %vm771 = vcmp.eq.s32.totalorder %v663, 1
        %vm772 = vcmp.eq.s32.totalorder %v666, 1
        %vm773 = vcmp.eq.s32.totalorder %v669, 1
        %vm774 = vcmp.eq.s32.totalorder %v672, 1
        %vm775 = vcmp.eq.s32.totalorder %v675, 1
        %vm776 = vcmp.eq.s32.totalorder %v678, 1
        %vm777 = vcmp.eq.s32.totalorder %v681, 1
        %vm778 = vcmp.eq.s32.totalorder %v684, 1
        %vm779 = vcmp.eq.s32.totalorder %v687, 1
        %vm780 = vcmp.eq.s32.totalorder %v690, 1
        %vm781 = vcmp.eq.s32.totalorder %v693, 1
        %vm782 = vcmp.eq.s32.totalorder %v696, 1
        %vm783 = vcmp.eq.s32.totalorder %v699, 1
        %vm784 = vcmp.eq.s32.totalorder %v702, 1
        %vm785 = vcmp.eq.s32.totalorder %v705, 1
        %vm786 = vcmp.eq.s32.totalorder %v708, 1
        %vm787 = vcmp.eq.s32.totalorder %v711, 1
        %vm788 = vcmp.eq.s32.totalorder %v714, 1
        %vm789 = vcmp.eq.s32.totalorder %v717, 1
        %vm790 = vcmp.eq.s32.totalorder %v720, 1
        %vm791 = vcmp.eq.s32.totalorder %v723, 1
        %vm792 = vcmp.eq.s32.totalorder %v726, 1
        %vm793 = vcmp.eq.s32.totalorder %v729, 1
        %v794 = vsel %vm730, %v281, 0.0
        %v795 = vsel %vm731, %v282, 0.0
        %v796 = vsel %vm732, %v283, 0.0
        %v797 = vsel %vm733, %v284, 0.0
        %v798 = vsel %vm734, %v285, 0.0
        %v799 = vsel %vm735, %v286, 0.0
        %v800 = vsel %vm736, %v287, 0.0
        %v801 = vsel %vm737, %v288, 0.0
        %v802 = vsel %vm738, %v289, 0.0
        %v803 = vsel %vm739, %v290, 0.0
        %v804 = vsel %vm740, %v291, 0.0
        %v805 = vsel %vm741, %v292, 0.0
        %v806 = vsel %vm742, %v293, 0.0
        %v807 = vsel %vm743, %v294, 0.0
        %v808 = vsel %vm744, %v295, 0.0
        %v809 = vsel %vm745, %v296, 0.0
        %v810 = vsel %vm746, %v297, 0.0
        %v811 = vsel %vm747, %v298, 0.0
        %v812 = vsel %vm748, %v299, 0.0
        %v813 = vsel %vm749, %v300, 0.0
        %v814 = vsel %vm750, %v301, 0.0
        %v815 = vsel %vm751, %v302, 0.0
        %v816 = vsel %vm752, %v303, 0.0
        %v817 = vsel %vm753, %v304, 0.0
        %v818 = vsel %vm754, %v305, 0.0
        %v819 = vsel %vm755, %v306, 0.0
        %v820 = vsel %vm756, %v307, 0.0
        %v821 = vsel %vm757, %v308, 0.0
        %v822 = vsel %vm758, %v309, 0.0
        %v823 = vsel %vm759, %v310, 0.0
        %v824 = vsel %vm760, %v311, 0.0
        %v825 = vsel %vm761, %v312, 0.0
        %v826 = vsel %vm762, %v313, 0.0
        %v827 = vsel %vm763, %v314, 0.0
        %v828 = vsel %vm764, %v315, 0.0
        %v829 = vsel %vm765, %v316, 0.0
        %v830 = vsel %vm766, %v317, 0.0
        %v831 = vsel %vm767, %v318, 0.0
        %v832 = vsel %vm768, %v319, 0.0
        %v833 = vsel %vm769, %v320, 0.0
        %v834 = vsel %vm770, %v321, 0.0
        %v835 = vsel %vm771, %v322, 0.0
        %v836 = vsel %vm772, %v323, 0.0
        %v837 = vsel %vm773, %v324, 0.0
        %v838 = vsel %vm774, %v325, 0.0
        %v839 = vsel %vm775, %v326, 0.0
        %v840 = vsel %vm776, %v327, 0.0
        %v841 = vsel %vm777, %v328, 0.0
        %v842 = vsel %vm778, %v329, 0.0
        %v843 = vsel %vm779, %v330, 0.0
        %v844 = vsel %vm780, %v331, 0.0
        %v845 = vsel %vm781, %v332, 0.0
        %v846 = vsel %vm782, %v333, 0.0
        %v847 = vsel %vm783, %v334, 0.0
        %v848 = vsel %vm784, %v335, 0.0
        %v849 = vsel %vm785, %v336, 0.0
        %v850 = vsel %vm786, %v337, 0.0
        %v851 = vsel %vm787, %v338, 0.0
        %v852 = vsel %vm788, %v339, 0.0
        %v853 = vsel %vm789, %v340, 0.0
        %v854 = vsel %vm790, %v341, 0.0
        %v855 = vsel %vm791, %v342, 0.0
        %v856 = vsel %vm792, %v343, 0.0
        %v857 = vsel %vm793, %v344, 0.0
        %v858 = vlaneseq
        %v859 = vshrl.u32 %v858, 7
        %v860 = vlaneseq
        %v861 = vshrl.u32 %v860, 7
        %v862 = vsub.s32 0, %v861
        %v863 = vrot.slane %v345, %v862
        %v864 = vlaneseq
        %v865 = vshrl.u32 %v864, 7
        %v866 = vsub.s32 1, %v865
        %v867 = vrot.slane %v345, %v866
        %v868 = vlaneseq
        %v869 = vshrl.u32 %v868, 7
        %v870 = vsub.s32 2, %v869
        %v871 = vrot.slane %v345, %v870
        %v872 = vlaneseq
        %v873 = vshrl.u32 %v872, 7
        %v874 = vsub.s32 3, %v873
        %v875 = vrot.slane %v345, %v874
        %vm876 = vcmp.eq.s32.totalorder %v859, %v863
        %vm877 = vcmp.eq.s32.totalorder %v859, %v867
        %vm878 = vcmp.eq.s32.totalorder %v859, %v871
        %vm879 = vcmp.eq.s32.totalorder %v859, %v875
        %v880 = vsel %vm876, 1, 0
        %v881 = vsel %vm877, 1, 0
        %v882 = vsel %vm878, 1, 0
        %v883 = vsel %vm879, 1, 0
        %v884 = vcvt.s32.f32 %v880
        %v885 = vcvt.s32.f32 %v881
        %v886 = vcvt.s32.f32 %v882
        %v887 = vcvt.s32.f32 %v883
        %v888 = vld [vmem:[#allocation2] sm:$0xf]
        %889 = vmatprep.subr.mxu0 0.0
        %890 = vmatpush1.msra.mxu0 %v794
        %891 = vmatprep.subr.mxu0 0.0
        %892 = vmatpush1.msra.mxu0 %v795
        %893 = vmatprep.subr.mxu0 0.0
        %894 = vmatpush1.msra.mxu0 %v796
        %895 = vmatprep.subr.mxu0 0.0
        %896 = vmatpush1.msra.mxu0 %v797
        %897 = vmatprep.subr.mxu0 0.0
        %898 = vmatpush1.msra.mxu0 %v798
        %899 = vmatprep.subr.mxu0 0.0
        %900 = vmatpush1.msra.mxu0 %v799
        %901 = vmatprep.subr.mxu0 0.0
        %902 = vmatpush1.msra.mxu0 %v800
        %903 = vmatprep.subr.mxu0 0.0
        %904 = vmatpush1.msra.mxu0 %v801
        %905 = vmatprep.subr.mxu0 0.0
        %906 = vmatpush1.msra.mxu0 %v802
        %907 = vmatprep.subr.mxu0 0.0
        %908 = vmatpush1.msra.mxu0 %v803
        %909 = vmatprep.subr.mxu0 0.0
        %910 = vmatpush1.msra.mxu0 %v804
        %911 = vmatprep.subr.mxu0 0.0
        %912 = vmatpush1.msra.mxu0 %v805
        %913 = vmatprep.subr.mxu0 0.0
        %914 = vmatpush1.msra.mxu0 %v806
        %915 = vmatprep.subr.mxu0 0.0
        %916 = vmatpush1.msra.mxu0 %v807
        %917 = vmatprep.subr.mxu0 0.0
        %918 = vmatpush1.msra.mxu0 %v808
        %919 = vmatprep.subr.mxu0 0.0
        %920 = vmatpush1.msra.mxu0 %v809
        %921 = vmatprep.subr.mxu0 0.0
        %922 = vmatpush1.msra.mxu0 %v810
        %923 = vmatprep.subr.mxu0 0.0
        %924 = vmatpush1.msra.mxu0 %v811
        %925 = vmatprep.subr.mxu0 0.0
        %926 = vmatpush1.msra.mxu0 %v812
        %927 = vmatprep.subr.mxu0 0.0
        %928 = vmatpush1.msra.mxu0 %v813
        %929 = vmatprep.subr.mxu0 0.0
        %930 = vmatpush1.msra.mxu0 %v814
        %931 = vmatprep.subr.mxu0 0.0
        %932 = vmatpush1.msra.mxu0 %v815
        %933 = vmatprep.subr.mxu0 0.0
        %934 = vmatpush1.msra.mxu0 %v816
        %935 = vmatprep.subr.mxu0 0.0
        %936 = vmatpush1.msra.mxu0 %v817
        %937 = vmatprep.subr.mxu0 0.0
        %938 = vmatpush1.msra.mxu0 %v818
        %939 = vmatprep.subr.mxu0 0.0
        %940 = vmatpush1.msra.mxu0 %v819
        %941 = vmatprep.subr.mxu0 0.0
        %942 = vmatpush1.msra.mxu0 %v820
        %943 = vmatprep.subr.mxu0 0.0
        %944 = vmatpush1.msra.mxu0 %v821
        %945 = vmatprep.subr.mxu0 0.0
        %946 = vmatpush1.msra.mxu0 %v822
        %947 = vmatprep.subr.mxu0 0.0
        %948 = vmatpush1.msra.mxu0 %v823
        %949 = vmatprep.subr.mxu0 0.0
        %950 = vmatpush1.msra.mxu0 %v824
        %951 = vmatprep.subr.mxu0 0.0
        %952 = vmatpush1.msra.mxu0 %v825
        %953 = vmatprep.mubr.f32.mxu0 %v885
        %954 = vmatmul.mubr.f32.gmra.mrb[0].mxu0 %v884
        %v955 = vpop.f32.mrb[0].mxu0
        %v956 = vadd.f32 0.0, %v955
        %v957 = vpop.f32.mrb[0].mxu0
        %958 = vdwg.mxu0
        %959 = vmatprep.subr.mxu0 0.0
        %960 = vmatpush1.msra.mxu0 %v826
        %961 = vmatprep.subr.mxu0 0.0
        %962 = vmatpush1.msra.mxu0 %v827
        %963 = vmatprep.subr.mxu0 0.0
        %964 = vmatpush1.msra.mxu0 %v828
        %965 = vmatprep.subr.mxu0 0.0
        %966 = vmatpush1.msra.mxu0 %v829
        %967 = vmatprep.subr.mxu0 0.0
        %968 = vmatpush1.msra.mxu0 %v830
        %969 = vmatprep.subr.mxu0 0.0
        %970 = vmatpush1.msra.mxu0 %v831
        %971 = vmatprep.subr.mxu0 0.0
        %972 = vmatpush1.msra.mxu0 %v832
        %973 = vmatprep.subr.mxu0 0.0
        %974 = vmatpush1.msra.mxu0 %v833
        %975 = vmatprep.subr.mxu0 0.0
        %976 = vmatpush1.msra.mxu0 %v834
        %977 = vmatprep.subr.mxu0 0.0
        %978 = vmatpush1.msra.mxu0 %v835
        %979 = vmatprep.subr.mxu0 0.0
        %980 = vmatpush1.msra.mxu0 %v836
        %981 = vmatprep.subr.mxu0 0.0
        %982 = vmatpush1.msra.mxu0 %v837
        %983 = vmatprep.subr.mxu0 0.0
        %984 = vmatpush1.msra.mxu0 %v838
        %985 = vmatprep.subr.mxu0 0.0
        %986 = vmatpush1.msra.mxu0 %v839
        %987 = vmatprep.subr.mxu0 0.0
        %988 = vmatpush1.msra.mxu0 %v840
        %989 = vmatprep.subr.mxu0 0.0
        %990 = vmatpush1.msra.mxu0 %v841
        %991 = vmatprep.subr.mxu0 0.0
        %992 = vmatpush1.msra.mxu0 %v842
        %993 = vmatprep.subr.mxu0 0.0
        %994 = vmatpush1.msra.mxu0 %v843
        %995 = vmatprep.subr.mxu0 0.0
        %996 = vmatpush1.msra.mxu0 %v844
        %997 = vmatprep.subr.mxu0 0.0
        %998 = vmatpush1.msra.mxu0 %v845
        %999 = vmatprep.subr.mxu0 0.0
        %1000 = vmatpush1.msra.mxu0 %v846
        %1001 = vmatprep.subr.mxu0 0.0
        %1002 = vmatpush1.msra.mxu0 %v847
        %1003 = vmatprep.subr.mxu0 0.0
        %1004 = vmatpush1.msra.mxu0 %v848
        %1005 = vmatprep.subr.mxu0 0.0
        %1006 = vmatpush1.msra.mxu0 %v849
        %1007 = vmatprep.subr.mxu0 0.0
        %1008 = vmatpush1.msra.mxu0 %v850
        %1009 = vmatprep.subr.mxu0 0.0
        %1010 = vmatpush1.msra.mxu0 %v851
        %1011 = vmatprep.subr.mxu0 0.0
        %1012 = vmatpush1.msra.mxu0 %v852
        %1013 = vmatprep.subr.mxu0 0.0
        %1014 = vmatpush1.msra.mxu0 %v853
        %1015 = vmatprep.subr.mxu0 0.0
        %1016 = vmatpush1.msra.mxu0 %v854
        %1017 = vmatprep.subr.mxu0 0.0
        %1018 = vmatpush1.msra.mxu0 %v855
        %1019 = vmatprep.subr.mxu0 0.0
        %1020 = vmatpush1.msra.mxu0 %v856
        %1021 = vmatprep.subr.mxu0 0.0
        %1022 = vmatpush1.msra.mxu0 %v857
        %1023 = vmatprep.mubr.f32.mxu0 %v887
        %1024 = vmatmul.mubr.f32.gmra.mrb[0].mxu0 %v886
        %v1025 = vpop.f32.mrb[0].mxu0
        %v1026 = vadd.f32 %v956, %v1025
        %v1027 = vpop.f32.mrb[0].mxu0
        %1028 = vdwg.mxu0
        %v1029 = vadd.f32 %v888, %v1026
        %vm1030 = vcmask 257024
        %1031 = vst.msk [vmem:[#allocation2] sm:$0xf] %vm1030, %v1029
        %vm1032 = vcmp.eq.s32.totalorder %v346, 0
        %vm1033 = vcmp.eq.s32.totalorder %v347, 0
        %vm1034 = vcmp.eq.s32.totalorder %v348, 0
        %vm1035 = vcmp.eq.s32.totalorder %v349, 0
        %vm1036 = vcmp.eq.s32.totalorder %v350, 0
        %vm1037 = vcmp.eq.s32.totalorder %v351, 0
        %vm1038 = vcmp.eq.s32.totalorder %v352, 0
        %vm1039 = vcmp.eq.s32.totalorder %v353, 0
        %vm1040 = vcmp.eq.s32.totalorder %v354, 0
        %vm1041 = vcmp.eq.s32.totalorder %v355, 0
        %vm1042 = vcmp.eq.s32.totalorder %v356, 0
        %vm1043 = vcmp.eq.s32.totalorder %v357, 0
        %vm1044 = vcmp.eq.s32.totalorder %v358, 0
        %vm1045 = vcmp.eq.s32.totalorder %v359, 0
        %vm1046 = vcmp.eq.s32.totalorder %v360, 0
        %vm1047 = vcmp.eq.s32.totalorder %v361, 0
        %vm1048 = vcmp.eq.s32.totalorder %v362, 0
        %vm1049 = vcmp.eq.s32.totalorder %v363, 0
        %vm1050 = vcmp.eq.s32.totalorder %v364, 0
        %vm1051 = vcmp.eq.s32.totalorder %v365, 0
        %vm1052 = vcmp.eq.s32.totalorder %v366, 0
        %vm1053 = vcmp.eq.s32.totalorder %v367, 0
        %vm1054 = vcmp.eq.s32.totalorder %v368, 0
        %vm1055 = vcmp.eq.s32.totalorder %v369, 0
        %vm1056 = vcmp.eq.s32.totalorder %v370, 0
        %vm1057 = vcmp.eq.s32.totalorder %v371, 0
        %vm1058 = vcmp.eq.s32.totalorder %v372, 0
        %vm1059 = vcmp.eq.s32.totalorder %v373, 0
        %vm1060 = vcmp.eq.s32.totalorder %v374, 0
        %vm1061 = vcmp.eq.s32.totalorder %v375, 0
        %vm1062 = vcmp.eq.s32.totalorder %v376, 0
        %vm1063 = vcmp.eq.s32.totalorder %v377, 0
        %vm1064 = vcmp.eq.s32.totalorder %v378, 0
        %vm1065 = vcmp.eq.s32.totalorder %v379, 0
        %vm1066 = vcmp.eq.s32.totalorder %v380, 0
        %vm1067 = vcmp.eq.s32.totalorder %v381, 0
        %vm1068 = vcmp.eq.s32.totalorder %v382, 0
        %vm1069 = vcmp.eq.s32.totalorder %v383, 0
        %vm1070 = vcmp.eq.s32.totalorder %v384, 0
        %vm1071 = vcmp.eq.s32.totalorder %v385, 0
        %vm1072 = vcmp.eq.s32.totalorder %v386, 0
        %vm1073 = vcmp.eq.s32.totalorder %v387, 0
        %vm1074 = vcmp.eq.s32.totalorder %v388, 0
        %vm1075 = vcmp.eq.s32.totalorder %v389, 0
        %vm1076 = vcmp.eq.s32.totalorder %v390, 0
        %vm1077 = vcmp.eq.s32.totalorder %v391, 0
        %vm1078 = vcmp.eq.s32.totalorder %v392, 0
        %vm1079 = vcmp.eq.s32.totalorder %v393, 0
        %vm1080 = vcmp.eq.s32.totalorder %v394, 0
        %vm1081 = vcmp.eq.s32.totalorder %v395, 0
        %vm1082 = vcmp.eq.s32.totalorder %v396, 0
        %vm1083 = vcmp.eq.s32.totalorder %v397, 0
        %vm1084 = vcmp.eq.s32.totalorder %v398, 0
        %vm1085 = vcmp.eq.s32.totalorder %v399, 0
        %vm1086 = vcmp.eq.s32.totalorder %v400, 0
        %vm1087 = vcmp.eq.s32.totalorder %v401, 0
        %vm1088 = vcmp.eq.s32.totalorder %v402, 0
        %vm1089 = vcmp.eq.s32.totalorder %v403, 0
        %vm1090 = vcmp.eq.s32.totalorder %v404, 0
        %vm1091 = vcmp.eq.s32.totalorder %v405, 0
        %vm1092 = vcmp.eq.s32.totalorder %v406, 0
        %vm1093 = vcmp.eq.s32.totalorder %v407, 0
        %vm1094 = vcmp.eq.s32.totalorder %v408, 0
        %vm1095 = vcmp.eq.s32.totalorder %v409, 0
        %v1096 = vsel %vm1032, 1, 0
        %v1097 = vsel %vm1033, 1, 0
        %v1098 = vsel %vm1034, 1, 0
        %v1099 = vsel %vm1035, 1, 0
        %v1100 = vsel %vm1036, 1, 0
        %v1101 = vsel %vm1037, 1, 0
        %v1102 = vsel %vm1038, 1, 0
        %v1103 = vsel %vm1039, 1, 0
        %v1104 = vsel %vm1040, 1, 0
        %v1105 = vsel %vm1041, 1, 0
        %v1106 = vsel %vm1042, 1, 0
        %v1107 = vsel %vm1043, 1, 0
        %v1108 = vsel %vm1044, 1, 0
        %v1109 = vsel %vm1045, 1, 0
        %v1110 = vsel %vm1046, 1, 0
        %v1111 = vsel %vm1047, 1, 0
        %v1112 = vsel %vm1048, 1, 0
        %v1113 = vsel %vm1049, 1, 0
        %v1114 = vsel %vm1050, 1, 0
        %v1115 = vsel %vm1051, 1, 0
        %v1116 = vsel %vm1052, 1, 0
        %v1117 = vsel %vm1053, 1, 0
        %v1118 = vsel %vm1054, 1, 0
        %v1119 = vsel %vm1055, 1, 0
        %v1120 = vsel %vm1056, 1, 0
        %v1121 = vsel %vm1057, 1, 0
        %v1122 = vsel %vm1058, 1, 0
        %v1123 = vsel %vm1059, 1, 0
        %v1124 = vsel %vm1060, 1, 0
        %v1125 = vsel %vm1061, 1, 0
        %v1126 = vsel %vm1062, 1, 0
        %v1127 = vsel %vm1063, 1, 0
        %v1128 = vsel %vm1064, 1, 0
        %v1129 = vsel %vm1065, 1, 0
        %v1130 = vsel %vm1066, 1, 0
        %v1131 = vsel %vm1067, 1, 0
        %v1132 = vsel %vm1068, 1, 0
        %v1133 = vsel %vm1069, 1, 0
        %v1134 = vsel %vm1070, 1, 0
        %v1135 = vsel %vm1071, 1, 0
        %v1136 = vsel %vm1072, 1, 0
        %v1137 = vsel %vm1073, 1, 0
        %v1138 = vsel %vm1074, 1, 0
        %v1139 = vsel %vm1075, 1, 0
        %v1140 = vsel %vm1076, 1, 0
        %v1141 = vsel %vm1077, 1, 0
        %v1142 = vsel %vm1078, 1, 0
        %v1143 = vsel %vm1079, 1, 0
        %v1144 = vsel %vm1080, 1, 0
        %v1145 = vsel %vm1081, 1, 0
        %v1146 = vsel %vm1082, 1, 0
        %v1147 = vsel %vm1083, 1, 0
        %v1148 = vsel %vm1084, 1, 0
        %v1149 = vsel %vm1085, 1, 0
        %v1150 = vsel %vm1086, 1, 0
        %v1151 = vsel %vm1087, 1, 0
        %v1152 = vsel %vm1088, 1, 0
        %v1153 = vsel %vm1089, 1, 0
        %v1154 = vsel %vm1090, 1, 0
        %v1155 = vsel %vm1091, 1, 0
        %v1156 = vsel %vm1092, 1, 0
        %v1157 = vsel %vm1093, 1, 0
        %v1158 = vsel %vm1094, 1, 0
        %v1159 = vsel %vm1095, 1, 0
        %1160 = vset.pattern.permute.xlu0 0
        %1161 = vperm.xlu0 %1160, %v1096
        %v1162 = vpop.permute.xlu0 %1161
        %1163 = vset.pattern.permute.xlu0 0
        %1164 = vperm.xlu0 %1163, %v1097
        %v1165 = vpop.permute.xlu0 %1164
        %1166 = vset.pattern.permute.xlu0 0
        %1167 = vperm.xlu0 %1166, %v1098
        %v1168 = vpop.permute.xlu0 %1167
        %1169 = vset.pattern.permute.xlu0 0
        %1170 = vperm.xlu0 %1169, %v1099
        %v1171 = vpop.permute.xlu0 %1170
        %1172 = vset.pattern.permute.xlu0 0
        %1173 = vperm.xlu0 %1172, %v1100
        %v1174 = vpop.permute.xlu0 %1173
        %1175 = vset.pattern.permute.xlu0 0
        %1176 = vperm.xlu0 %1175, %v1101
        %v1177 = vpop.permute.xlu0 %1176
        %1178 = vset.pattern.permute.xlu0 0
        %1179 = vperm.xlu0 %1178, %v1102
        %v1180 = vpop.permute.xlu0 %1179
        %1181 = vset.pattern.permute.xlu0 0
        %1182 = vperm.xlu0 %1181, %v1103
        %v1183 = vpop.permute.xlu0 %1182
        %1184 = vset.pattern.permute.xlu0 0
        %1185 = vperm.xlu0 %1184, %v1104
        %v1186 = vpop.permute.xlu0 %1185
        %1187 = vset.pattern.permute.xlu0 0
        %1188 = vperm.xlu0 %1187, %v1105
        %v1189 = vpop.permute.xlu0 %1188
        %1190 = vset.pattern.permute.xlu0 0
        %1191 = vperm.xlu0 %1190, %v1106
        %v1192 = vpop.permute.xlu0 %1191
        %1193 = vset.pattern.permute.xlu0 0
        %1194 = vperm.xlu0 %1193, %v1107
        %v1195 = vpop.permute.xlu0 %1194
        %1196 = vset.pattern.permute.xlu0 0
        %1197 = vperm.xlu0 %1196, %v1108
        %v1198 = vpop.permute.xlu0 %1197
        %1199 = vset.pattern.permute.xlu0 0
        %1200 = vperm.xlu0 %1199, %v1109
        %v1201 = vpop.permute.xlu0 %1200
        %1202 = vset.pattern.permute.xlu0 0
        %1203 = vperm.xlu0 %1202, %v1110
        %v1204 = vpop.permute.xlu0 %1203
        %1205 = vset.pattern.permute.xlu0 0
        %1206 = vperm.xlu0 %1205, %v1111
        %v1207 = vpop.permute.xlu0 %1206
        %1208 = vset.pattern.permute.xlu0 0
        %1209 = vperm.xlu0 %1208, %v1112
        %v1210 = vpop.permute.xlu0 %1209
        %1211 = vset.pattern.permute.xlu0 0
        %1212 = vperm.xlu0 %1211, %v1113
        %v1213 = vpop.permute.xlu0 %1212
        %1214 = vset.pattern.permute.xlu0 0
        %1215 = vperm.xlu0 %1214, %v1114
        %v1216 = vpop.permute.xlu0 %1215
        %1217 = vset.pattern.permute.xlu0 0
        %1218 = vperm.xlu0 %1217, %v1115
        %v1219 = vpop.permute.xlu0 %1218
        %1220 = vset.pattern.permute.xlu0 0
        %1221 = vperm.xlu0 %1220, %v1116
        %v1222 = vpop.permute.xlu0 %1221
        %1223 = vset.pattern.permute.xlu0 0
        %1224 = vperm.xlu0 %1223, %v1117
        %v1225 = vpop.permute.xlu0 %1224
        %1226 = vset.pattern.permute.xlu0 0
        %1227 = vperm.xlu0 %1226, %v1118
        %v1228 = vpop.permute.xlu0 %1227
        %1229 = vset.pattern.permute.xlu0 0
        %1230 = vperm.xlu0 %1229, %v1119
        %v1231 = vpop.permute.xlu0 %1230
        %1232 = vset.pattern.permute.xlu0 0
        %1233 = vperm.xlu0 %1232, %v1120
        %v1234 = vpop.permute.xlu0 %1233
        %1235 = vset.pattern.permute.xlu0 0
        %1236 = vperm.xlu0 %1235, %v1121
        %v1237 = vpop.permute.xlu0 %1236
        %1238 = vset.pattern.permute.xlu0 0
        %1239 = vperm.xlu0 %1238, %v1122
        %v1240 = vpop.permute.xlu0 %1239
        %1241 = vset.pattern.permute.xlu0 0
        %1242 = vperm.xlu0 %1241, %v1123
        %v1243 = vpop.permute.xlu0 %1242
        %1244 = vset.pattern.permute.xlu0 0
        %1245 = vperm.xlu0 %1244, %v1124
        %v1246 = vpop.permute.xlu0 %1245
        %1247 = vset.pattern.permute.xlu0 0
        %1248 = vperm.xlu0 %1247, %v1125
        %v1249 = vpop.permute.xlu0 %1248
        %1250 = vset.pattern.permute.xlu0 0
        %1251 = vperm.xlu0 %1250, %v1126
        %v1252 = vpop.permute.xlu0 %1251
        %1253 = vset.pattern.permute.xlu0 0
        %1254 = vperm.xlu0 %1253, %v1127
        %v1255 = vpop.permute.xlu0 %1254
        %1256 = vset.pattern.permute.xlu0 0
        %1257 = vperm.xlu0 %1256, %v1128
        %v1258 = vpop.permute.xlu0 %1257
        %1259 = vset.pattern.permute.xlu0 0
        %1260 = vperm.xlu0 %1259, %v1129
        %v1261 = vpop.permute.xlu0 %1260
        %1262 = vset.pattern.permute.xlu0 0
        %1263 = vperm.xlu0 %1262, %v1130
        %v1264 = vpop.permute.xlu0 %1263
        %1265 = vset.pattern.permute.xlu0 0
        %1266 = vperm.xlu0 %1265, %v1131
        %v1267 = vpop.permute.xlu0 %1266
        %1268 = vset.pattern.permute.xlu0 0
        %1269 = vperm.xlu0 %1268, %v1132
        %v1270 = vpop.permute.xlu0 %1269
        %1271 = vset.pattern.permute.xlu0 0
        %1272 = vperm.xlu0 %1271, %v1133
        %v1273 = vpop.permute.xlu0 %1272
        %1274 = vset.pattern.permute.xlu0 0
        %1275 = vperm.xlu0 %1274, %v1134
        %v1276 = vpop.permute.xlu0 %1275
        %1277 = vset.pattern.permute.xlu0 0
        %1278 = vperm.xlu0 %1277, %v1135
        %v1279 = vpop.permute.xlu0 %1278
        %1280 = vset.pattern.permute.xlu0 0
        %1281 = vperm.xlu0 %1280, %v1136
        %v1282 = vpop.permute.xlu0 %1281
        %1283 = vset.pattern.permute.xlu0 0
        %1284 = vperm.xlu0 %1283, %v1137
        %v1285 = vpop.permute.xlu0 %1284
        %1286 = vset.pattern.permute.xlu0 0
        %1287 = vperm.xlu0 %1286, %v1138
        %v1288 = vpop.permute.xlu0 %1287
        %1289 = vset.pattern.permute.xlu0 0
        %1290 = vperm.xlu0 %1289, %v1139
        %v1291 = vpop.permute.xlu0 %1290
        %1292 = vset.pattern.permute.xlu0 0
        %1293 = vperm.xlu0 %1292, %v1140
        %v1294 = vpop.permute.xlu0 %1293
        %1295 = vset.pattern.permute.xlu0 0
        %1296 = vperm.xlu0 %1295, %v1141
        %v1297 = vpop.permute.xlu0 %1296
        %1298 = vset.pattern.permute.xlu0 0
        %1299 = vperm.xlu0 %1298, %v1142
        %v1300 = vpop.permute.xlu0 %1299
        %1301 = vset.pattern.permute.xlu0 0
        %1302 = vperm.xlu0 %1301, %v1143
        %v1303 = vpop.permute.xlu0 %1302
        %1304 = vset.pattern.permute.xlu0 0
        %1305 = vperm.xlu0 %1304, %v1144
        %v1306 = vpop.permute.xlu0 %1305
        %1307 = vset.pattern.permute.xlu0 0
        %1308 = vperm.xlu0 %1307, %v1145
        %v1309 = vpop.permute.xlu0 %1308
        %1310 = vset.pattern.permute.xlu0 0
        %1311 = vperm.xlu0 %1310, %v1146
        %v1312 = vpop.permute.xlu0 %1311
        %1313 = vset.pattern.permute.xlu0 0
        %1314 = vperm.xlu0 %1313, %v1147
        %v1315 = vpop.permute.xlu0 %1314
        %1316 = vset.pattern.permute.xlu0 0
        %1317 = vperm.xlu0 %1316, %v1148
        %v1318 = vpop.permute.xlu0 %1317
        %1319 = vset.pattern.permute.xlu0 0
        %1320 = vperm.xlu0 %1319, %v1149
        %v1321 = vpop.permute.xlu0 %1320
        %1322 = vset.pattern.permute.xlu0 0
        %1323 = vperm.xlu0 %1322, %v1150
        %v1324 = vpop.permute.xlu0 %1323
        %1325 = vset.pattern.permute.xlu0 0
        %1326 = vperm.xlu0 %1325, %v1151
        %v1327 = vpop.permute.xlu0 %1326
        %1328 = vset.pattern.permute.xlu0 0
        %1329 = vperm.xlu0 %1328, %v1152
        %v1330 = vpop.permute.xlu0 %1329
        %1331 = vset.pattern.permute.xlu0 0
        %1332 = vperm.xlu0 %1331, %v1153
        %v1333 = vpop.permute.xlu0 %1332
        %1334 = vset.pattern.permute.xlu0 0
        %1335 = vperm.xlu0 %1334, %v1154
        %v1336 = vpop.permute.xlu0 %1335
        %1337 = vset.pattern.permute.xlu0 0
        %1338 = vperm.xlu0 %1337, %v1155
        %v1339 = vpop.permute.xlu0 %1338
        %1340 = vset.pattern.permute.xlu0 0
        %1341 = vperm.xlu0 %1340, %v1156
        %v1342 = vpop.permute.xlu0 %1341
        %1343 = vset.pattern.permute.xlu0 0
        %1344 = vperm.xlu0 %1343, %v1157
        %v1345 = vpop.permute.xlu0 %1344
        %1346 = vset.pattern.permute.xlu0 0
        %1347 = vperm.xlu0 %1346, %v1158
        %v1348 = vpop.permute.xlu0 %1347
        %1349 = vset.pattern.permute.xlu0 0
        %1350 = vperm.xlu0 %1349, %v1159
        %v1351 = vpop.permute.xlu0 %1350
        %vm1352 = vcmp.eq.s32.totalorder %v1162, 1
        %vm1353 = vcmp.eq.s32.totalorder %v1165, 1
        %vm1354 = vcmp.eq.s32.totalorder %v1168, 1
        %vm1355 = vcmp.eq.s32.totalorder %v1171, 1
        %vm1356 = vcmp.eq.s32.totalorder %v1174, 1
        %vm1357 = vcmp.eq.s32.totalorder %v1177, 1
        %vm1358 = vcmp.eq.s32.totalorder %v1180, 1
        %vm1359 = vcmp.eq.s32.totalorder %v1183, 1
        %vm1360 = vcmp.eq.s32.totalorder %v1186, 1
        %vm1361 = vcmp.eq.s32.totalorder %v1189, 1
        %vm1362 = vcmp.eq.s32.totalorder %v1192, 1
        %vm1363 = vcmp.eq.s32.totalorder %v1195, 1
        %vm1364 = vcmp.eq.s32.totalorder %v1198, 1
        %vm1365 = vcmp.eq.s32.totalorder %v1201, 1
        %vm1366 = vcmp.eq.s32.totalorder %v1204, 1
        %vm1367 = vcmp.eq.s32.totalorder %v1207, 1
        %vm1368 = vcmp.eq.s32.totalorder %v1210, 1
        %vm1369 = vcmp.eq.s32.totalorder %v1213, 1
        %vm1370 = vcmp.eq.s32.totalorder %v1216, 1
        %vm1371 = vcmp.eq.s32.totalorder %v1219, 1
        %vm1372 = vcmp.eq.s32.totalorder %v1222, 1
        %vm1373 = vcmp.eq.s32.totalorder %v1225, 1
        %vm1374 = vcmp.eq.s32.totalorder %v1228, 1
        %vm1375 = vcmp.eq.s32.totalorder %v1231, 1
        %vm1376 = vcmp.eq.s32.totalorder %v1234, 1
        %vm1377 = vcmp.eq.s32.totalorder %v1237, 1
        %vm1378 = vcmp.eq.s32.totalorder %v1240, 1
        %vm1379 = vcmp.eq.s32.totalorder %v1243, 1
        %vm1380 = vcmp.eq.s32.totalorder %v1246, 1
        %vm1381 = vcmp.eq.s32.totalorder %v1249, 1
        %vm1382 = vcmp.eq.s32.totalorder %v1252, 1
        %vm1383 = vcmp.eq.s32.totalorder %v1255, 1
        %vm1384 = vcmp.eq.s32.totalorder %v1258, 1
        %vm1385 = vcmp.eq.s32.totalorder %v1261, 1
        %vm1386 = vcmp.eq.s32.totalorder %v1264, 1
        %vm1387 = vcmp.eq.s32.totalorder %v1267, 1
        %vm1388 = vcmp.eq.s32.totalorder %v1270, 1
        %vm1389 = vcmp.eq.s32.totalorder %v1273, 1
        %vm1390 = vcmp.eq.s32.totalorder %v1276, 1
        %vm1391 = vcmp.eq.s32.totalorder %v1279, 1
        %vm1392 = vcmp.eq.s32.totalorder %v1282, 1
        %vm1393 = vcmp.eq.s32.totalorder %v1285, 1
        %vm1394 = vcmp.eq.s32.totalorder %v1288, 1
        %vm1395 = vcmp.eq.s32.totalorder %v1291, 1
        %vm1396 = vcmp.eq.s32.totalorder %v1294, 1
        %vm1397 = vcmp.eq.s32.totalorder %v1297, 1
        %vm1398 = vcmp.eq.s32.totalorder %v1300, 1
        %vm1399 = vcmp.eq.s32.totalorder %v1303, 1
        %vm1400 = vcmp.eq.s32.totalorder %v1306, 1
        %vm1401 = vcmp.eq.s32.totalorder %v1309, 1
        %vm1402 = vcmp.eq.s32.totalorder %v1312, 1
        %vm1403 = vcmp.eq.s32.totalorder %v1315, 1
        %vm1404 = vcmp.eq.s32.totalorder %v1318, 1
        %vm1405 = vcmp.eq.s32.totalorder %v1321, 1
        %vm1406 = vcmp.eq.s32.totalorder %v1324, 1
        %vm1407 = vcmp.eq.s32.totalorder %v1327, 1
        %vm1408 = vcmp.eq.s32.totalorder %v1330, 1
        %vm1409 = vcmp.eq.s32.totalorder %v1333, 1
        %vm1410 = vcmp.eq.s32.totalorder %v1336, 1
        %vm1411 = vcmp.eq.s32.totalorder %v1339, 1
        %vm1412 = vcmp.eq.s32.totalorder %v1342, 1
        %vm1413 = vcmp.eq.s32.totalorder %v1345, 1
        %vm1414 = vcmp.eq.s32.totalorder %v1348, 1
        %vm1415 = vcmp.eq.s32.totalorder %v1351, 1
        %v1416 = vsel %vm1352, %v281, -inf
        %v1417 = vsel %vm1353, %v282, -inf
        %v1418 = vsel %vm1354, %v283, -inf
        %v1419 = vsel %vm1355, %v284, -inf
        %v1420 = vsel %vm1356, %v285, -inf
        %v1421 = vsel %vm1357, %v286, -inf
        %v1422 = vsel %vm1358, %v287, -inf
        %v1423 = vsel %vm1359, %v288, -inf
        %v1424 = vsel %vm1360, %v289, -inf
        %v1425 = vsel %vm1361, %v290, -inf
        %v1426 = vsel %vm1362, %v291, -inf
        %v1427 = vsel %vm1363, %v292, -inf
        %v1428 = vsel %vm1364, %v293, -inf
        %v1429 = vsel %vm1365, %v294, -inf
        %v1430 = vsel %vm1366, %v295, -inf
        %v1431 = vsel %vm1367, %v296, -inf
        %v1432 = vsel %vm1368, %v297, -inf
        %v1433 = vsel %vm1369, %v298, -inf
        %v1434 = vsel %vm1370, %v299, -inf
        %v1435 = vsel %vm1371, %v300, -inf
        %v1436 = vsel %vm1372, %v301, -inf
        %v1437 = vsel %vm1373, %v302, -inf
        %v1438 = vsel %vm1374, %v303, -inf
        %v1439 = vsel %vm1375, %v304, -inf
        %v1440 = vsel %vm1376, %v305, -inf
        %v1441 = vsel %vm1377, %v306, -inf
        %v1442 = vsel %vm1378, %v307, -inf
        %v1443 = vsel %vm1379, %v308, -inf
        %v1444 = vsel %vm1380, %v309, -inf
        %v1445 = vsel %vm1381, %v310, -inf
        %v1446 = vsel %vm1382, %v311, -inf
        %v1447 = vsel %vm1383, %v312, -inf
        %v1448 = vsel %vm1384, %v313, -inf
        %v1449 = vsel %vm1385, %v314, -inf
        %v1450 = vsel %vm1386, %v315, -inf
        %v1451 = vsel %vm1387, %v316, -inf
        %v1452 = vsel %vm1388, %v317, -inf
        %v1453 = vsel %vm1389, %v318, -inf
        %v1454 = vsel %vm1390, %v319, -inf
        %v1455 = vsel %vm1391, %v320, -inf
        %v1456 = vsel %vm1392, %v321, -inf
        %v1457 = vsel %vm1393, %v322, -inf
        %v1458 = vsel %vm1394, %v323, -inf
        %v1459 = vsel %vm1395, %v324, -inf
        %v1460 = vsel %vm1396, %v325, -inf
        %v1461 = vsel %vm1397, %v326, -inf
        %v1462 = vsel %vm1398, %v327, -inf
        %v1463 = vsel %vm1399, %v328, -inf
        %v1464 = vsel %vm1400, %v329, -inf
        %v1465 = vsel %vm1401, %v330, -inf
        %v1466 = vsel %vm1402, %v331, -inf
        %v1467 = vsel %vm1403, %v332, -inf
        %v1468 = vsel %vm1404, %v333, -inf
        %v1469 = vsel %vm1405, %v334, -inf
        %v1470 = vsel %vm1406, %v335, -inf
        %v1471 = vsel %vm1407, %v336, -inf
        %v1472 = vsel %vm1408, %v337, -inf
        %v1473 = vsel %vm1409, %v338, -inf
        %v1474 = vsel %vm1410, %v339, -inf
        %v1475 = vsel %vm1411, %v340, -inf
        %v1476 = vsel %vm1412, %v341, -inf
        %v1477 = vsel %vm1413, %v342, -inf
        %v1478 = vsel %vm1414, %v343, -inf
        %v1479 = vsel %vm1415, %v344, -inf
        %vm1480 = vcmask 261120
        %v1481 = vsel %vm1480, %v1416, -inf
        %v1482 = vsel %vm1480, %v1417, -inf
        %v1483 = vsel %vm1480, %v1418, -inf
        %v1484 = vsel %vm1480, %v1419, -inf
        %v1485 = vsel %vm1480, %v1420, -inf
        %v1486 = vmax.f32 %v1481, %v1485
        %v1487 = vsel %vm1480, %v1421, -inf
        %v1488 = vmax.f32 %v1482, %v1487
        %v1489 = vsel %vm1480, %v1422, -inf
        %v1490 = vmax.f32 %v1483, %v1489
        %v1491 = vsel %vm1480, %v1423, -inf
        %v1492 = vmax.f32 %v1484, %v1491
        %v1493 = vsel %vm1480, %v1424, -inf
        %v1494 = vmax.f32 %v1486, %v1493
        %v1495 = vsel %vm1480, %v1425, -inf
        %v1496 = vmax.f32 %v1488, %v1495
        %v1497 = vsel %vm1480, %v1426, -inf
        %v1498 = vmax.f32 %v1490, %v1497
        %v1499 = vsel %vm1480, %v1427, -inf
        %v1500 = vmax.f32 %v1492, %v1499
        %v1501 = vsel %vm1480, %v1428, -inf
        %v1502 = vmax.f32 %v1494, %v1501
        %v1503 = vsel %vm1480, %v1429, -inf
        %v1504 = vmax.f32 %v1496, %v1503
        %v1505 = vsel %vm1480, %v1430, -inf
        %v1506 = vmax.f32 %v1498, %v1505
        %v1507 = vsel %vm1480, %v1431, -inf
        %v1508 = vmax.f32 %v1500, %v1507
        %v1509 = vsel %vm1480, %v1432, -inf
        %v1510 = vmax.f32 %v1502, %v1509
        %v1511 = vsel %vm1480, %v1433, -inf
        %v1512 = vmax.f32 %v1504, %v1511
        %v1513 = vsel %vm1480, %v1434, -inf
        %v1514 = vmax.f32 %v1506, %v1513
        %v1515 = vsel %vm1480, %v1435, -inf
        %v1516 = vmax.f32 %v1508, %v1515
        %v1517 = vsel %vm1480, %v1436, -inf
        %v1518 = vmax.f32 %v1510, %v1517
        %v1519 = vsel %vm1480, %v1437, -inf
        %v1520 = vmax.f32 %v1512, %v1519
        %v1521 = vsel %vm1480, %v1438, -inf
        %v1522 = vmax.f32 %v1514, %v1521
        %v1523 = vsel %vm1480, %v1439, -inf
        %v1524 = vmax.f32 %v1516, %v1523
        %v1525 = vsel %vm1480, %v1440, -inf
        %v1526 = vmax.f32 %v1518, %v1525
        %v1527 = vsel %vm1480, %v1441, -inf
        %v1528 = vmax.f32 %v1520, %v1527
        %v1529 = vsel %vm1480, %v1442, -inf
        %v1530 = vmax.f32 %v1522, %v1529
        %v1531 = vsel %vm1480, %v1443, -inf
        %v1532 = vmax.f32 %v1524, %v1531
        %v1533 = vsel %vm1480, %v1444, -inf
        %v1534 = vmax.f32 %v1526, %v1533
        %v1535 = vsel %vm1480, %v1445, -inf
        %v1536 = vmax.f32 %v1528, %v1535
        %v1537 = vsel %vm1480, %v1446, -inf
        %v1538 = vmax.f32 %v1530, %v1537
        %v1539 = vsel %vm1480, %v1447, -inf
        %v1540 = vmax.f32 %v1532, %v1539
        %v1541 = vsel %vm1480, %v1448, -inf
        %v1542 = vmax.f32 %v1534, %v1541
        %v1543 = vsel %vm1480, %v1449, -inf
        %v1544 = vmax.f32 %v1536, %v1543
        %v1545 = vsel %vm1480, %v1450, -inf
        %v1546 = vmax.f32 %v1538, %v1545
        %v1547 = vsel %vm1480, %v1451, -inf
        %v1548 = vmax.f32 %v1540, %v1547
        %v1549 = vsel %vm1480, %v1452, -inf
        %v1550 = vmax.f32 %v1542, %v1549
        %v1551 = vsel %vm1480, %v1453, -inf
        %v1552 = vmax.f32 %v1544, %v1551
        %v1553 = vsel %vm1480, %v1454, -inf
        %v1554 = vmax.f32 %v1546, %v1553
        %v1555 = vsel %vm1480, %v1455, -inf
        %v1556 = vmax.f32 %v1548, %v1555
        %v1557 = vsel %vm1480, %v1456, -inf
        %v1558 = vmax.f32 %v1550, %v1557
        %v1559 = vsel %vm1480, %v1457, -inf
        %v1560 = vmax.f32 %v1552, %v1559
        %v1561 = vsel %vm1480, %v1458, -inf
        %v1562 = vmax.f32 %v1554, %v1561
        %v1563 = vsel %vm1480, %v1459, -inf
        %v1564 = vmax.f32 %v1556, %v1563
        %v1565 = vsel %vm1480, %v1460, -inf
        %v1566 = vmax.f32 %v1558, %v1565
        %v1567 = vsel %vm1480, %v1461, -inf
        %v1568 = vmax.f32 %v1560, %v1567
        %v1569 = vsel %vm1480, %v1462, -inf
        %v1570 = vmax.f32 %v1562, %v1569
        %v1571 = vsel %vm1480, %v1463, -inf
        %v1572 = vmax.f32 %v1564, %v1571
        %v1573 = vsel %vm1480, %v1464, -inf
        %v1574 = vmax.f32 %v1566, %v1573
        %v1575 = vsel %vm1480, %v1465, -inf
        %v1576 = vmax.f32 %v1568, %v1575
        %v1577 = vsel %vm1480, %v1466, -inf
        %v1578 = vmax.f32 %v1570, %v1577
        %v1579 = vsel %vm1480, %v1467, -inf
        %v1580 = vmax.f32 %v1572, %v1579
        %v1581 = vsel %vm1480, %v1468, -inf
        %v1582 = vmax.f32 %v1574, %v1581
        %v1583 = vsel %vm1480, %v1469, -inf
        %v1584 = vmax.f32 %v1576, %v1583
        %v1585 = vsel %vm1480, %v1470, -inf
        %v1586 = vmax.f32 %v1578, %v1585
        %v1587 = vsel %vm1480, %v1471, -inf
        %v1588 = vmax.f32 %v1580, %v1587
        %v1589 = vsel %vm1480, %v1472, -inf
        %v1590 = vmax.f32 %v1582, %v1589
        %v1591 = vsel %vm1480, %v1473, -inf
        %v1592 = vmax.f32 %v1584, %v1591
        %v1593 = vsel %vm1480, %v1474, -inf
        %v1594 = vmax.f32 %v1586, %v1593
        %v1595 = vsel %vm1480, %v1475, -inf
        %v1596 = vmax.f32 %v1588, %v1595
        %v1597 = vsel %vm1480, %v1476, -inf
        %v1598 = vmax.f32 %v1590, %v1597
        %v1599 = vsel %vm1480, %v1477, -inf
        %v1600 = vmax.f32 %v1592, %v1599
        %v1601 = vsel %vm1480, %v1478, -inf
        %v1602 = vmax.f32 %v1594, %v1601
        %v1603 = vsel %vm1480, %v1479, -inf
        %v1604 = vmax.f32 %v1596, %v1603
        %v1605 = vmax.f32 %v1598, %v1600
        %v1606 = vmax.f32 %v1602, %v1604
        %v1607 = vmax.f32 %v1605, %v1606
        %v1608 = vrot.slane %v1607, 4
        %v1609 = vmax.f32 %v1607, %v1608
        %v1610 = vrot.slane %v1609, 2
        %v1611 = vmax.f32 %v1609, %v1610
        %v1612 = vrot.slane %v1611, 1
        %v1613 = vmax.f32 %v1611, %v1612
        %v1614 = vld [vmem:[#allocation3] sm:$0x1]
        %v1615 = vmax.f32 %v1614, %v1613
        %vm1616 = vcmask 253952
        %1617 = vst.msk [vmem:[#allocation3] sm:$0x1] %vm1616, %v1615
        %vm1618 = vcmp.eq.s32.totalorder %v346, 1
        %vm1619 = vcmp.eq.s32.totalorder %v347, 1
        %vm1620 = vcmp.eq.s32.totalorder %v348, 1
        %vm1621 = vcmp.eq.s32.totalorder %v349, 1
        %vm1622 = vcmp.eq.s32.totalorder %v350, 1
        %vm1623 = vcmp.eq.s32.totalorder %v351, 1
        %vm1624 = vcmp.eq.s32.totalorder %v352, 1
        %vm1625 = vcmp.eq.s32.totalorder %v353, 1
        %vm1626 = vcmp.eq.s32.totalorder %v354, 1
        %vm1627 = vcmp.eq.s32.totalorder %v355, 1
        %vm1628 = vcmp.eq.s32.totalorder %v356, 1
        %vm1629 = vcmp.eq.s32.totalorder %v357, 1
        %vm1630 = vcmp.eq.s32.totalorder %v358, 1
        %vm1631 = vcmp.eq.s32.totalorder %v359, 1
        %vm1632 = vcmp.eq.s32.totalorder %v360, 1
        %vm1633 = vcmp.eq.s32.totalorder %v361, 1
        %vm1634 = vcmp.eq.s32.totalorder %v362, 1
        %vm1635 = vcmp.eq.s32.totalorder %v363, 1
        %vm1636 = vcmp.eq.s32.totalorder %v364, 1
        %vm1637 = vcmp.eq.s32.totalorder %v365, 1
        %vm1638 = vcmp.eq.s32.totalorder %v366, 1
        %vm1639 = vcmp.eq.s32.totalorder %v367, 1
        %vm1640 = vcmp.eq.s32.totalorder %v368, 1
        %vm1641 = vcmp.eq.s32.totalorder %v369, 1
        %vm1642 = vcmp.eq.s32.totalorder %v370, 1
        %vm1643 = vcmp.eq.s32.totalorder %v371, 1
        %vm1644 = vcmp.eq.s32.totalorder %v372, 1
        %vm1645 = vcmp.eq.s32.totalorder %v373, 1
        %vm1646 = vcmp.eq.s32.totalorder %v374, 1
        %vm1647 = vcmp.eq.s32.totalorder %v375, 1
        %vm1648 = vcmp.eq.s32.totalorder %v376, 1
        %vm1649 = vcmp.eq.s32.totalorder %v377, 1
        %vm1650 = vcmp.eq.s32.totalorder %v378, 1
        %vm1651 = vcmp.eq.s32.totalorder %v379, 1
        %vm1652 = vcmp.eq.s32.totalorder %v380, 1
        %vm1653 = vcmp.eq.s32.totalorder %v381, 1
        %vm1654 = vcmp.eq.s32.totalorder %v382, 1
        %vm1655 = vcmp.eq.s32.totalorder %v383, 1
        %vm1656 = vcmp.eq.s32.totalorder %v384, 1
        %vm1657 = vcmp.eq.s32.totalorder %v385, 1
        %vm1658 = vcmp.eq.s32.totalorder %v386, 1
        %vm1659 = vcmp.eq.s32.totalorder %v387, 1
        %vm1660 = vcmp.eq.s32.totalorder %v388, 1
        %vm1661 = vcmp.eq.s32.totalorder %v389, 1
        %vm1662 = vcmp.eq.s32.totalorder %v390, 1
        %vm1663 = vcmp.eq.s32.totalorder %v391, 1
        %vm1664 = vcmp.eq.s32.totalorder %v392, 1
        %vm1665 = vcmp.eq.s32.totalorder %v393, 1
        %vm1666 = vcmp.eq.s32.totalorder %v394, 1
        %vm1667 = vcmp.eq.s32.totalorder %v395, 1
        %vm1668 = vcmp.eq.s32.totalorder %v396, 1
        %vm1669 = vcmp.eq.s32.totalorder %v397, 1
        %vm1670 = vcmp.eq.s32.totalorder %v398, 1
        %vm1671 = vcmp.eq.s32.totalorder %v399, 1
        %vm1672 = vcmp.eq.s32.totalorder %v400, 1
        %vm1673 = vcmp.eq.s32.totalorder %v401, 1
        %vm1674 = vcmp.eq.s32.totalorder %v402, 1
        %vm1675 = vcmp.eq.s32.totalorder %v403, 1
        %vm1676 = vcmp.eq.s32.totalorder %v404, 1
        %vm1677 = vcmp.eq.s32.totalorder %v405, 1
        %vm1678 = vcmp.eq.s32.totalorder %v406, 1
        %vm1679 = vcmp.eq.s32.totalorder %v407, 1
        %vm1680 = vcmp.eq.s32.totalorder %v408, 1
        %vm1681 = vcmp.eq.s32.totalorder %v409, 1
        %v1682 = vsel %vm1618, 1, 0
        %v1683 = vsel %vm1619, 1, 0
        %v1684 = vsel %vm1620, 1, 0
        %v1685 = vsel %vm1621, 1, 0
        %v1686 = vsel %vm1622, 1, 0
        %v1687 = vsel %vm1623, 1, 0
        %v1688 = vsel %vm1624, 1, 0
        %v1689 = vsel %vm1625, 1, 0
        %v1690 = vsel %vm1626, 1, 0
        %v1691 = vsel %vm1627, 1, 0
        %v1692 = vsel %vm1628, 1, 0
        %v1693 = vsel %vm1629, 1, 0
        %v1694 = vsel %vm1630, 1, 0
        %v1695 = vsel %vm1631, 1, 0
        %v1696 = vsel %vm1632, 1, 0
        %v1697 = vsel %vm1633, 1, 0
        %v1698 = vsel %vm1634, 1, 0
        %v1699 = vsel %vm1635, 1, 0
        %v1700 = vsel %vm1636, 1, 0
        %v1701 = vsel %vm1637, 1, 0
        %v1702 = vsel %vm1638, 1, 0
        %v1703 = vsel %vm1639, 1, 0
        %v1704 = vsel %vm1640, 1, 0
        %v1705 = vsel %vm1641, 1, 0
        %v1706 = vsel %vm1642, 1, 0
        %v1707 = vsel %vm1643, 1, 0
        %v1708 = vsel %vm1644, 1, 0
        %v1709 = vsel %vm1645, 1, 0
        %v1710 = vsel %vm1646, 1, 0
        %v1711 = vsel %vm1647, 1, 0
        %v1712 = vsel %vm1648, 1, 0
        %v1713 = vsel %vm1649, 1, 0
        %v1714 = vsel %vm1650, 1, 0
        %v1715 = vsel %vm1651, 1, 0
        %v1716 = vsel %vm1652, 1, 0
        %v1717 = vsel %vm1653, 1, 0
        %v1718 = vsel %vm1654, 1, 0
        %v1719 = vsel %vm1655, 1, 0
        %v1720 = vsel %vm1656, 1, 0
        %v1721 = vsel %vm1657, 1, 0
        %v1722 = vsel %vm1658, 1, 0
        %v1723 = vsel %vm1659, 1, 0
        %v1724 = vsel %vm1660, 1, 0
        %v1725 = vsel %vm1661, 1, 0
        %v1726 = vsel %vm1662, 1, 0
        %v1727 = vsel %vm1663, 1, 0
        %v1728 = vsel %vm1664, 1, 0
        %v1729 = vsel %vm1665, 1, 0
        %v1730 = vsel %vm1666, 1, 0
        %v1731 = vsel %vm1667, 1, 0
        %v1732 = vsel %vm1668, 1, 0
        %v1733 = vsel %vm1669, 1, 0
        %v1734 = vsel %vm1670, 1, 0
        %v1735 = vsel %vm1671, 1, 0
        %v1736 = vsel %vm1672, 1, 0
        %v1737 = vsel %vm1673, 1, 0
        %v1738 = vsel %vm1674, 1, 0
        %v1739 = vsel %vm1675, 1, 0
        %v1740 = vsel %vm1676, 1, 0
        %v1741 = vsel %vm1677, 1, 0
        %v1742 = vsel %vm1678, 1, 0
        %v1743 = vsel %vm1679, 1, 0
        %v1744 = vsel %vm1680, 1, 0
        %v1745 = vsel %vm1681, 1, 0
        %1746 = vset.pattern.permute.xlu0 0
        %1747 = vperm.xlu0 %1746, %v1682
        %v1748 = vpop.permute.xlu0 %1747
        %1749 = vset.pattern.permute.xlu0 0
        %1750 = vperm.xlu0 %1749, %v1683
        %v1751 = vpop.permute.xlu0 %1750
        %1752 = vset.pattern.permute.xlu0 0
        %1753 = vperm.xlu0 %1752, %v1684
        %v1754 = vpop.permute.xlu0 %1753
        %1755 = vset.pattern.permute.xlu0 0
        %1756 = vperm.xlu0 %1755, %v1685
        %v1757 = vpop.permute.xlu0 %1756
        %1758 = vset.pattern.permute.xlu0 0
        %1759 = vperm.xlu0 %1758, %v1686
        %v1760 = vpop.permute.xlu0 %1759
        %1761 = vset.pattern.permute.xlu0 0
        %1762 = vperm.xlu0 %1761, %v1687
        %v1763 = vpop.permute.xlu0 %1762
        %1764 = vset.pattern.permute.xlu0 0
        %1765 = vperm.xlu0 %1764, %v1688
        %v1766 = vpop.permute.xlu0 %1765
        %1767 = vset.pattern.permute.xlu0 0
        %1768 = vperm.xlu0 %1767, %v1689
        %v1769 = vpop.permute.xlu0 %1768
        %1770 = vset.pattern.permute.xlu0 0
        %1771 = vperm.xlu0 %1770, %v1690
        %v1772 = vpop.permute.xlu0 %1771
        %1773 = vset.pattern.permute.xlu0 0
        %1774 = vperm.xlu0 %1773, %v1691
        %v1775 = vpop.permute.xlu0 %1774
        %1776 = vset.pattern.permute.xlu0 0
        %1777 = vperm.xlu0 %1776, %v1692
        %v1778 = vpop.permute.xlu0 %1777
        %1779 = vset.pattern.permute.xlu0 0
        %1780 = vperm.xlu0 %1779, %v1693
        %v1781 = vpop.permute.xlu0 %1780
        %1782 = vset.pattern.permute.xlu0 0
        %1783 = vperm.xlu0 %1782, %v1694
        %v1784 = vpop.permute.xlu0 %1783
        %1785 = vset.pattern.permute.xlu0 0
        %1786 = vperm.xlu0 %1785, %v1695
        %v1787 = vpop.permute.xlu0 %1786
        %1788 = vset.pattern.permute.xlu0 0
        %1789 = vperm.xlu0 %1788, %v1696
        %v1790 = vpop.permute.xlu0 %1789
        %1791 = vset.pattern.permute.xlu0 0
        %1792 = vperm.xlu0 %1791, %v1697
        %v1793 = vpop.permute.xlu0 %1792
        %1794 = vset.pattern.permute.xlu0 0
        %1795 = vperm.xlu0 %1794, %v1698
        %v1796 = vpop.permute.xlu0 %1795
        %1797 = vset.pattern.permute.xlu0 0
        %1798 = vperm.xlu0 %1797, %v1699
        %v1799 = vpop.permute.xlu0 %1798
        %1800 = vset.pattern.permute.xlu0 0
        %1801 = vperm.xlu0 %1800, %v1700
        %v1802 = vpop.permute.xlu0 %1801
        %1803 = vset.pattern.permute.xlu0 0
        %1804 = vperm.xlu0 %1803, %v1701
        %v1805 = vpop.permute.xlu0 %1804
        %1806 = vset.pattern.permute.xlu0 0
        %1807 = vperm.xlu0 %1806, %v1702
        %v1808 = vpop.permute.xlu0 %1807
        %1809 = vset.pattern.permute.xlu0 0
        %1810 = vperm.xlu0 %1809, %v1703
        %v1811 = vpop.permute.xlu0 %1810
        %1812 = vset.pattern.permute.xlu0 0
        %1813 = vperm.xlu0 %1812, %v1704
        %v1814 = vpop.permute.xlu0 %1813
        %1815 = vset.pattern.permute.xlu0 0
        %1816 = vperm.xlu0 %1815, %v1705
        %v1817 = vpop.permute.xlu0 %1816
        %1818 = vset.pattern.permute.xlu0 0
        %1819 = vperm.xlu0 %1818, %v1706
        %v1820 = vpop.permute.xlu0 %1819
        %1821 = vset.pattern.permute.xlu0 0
        %1822 = vperm.xlu0 %1821, %v1707
        %v1823 = vpop.permute.xlu0 %1822
        %1824 = vset.pattern.permute.xlu0 0
        %1825 = vperm.xlu0 %1824, %v1708
        %v1826 = vpop.permute.xlu0 %1825
        %1827 = vset.pattern.permute.xlu0 0
        %1828 = vperm.xlu0 %1827, %v1709
        %v1829 = vpop.permute.xlu0 %1828
        %1830 = vset.pattern.permute.xlu0 0
        %1831 = vperm.xlu0 %1830, %v1710
        %v1832 = vpop.permute.xlu0 %1831
        %1833 = vset.pattern.permute.xlu0 0
        %1834 = vperm.xlu0 %1833, %v1711
        %v1835 = vpop.permute.xlu0 %1834
        %1836 = vset.pattern.permute.xlu0 0
        %1837 = vperm.xlu0 %1836, %v1712
        %v1838 = vpop.permute.xlu0 %1837
        %1839 = vset.pattern.permute.xlu0 0
        %1840 = vperm.xlu0 %1839, %v1713
        %v1841 = vpop.permute.xlu0 %1840
        %1842 = vset.pattern.permute.xlu0 0
        %1843 = vperm.xlu0 %1842, %v1714
        %v1844 = vpop.permute.xlu0 %1843
        %1845 = vset.pattern.permute.xlu0 0
        %1846 = vperm.xlu0 %1845, %v1715
        %v1847 = vpop.permute.xlu0 %1846
        %1848 = vset.pattern.permute.xlu0 0
        %1849 = vperm.xlu0 %1848, %v1716
        %v1850 = vpop.permute.xlu0 %1849
        %1851 = vset.pattern.permute.xlu0 0
        %1852 = vperm.xlu0 %1851, %v1717
        %v1853 = vpop.permute.xlu0 %1852
        %1854 = vset.pattern.permute.xlu0 0
        %1855 = vperm.xlu0 %1854, %v1718
        %v1856 = vpop.permute.xlu0 %1855
        %1857 = vset.pattern.permute.xlu0 0
        %1858 = vperm.xlu0 %1857, %v1719
        %v1859 = vpop.permute.xlu0 %1858
        %1860 = vset.pattern.permute.xlu0 0
        %1861 = vperm.xlu0 %1860, %v1720
        %v1862 = vpop.permute.xlu0 %1861
        %1863 = vset.pattern.permute.xlu0 0
        %1864 = vperm.xlu0 %1863, %v1721
        %v1865 = vpop.permute.xlu0 %1864
        %1866 = vset.pattern.permute.xlu0 0
        %1867 = vperm.xlu0 %1866, %v1722
        %v1868 = vpop.permute.xlu0 %1867
        %1869 = vset.pattern.permute.xlu0 0
        %1870 = vperm.xlu0 %1869, %v1723
        %v1871 = vpop.permute.xlu0 %1870
        %1872 = vset.pattern.permute.xlu0 0
        %1873 = vperm.xlu0 %1872, %v1724
        %v1874 = vpop.permute.xlu0 %1873
        %1875 = vset.pattern.permute.xlu0 0
        %1876 = vperm.xlu0 %1875, %v1725
        %v1877 = vpop.permute.xlu0 %1876
        %1878 = vset.pattern.permute.xlu0 0
        %1879 = vperm.xlu0 %1878, %v1726
        %v1880 = vpop.permute.xlu0 %1879
        %1881 = vset.pattern.permute.xlu0 0
        %1882 = vperm.xlu0 %1881, %v1727
        %v1883 = vpop.permute.xlu0 %1882
        %1884 = vset.pattern.permute.xlu0 0
        %1885 = vperm.xlu0 %1884, %v1728
        %v1886 = vpop.permute.xlu0 %1885
        %1887 = vset.pattern.permute.xlu0 0
        %1888 = vperm.xlu0 %1887, %v1729
        %v1889 = vpop.permute.xlu0 %1888
        %1890 = vset.pattern.permute.xlu0 0
        %1891 = vperm.xlu0 %1890, %v1730
        %v1892 = vpop.permute.xlu0 %1891
        %1893 = vset.pattern.permute.xlu0 0
        %1894 = vperm.xlu0 %1893, %v1731
        %v1895 = vpop.permute.xlu0 %1894
        %1896 = vset.pattern.permute.xlu0 0
        %1897 = vperm.xlu0 %1896, %v1732
        %v1898 = vpop.permute.xlu0 %1897
        %1899 = vset.pattern.permute.xlu0 0
        %1900 = vperm.xlu0 %1899, %v1733
        %v1901 = vpop.permute.xlu0 %1900
        %1902 = vset.pattern.permute.xlu0 0
        %1903 = vperm.xlu0 %1902, %v1734
        %v1904 = vpop.permute.xlu0 %1903
        %1905 = vset.pattern.permute.xlu0 0
        %1906 = vperm.xlu0 %1905, %v1735
        %v1907 = vpop.permute.xlu0 %1906
        %1908 = vset.pattern.permute.xlu0 0
        %1909 = vperm.xlu0 %1908, %v1736
        %v1910 = vpop.permute.xlu0 %1909
        %1911 = vset.pattern.permute.xlu0 0
        %1912 = vperm.xlu0 %1911, %v1737
        %v1913 = vpop.permute.xlu0 %1912
        %1914 = vset.pattern.permute.xlu0 0
        %1915 = vperm.xlu0 %1914, %v1738
        %v1916 = vpop.permute.xlu0 %1915
        %1917 = vset.pattern.permute.xlu0 0
        %1918 = vperm.xlu0 %1917, %v1739
        %v1919 = vpop.permute.xlu0 %1918
        %1920 = vset.pattern.permute.xlu0 0
        %1921 = vperm.xlu0 %1920, %v1740
        %v1922 = vpop.permute.xlu0 %1921
        %1923 = vset.pattern.permute.xlu0 0
        %1924 = vperm.xlu0 %1923, %v1741
        %v1925 = vpop.permute.xlu0 %1924
        %1926 = vset.pattern.permute.xlu0 0
        %1927 = vperm.xlu0 %1926, %v1742
        %v1928 = vpop.permute.xlu0 %1927
        %1929 = vset.pattern.permute.xlu0 0
        %1930 = vperm.xlu0 %1929, %v1743
        %v1931 = vpop.permute.xlu0 %1930
        %1932 = vset.pattern.permute.xlu0 0
        %1933 = vperm.xlu0 %1932, %v1744
        %v1934 = vpop.permute.xlu0 %1933
        %1935 = vset.pattern.permute.xlu0 0
        %1936 = vperm.xlu0 %1935, %v1745
        %v1937 = vpop.permute.xlu0 %1936
        %vm1938 = vcmp.eq.s32.totalorder %v1748, 1
        %vm1939 = vcmp.eq.s32.totalorder %v1751, 1
        %vm1940 = vcmp.eq.s32.totalorder %v1754, 1
        %vm1941 = vcmp.eq.s32.totalorder %v1757, 1
        %vm1942 = vcmp.eq.s32.totalorder %v1760, 1
        %vm1943 = vcmp.eq.s32.totalorder %v1763, 1
        %vm1944 = vcmp.eq.s32.totalorder %v1766, 1
        %vm1945 = vcmp.eq.s32.totalorder %v1769, 1
        %vm1946 = vcmp.eq.s32.totalorder %v1772, 1
        %vm1947 = vcmp.eq.s32.totalorder %v1775, 1
        %vm1948 = vcmp.eq.s32.totalorder %v1778, 1
        %vm1949 = vcmp.eq.s32.totalorder %v1781, 1
        %vm1950 = vcmp.eq.s32.totalorder %v1784, 1
        %vm1951 = vcmp.eq.s32.totalorder %v1787, 1
        %vm1952 = vcmp.eq.s32.totalorder %v1790, 1
        %vm1953 = vcmp.eq.s32.totalorder %v1793, 1
        %vm1954 = vcmp.eq.s32.totalorder %v1796, 1
        %vm1955 = vcmp.eq.s32.totalorder %v1799, 1
        %vm1956 = vcmp.eq.s32.totalorder %v1802, 1
        %vm1957 = vcmp.eq.s32.totalorder %v1805, 1
        %vm1958 = vcmp.eq.s32.totalorder %v1808, 1
        %vm1959 = vcmp.eq.s32.totalorder %v1811, 1
        %vm1960 = vcmp.eq.s32.totalorder %v1814, 1
        %vm1961 = vcmp.eq.s32.totalorder %v1817, 1
        %vm1962 = vcmp.eq.s32.totalorder %v1820, 1
        %vm1963 = vcmp.eq.s32.totalorder %v1823, 1
        %vm1964 = vcmp.eq.s32.totalorder %v1826, 1
        %vm1965 = vcmp.eq.s32.totalorder %v1829, 1
        %vm1966 = vcmp.eq.s32.totalorder %v1832, 1
        %vm1967 = vcmp.eq.s32.totalorder %v1835, 1
        %vm1968 = vcmp.eq.s32.totalorder %v1838, 1
        %vm1969 = vcmp.eq.s32.totalorder %v1841, 1
        %vm1970 = vcmp.eq.s32.totalorder %v1844, 1
        %vm1971 = vcmp.eq.s32.totalorder %v1847, 1
        %vm1972 = vcmp.eq.s32.totalorder %v1850, 1
        %vm1973 = vcmp.eq.s32.totalorder %v1853, 1
        %vm1974 = vcmp.eq.s32.totalorder %v1856, 1
        %vm1975 = vcmp.eq.s32.totalorder %v1859, 1
        %vm1976 = vcmp.eq.s32.totalorder %v1862, 1
        %vm1977 = vcmp.eq.s32.totalorder %v1865, 1
        %vm1978 = vcmp.eq.s32.totalorder %v1868, 1
        %vm1979 = vcmp.eq.s32.totalorder %v1871, 1
        %vm1980 = vcmp.eq.s32.totalorder %v1874, 1
        %vm1981 = vcmp.eq.s32.totalorder %v1877, 1
        %vm1982 = vcmp.eq.s32.totalorder %v1880, 1
        %vm1983 = vcmp.eq.s32.totalorder %v1883, 1
        %vm1984 = vcmp.eq.s32.totalorder %v1886, 1
        %vm1985 = vcmp.eq.s32.totalorder %v1889, 1
        %vm1986 = vcmp.eq.s32.totalorder %v1892, 1
        %vm1987 = vcmp.eq.s32.totalorder %v1895, 1
        %vm1988 = vcmp.eq.s32.totalorder %v1898, 1
        %vm1989 = vcmp.eq.s32.totalorder %v1901, 1
        %vm1990 = vcmp.eq.s32.totalorder %v1904, 1
        %vm1991 = vcmp.eq.s32.totalorder %v1907, 1
        %vm1992 = vcmp.eq.s32.totalorder %v1910, 1
        %vm1993 = vcmp.eq.s32.totalorder %v1913, 1
        %vm1994 = vcmp.eq.s32.totalorder %v1916, 1
        %vm1995 = vcmp.eq.s32.totalorder %v1919, 1
        %vm1996 = vcmp.eq.s32.totalorder %v1922, 1
        %vm1997 = vcmp.eq.s32.totalorder %v1925, 1
        %vm1998 = vcmp.eq.s32.totalorder %v1928, 1
        %vm1999 = vcmp.eq.s32.totalorder %v1931, 1
        %vm2000 = vcmp.eq.s32.totalorder %v1934, 1
        %vm2001 = vcmp.eq.s32.totalorder %v1937, 1
        %v2002 = vsel %vm1938, %v281, -inf
        %v2003 = vsel %vm1939, %v282, -inf
        %v2004 = vsel %vm1940, %v283, -inf
        %v2005 = vsel %vm1941, %v284, -inf
        %v2006 = vsel %vm1942, %v285, -inf
        %v2007 = vsel %vm1943, %v286, -inf
        %v2008 = vsel %vm1944, %v287, -inf
        %v2009 = vsel %vm1945, %v288, -inf
        %v2010 = vsel %vm1946, %v289, -inf
        %v2011 = vsel %vm1947, %v290, -inf
        %v2012 = vsel %vm1948, %v291, -inf
        %v2013 = vsel %vm1949, %v292, -inf
        %v2014 = vsel %vm1950, %v293, -inf
        %v2015 = vsel %vm1951, %v294, -inf
        %v2016 = vsel %vm1952, %v295, -inf
        %v2017 = vsel %vm1953, %v296, -inf
        %v2018 = vsel %vm1954, %v297, -inf
        %v2019 = vsel %vm1955, %v298, -inf
        %v2020 = vsel %vm1956, %v299, -inf
        %v2021 = vsel %vm1957, %v300, -inf
        %v2022 = vsel %vm1958, %v301, -inf
        %v2023 = vsel %vm1959, %v302, -inf
        %v2024 = vsel %vm1960, %v303, -inf
        %v2025 = vsel %vm1961, %v304, -inf
        %v2026 = vsel %vm1962, %v305, -inf
        %v2027 = vsel %vm1963, %v306, -inf
        %v2028 = vsel %vm1964, %v307, -inf
        %v2029 = vsel %vm1965, %v308, -inf
        %v2030 = vsel %vm1966, %v309, -inf
        %v2031 = vsel %vm1967, %v310, -inf
        %v2032 = vsel %vm1968, %v311, -inf
        %v2033 = vsel %vm1969, %v312, -inf
        %v2034 = vsel %vm1970, %v313, -inf
        %v2035 = vsel %vm1971, %v314, -inf
        %v2036 = vsel %vm1972, %v315, -inf
        %v2037 = vsel %vm1973, %v316, -inf
        %v2038 = vsel %vm1974, %v317, -inf
        %v2039 = vsel %vm1975, %v318, -inf
        %v2040 = vsel %vm1976, %v319, -inf
        %v2041 = vsel %vm1977, %v320, -inf
        %v2042 = vsel %vm1978, %v321, -inf
        %v2043 = vsel %vm1979, %v322, -inf
        %v2044 = vsel %vm1980, %v323, -inf
        %v2045 = vsel %vm1981, %v324, -inf
        %v2046 = vsel %vm1982, %v325, -inf
        %v2047 = vsel %vm1983, %v326, -inf
        %v2048 = vsel %vm1984, %v327, -inf
        %v2049 = vsel %vm1985, %v328, -inf
        %v2050 = vsel %vm1986, %v329, -inf
        %v2051 = vsel %vm1987, %v330, -inf
        %v2052 = vsel %vm1988, %v331, -inf
        %v2053 = vsel %vm1989, %v332, -inf
        %v2054 = vsel %vm1990, %v333, -inf
        %v2055 = vsel %vm1991, %v334, -inf
        %v2056 = vsel %vm1992, %v335, -inf
        %v2057 = vsel %vm1993, %v336, -inf
        %v2058 = vsel %vm1994, %v337, -inf
        %v2059 = vsel %vm1995, %v338, -inf
        %v2060 = vsel %vm1996, %v339, -inf
        %v2061 = vsel %vm1997, %v340, -inf
        %v2062 = vsel %vm1998, %v341, -inf
        %v2063 = vsel %vm1999, %v342, -inf
        %v2064 = vsel %vm2000, %v343, -inf
        %v2065 = vsel %vm2001, %v344, -inf
        %v2066 = vsel %vm1480, %v2002, -inf
        %v2067 = vsel %vm1480, %v2003, -inf
        %v2068 = vsel %vm1480, %v2004, -inf
        %v2069 = vsel %vm1480, %v2005, -inf
        %v2070 = vsel %vm1480, %v2006, -inf
        %v2071 = vmax.f32 %v2066, %v2070
        %v2072 = vsel %vm1480, %v2007, -inf
        %v2073 = vmax.f32 %v2067, %v2072
        %v2074 = vsel %vm1480, %v2008, -inf
        %v2075 = vmax.f32 %v2068, %v2074
        %v2076 = vsel %vm1480, %v2009, -inf
        %v2077 = vmax.f32 %v2069, %v2076
        %v2078 = vsel %vm1480, %v2010, -inf
        %v2079 = vmax.f32 %v2071, %v2078
        %v2080 = vsel %vm1480, %v2011, -inf
        %v2081 = vmax.f32 %v2073, %v2080
        %v2082 = vsel %vm1480, %v2012, -inf
        %v2083 = vmax.f32 %v2075, %v2082
        %v2084 = vsel %vm1480, %v2013, -inf
        %v2085 = vmax.f32 %v2077, %v2084
        %v2086 = vsel %vm1480, %v2014, -inf
        %v2087 = vmax.f32 %v2079, %v2086
        %v2088 = vsel %vm1480, %v2015, -inf
        %v2089 = vmax.f32 %v2081, %v2088
        %v2090 = vsel %vm1480, %v2016, -inf
        %v2091 = vmax.f32 %v2083, %v2090
        %v2092 = vsel %vm1480, %v2017, -inf
        %v2093 = vmax.f32 %v2085, %v2092
        %v2094 = vsel %vm1480, %v2018, -inf
        %v2095 = vmax.f32 %v2087, %v2094
        %v2096 = vsel %vm1480, %v2019, -inf
        %v2097 = vmax.f32 %v2089, %v2096
        %v2098 = vsel %vm1480, %v2020, -inf
        %v2099 = vmax.f32 %v2091, %v2098
        %v2100 = vsel %vm1480, %v2021, -inf
        %v2101 = vmax.f32 %v2093, %v2100
        %v2102 = vsel %vm1480, %v2022, -inf
        %v2103 = vmax.f32 %v2095, %v2102
        %v2104 = vsel %vm1480, %v2023, -inf
        %v2105 = vmax.f32 %v2097, %v2104
        %v2106 = vsel %vm1480, %v2024, -inf
        %v2107 = vmax.f32 %v2099, %v2106
        %v2108 = vsel %vm1480, %v2025, -inf
        %v2109 = vmax.f32 %v2101, %v2108
        %v2110 = vsel %vm1480, %v2026, -inf
        %v2111 = vmax.f32 %v2103, %v2110
        %v2112 = vsel %vm1480, %v2027, -inf
        %v2113 = vmax.f32 %v2105, %v2112
        %v2114 = vsel %vm1480, %v2028, -inf
        %v2115 = vmax.f32 %v2107, %v2114
        %v2116 = vsel %vm1480, %v2029, -inf
        %v2117 = vmax.f32 %v2109, %v2116
        %v2118 = vsel %vm1480, %v2030, -inf
        %v2119 = vmax.f32 %v2111, %v2118
        %v2120 = vsel %vm1480, %v2031, -inf
        %v2121 = vmax.f32 %v2113, %v2120
        %v2122 = vsel %vm1480, %v2032, -inf
        %v2123 = vmax.f32 %v2115, %v2122
        %v2124 = vsel %vm1480, %v2033, -inf
        %v2125 = vmax.f32 %v2117, %v2124
        %v2126 = vsel %vm1480, %v2034, -inf
        %v2127 = vmax.f32 %v2119, %v2126
        %v2128 = vsel %vm1480, %v2035, -inf
        %v2129 = vmax.f32 %v2121, %v2128
        %v2130 = vsel %vm1480, %v2036, -inf
        %v2131 = vmax.f32 %v2123, %v2130
        %v2132 = vsel %vm1480, %v2037, -inf
        %v2133 = vmax.f32 %v2125, %v2132
        %v2134 = vsel %vm1480, %v2038, -inf
        %v2135 = vmax.f32 %v2127, %v2134
        %v2136 = vsel %vm1480, %v2039, -inf
        %v2137 = vmax.f32 %v2129, %v2136
        %v2138 = vsel %vm1480, %v2040, -inf
        %v2139 = vmax.f32 %v2131, %v2138
        %v2140 = vsel %vm1480, %v2041, -inf
        %v2141 = vmax.f32 %v2133, %v2140
        %v2142 = vsel %vm1480, %v2042, -inf
        %v2143 = vmax.f32 %v2135, %v2142
        %v2144 = vsel %vm1480, %v2043, -inf
        %v2145 = vmax.f32 %v2137, %v2144
        %v2146 = vsel %vm1480, %v2044, -inf
        %v2147 = vmax.f32 %v2139, %v2146
        %v2148 = vsel %vm1480, %v2045, -inf
        %v2149 = vmax.f32 %v2141, %v2148
        %v2150 = vsel %vm1480, %v2046, -inf
        %v2151 = vmax.f32 %v2143, %v2150
        %v2152 = vsel %vm1480, %v2047, -inf
        %v2153 = vmax.f32 %v2145, %v2152
        %v2154 = vsel %vm1480, %v2048, -inf
        %v2155 = vmax.f32 %v2147, %v2154
        %v2156 = vsel %vm1480, %v2049, -inf
        %v2157 = vmax.f32 %v2149, %v2156
        %v2158 = vsel %vm1480, %v2050, -inf
        %v2159 = vmax.f32 %v2151, %v2158
        %v2160 = vsel %vm1480, %v2051, -inf
        %v2161 = vmax.f32 %v2153, %v2160
        %v2162 = vsel %vm1480, %v2052, -inf
        %v2163 = vmax.f32 %v2155, %v2162
        %v2164 = vsel %vm1480, %v2053, -inf
        %v2165 = vmax.f32 %v2157, %v2164
        %v2166 = vsel %vm1480, %v2054, -inf
        %v2167 = vmax.f32 %v2159, %v2166
        %v2168 = vsel %vm1480, %v2055, -inf
        %v2169 = vmax.f32 %v2161, %v2168
        %v2170 = vsel %vm1480, %v2056, -inf
        %v2171 = vmax.f32 %v2163, %v2170
        %v2172 = vsel %vm1480, %v2057, -inf
        %v2173 = vmax.f32 %v2165, %v2172
        %v2174 = vsel %vm1480, %v2058, -inf
        %v2175 = vmax.f32 %v2167, %v2174
        %v2176 = vsel %vm1480, %v2059, -inf
        %v2177 = vmax.f32 %v2169, %v2176
        %v2178 = vsel %vm1480, %v2060, -inf
        %v2179 = vmax.f32 %v2171, %v2178
        %v2180 = vsel %vm1480, %v2061, -inf
        %v2181 = vmax.f32 %v2173, %v2180
        %v2182 = vsel %vm1480, %v2062, -inf
        %v2183 = vmax.f32 %v2175, %v2182
        %v2184 = vsel %vm1480, %v2063, -inf
        %v2185 = vmax.f32 %v2177, %v2184
        %v2186 = vsel %vm1480, %v2064, -inf
        %v2187 = vmax.f32 %v2179, %v2186
        %v2188 = vsel %vm1480, %v2065, -inf
        %v2189 = vmax.f32 %v2181, %v2188
        %v2190 = vmax.f32 %v2183, %v2185
        %v2191 = vmax.f32 %v2187, %v2189
        %v2192 = vmax.f32 %v2190, %v2191
        %v2193 = vrot.slane %v2192, 4
        %v2194 = vmax.f32 %v2192, %v2193
        %v2195 = vrot.slane %v2194, 2
        %v2196 = vmax.f32 %v2194, %v2195
        %v2197 = vrot.slane %v2196, 1
        %v2198 = vmax.f32 %v2196, %v2197
        %v2199 = vld [vmem:[#allocation3 + $0x1] sm:$0x1]
        %v2200 = vmax.f32 %v2199, %v2198
        %2201 = vst.msk [vmem:[#allocation3 + $0x1] sm:$0x1] %vm1616, %v2200
        %vm2202 = vcmp.eq.s32.totalorder %v346, 2
        %vm2203 = vcmp.eq.s32.totalorder %v347, 2
        %vm2204 = vcmp.eq.s32.totalorder %v348, 2
        %vm2205 = vcmp.eq.s32.totalorder %v349, 2
        %vm2206 = vcmp.eq.s32.totalorder %v350, 2
        %vm2207 = vcmp.eq.s32.totalorder %v351, 2
        %vm2208 = vcmp.eq.s32.totalorder %v352, 2
        %vm2209 = vcmp.eq.s32.totalorder %v353, 2
        %vm2210 = vcmp.eq.s32.totalorder %v354, 2
        %vm2211 = vcmp.eq.s32.totalorder %v355, 2
        %vm2212 = vcmp.eq.s32.totalorder %v356, 2
        %vm2213 = vcmp.eq.s32.totalorder %v357, 2
        %vm2214 = vcmp.eq.s32.totalorder %v358, 2
        %vm2215 = vcmp.eq.s32.totalorder %v359, 2
        %vm2216 = vcmp.eq.s32.totalorder %v360, 2
        %vm2217 = vcmp.eq.s32.totalorder %v361, 2
        %vm2218 = vcmp.eq.s32.totalorder %v362, 2
        %vm2219 = vcmp.eq.s32.totalorder %v363, 2
        %vm2220 = vcmp.eq.s32.totalorder %v364, 2
        %vm2221 = vcmp.eq.s32.totalorder %v365, 2
        %vm2222 = vcmp.eq.s32.totalorder %v366, 2
        %vm2223 = vcmp.eq.s32.totalorder %v367, 2
        %vm2224 = vcmp.eq.s32.totalorder %v368, 2
        %vm2225 = vcmp.eq.s32.totalorder %v369, 2
        %vm2226 = vcmp.eq.s32.totalorder %v370, 2
        %vm2227 = vcmp.eq.s32.totalorder %v371, 2
        %vm2228 = vcmp.eq.s32.totalorder %v372, 2
        %vm2229 = vcmp.eq.s32.totalorder %v373, 2
        %vm2230 = vcmp.eq.s32.totalorder %v374, 2
        %vm2231 = vcmp.eq.s32.totalorder %v375, 2
        %vm2232 = vcmp.eq.s32.totalorder %v376, 2
        %vm2233 = vcmp.eq.s32.totalorder %v377, 2
        %vm2234 = vcmp.eq.s32.totalorder %v378, 2
        %vm2235 = vcmp.eq.s32.totalorder %v379, 2
        %vm2236 = vcmp.eq.s32.totalorder %v380, 2
        %vm2237 = vcmp.eq.s32.totalorder %v381, 2
        %vm2238 = vcmp.eq.s32.totalorder %v382, 2
        %vm2239 = vcmp.eq.s32.totalorder %v383, 2
        %vm2240 = vcmp.eq.s32.totalorder %v384, 2
        %vm2241 = vcmp.eq.s32.totalorder %v385, 2
        %vm2242 = vcmp.eq.s32.totalorder %v386, 2
        %vm2243 = vcmp.eq.s32.totalorder %v387, 2
        %vm2244 = vcmp.eq.s32.totalorder %v388, 2
        %vm2245 = vcmp.eq.s32.totalorder %v389, 2
        %vm2246 = vcmp.eq.s32.totalorder %v390, 2
        %vm2247 = vcmp.eq.s32.totalorder %v391, 2
        %vm2248 = vcmp.eq.s32.totalorder %v392, 2
        %vm2249 = vcmp.eq.s32.totalorder %v393, 2
        %vm2250 = vcmp.eq.s32.totalorder %v394, 2
        %vm2251 = vcmp.eq.s32.totalorder %v395, 2
        %vm2252 = vcmp.eq.s32.totalorder %v396, 2
        %vm2253 = vcmp.eq.s32.totalorder %v397, 2
        %vm2254 = vcmp.eq.s32.totalorder %v398, 2
        %vm2255 = vcmp.eq.s32.totalorder %v399, 2
        %vm2256 = vcmp.eq.s32.totalorder %v400, 2
        %vm2257 = vcmp.eq.s32.totalorder %v401, 2
        %vm2258 = vcmp.eq.s32.totalorder %v402, 2
        %vm2259 = vcmp.eq.s32.totalorder %v403, 2
        %vm2260 = vcmp.eq.s32.totalorder %v404, 2
        %vm2261 = vcmp.eq.s32.totalorder %v405, 2
        %vm2262 = vcmp.eq.s32.totalorder %v406, 2
        %vm2263 = vcmp.eq.s32.totalorder %v407, 2
        %vm2264 = vcmp.eq.s32.totalorder %v408, 2
        %vm2265 = vcmp.eq.s32.totalorder %v409, 2
        %v2266 = vsel %vm2202, 1, 0
        %v2267 = vsel %vm2203, 1, 0
        %v2268 = vsel %vm2204, 1, 0
        %v2269 = vsel %vm2205, 1, 0
        %v2270 = vsel %vm2206, 1, 0
        %v2271 = vsel %vm2207, 1, 0
        %v2272 = vsel %vm2208, 1, 0
        %v2273 = vsel %vm2209, 1, 0
        %v2274 = vsel %vm2210, 1, 0
        %v2275 = vsel %vm2211, 1, 0
        %v2276 = vsel %vm2212, 1, 0
        %v2277 = vsel %vm2213, 1, 0
        %v2278 = vsel %vm2214, 1, 0
        %v2279 = vsel %vm2215, 1, 0
        %v2280 = vsel %vm2216, 1, 0
        %v2281 = vsel %vm2217, 1, 0
        %v2282 = vsel %vm2218, 1, 0
        %v2283 = vsel %vm2219, 1, 0
        %v2284 = vsel %vm2220, 1, 0
        %v2285 = vsel %vm2221, 1, 0
        %v2286 = vsel %vm2222, 1, 0
        %v2287 = vsel %vm2223, 1, 0
        %v2288 = vsel %vm2224, 1, 0
        %v2289 = vsel %vm2225, 1, 0
        %v2290 = vsel %vm2226, 1, 0
        %v2291 = vsel %vm2227, 1, 0
        %v2292 = vsel %vm2228, 1, 0
        %v2293 = vsel %vm2229, 1, 0
        %v2294 = vsel %vm2230, 1, 0
        %v2295 = vsel %vm2231, 1, 0
        %v2296 = vsel %vm2232, 1, 0
        %v2297 = vsel %vm2233, 1, 0
        %v2298 = vsel %vm2234, 1, 0
        %v2299 = vsel %vm2235, 1, 0
        %v2300 = vsel %vm2236, 1, 0
        %v2301 = vsel %vm2237, 1, 0
        %v2302 = vsel %vm2238, 1, 0
        %v2303 = vsel %vm2239, 1, 0
        %v2304 = vsel %vm2240, 1, 0
        %v2305 = vsel %vm2241, 1, 0
        %v2306 = vsel %vm2242, 1, 0
        %v2307 = vsel %vm2243, 1, 0
        %v2308 = vsel %vm2244, 1, 0
        %v2309 = vsel %vm2245, 1, 0
        %v2310 = vsel %vm2246, 1, 0
        %v2311 = vsel %vm2247, 1, 0
        %v2312 = vsel %vm2248, 1, 0
        %v2313 = vsel %vm2249, 1, 0
        %v2314 = vsel %vm2250, 1, 0
        %v2315 = vsel %vm2251, 1, 0
        %v2316 = vsel %vm2252, 1, 0
        %v2317 = vsel %vm2253, 1, 0
        %v2318 = vsel %vm2254, 1, 0
        %v2319 = vsel %vm2255, 1, 0
        %v2320 = vsel %vm2256, 1, 0
        %v2321 = vsel %vm2257, 1, 0
        %v2322 = vsel %vm2258, 1, 0
        %v2323 = vsel %vm2259, 1, 0
        %v2324 = vsel %vm2260, 1, 0
        %v2325 = vsel %vm2261, 1, 0
        %v2326 = vsel %vm2262, 1, 0
        %v2327 = vsel %vm2263, 1, 0
        %v2328 = vsel %vm2264, 1, 0
        %v2329 = vsel %vm2265, 1, 0
        %2330 = vset.pattern.permute.xlu0 0
        %2331 = vperm.xlu0 %2330, %v2266
        %v2332 = vpop.permute.xlu0 %2331
        %2333 = vset.pattern.permute.xlu0 0
        %2334 = vperm.xlu0 %2333, %v2267
        %v2335 = vpop.permute.xlu0 %2334
        %2336 = vset.pattern.permute.xlu0 0
        %2337 = vperm.xlu0 %2336, %v2268
        %v2338 = vpop.permute.xlu0 %2337
        %2339 = vset.pattern.permute.xlu0 0
        %2340 = vperm.xlu0 %2339, %v2269
        %v2341 = vpop.permute.xlu0 %2340
        %2342 = vset.pattern.permute.xlu0 0
        %2343 = vperm.xlu0 %2342, %v2270
        %v2344 = vpop.permute.xlu0 %2343
        %2345 = vset.pattern.permute.xlu0 0
        %2346 = vperm.xlu0 %2345, %v2271
        %v2347 = vpop.permute.xlu0 %2346
        %2348 = vset.pattern.permute.xlu0 0
        %2349 = vperm.xlu0 %2348, %v2272
        %v2350 = vpop.permute.xlu0 %2349
        %2351 = vset.pattern.permute.xlu0 0
        %2352 = vperm.xlu0 %2351, %v2273
        %v2353 = vpop.permute.xlu0 %2352
        %2354 = vset.pattern.permute.xlu0 0
        %2355 = vperm.xlu0 %2354, %v2274
        %v2356 = vpop.permute.xlu0 %2355
        %2357 = vset.pattern.permute.xlu0 0
        %2358 = vperm.xlu0 %2357, %v2275
        %v2359 = vpop.permute.xlu0 %2358
        %2360 = vset.pattern.permute.xlu0 0
        %2361 = vperm.xlu0 %2360, %v2276
        %v2362 = vpop.permute.xlu0 %2361
        %2363 = vset.pattern.permute.xlu0 0
        %2364 = vperm.xlu0 %2363, %v2277
        %v2365 = vpop.permute.xlu0 %2364
        %2366 = vset.pattern.permute.xlu0 0
        %2367 = vperm.xlu0 %2366, %v2278
        %v2368 = vpop.permute.xlu0 %2367
        %2369 = vset.pattern.permute.xlu0 0
        %2370 = vperm.xlu0 %2369, %v2279
        %v2371 = vpop.permute.xlu0 %2370
        %2372 = vset.pattern.permute.xlu0 0
        %2373 = vperm.xlu0 %2372, %v2280
        %v2374 = vpop.permute.xlu0 %2373
        %2375 = vset.pattern.permute.xlu0 0
        %2376 = vperm.xlu0 %2375, %v2281
        %v2377 = vpop.permute.xlu0 %2376
        %2378 = vset.pattern.permute.xlu0 0
        %2379 = vperm.xlu0 %2378, %v2282
        %v2380 = vpop.permute.xlu0 %2379
        %2381 = vset.pattern.permute.xlu0 0
        %2382 = vperm.xlu0 %2381, %v2283
        %v2383 = vpop.permute.xlu0 %2382
        %2384 = vset.pattern.permute.xlu0 0
        %2385 = vperm.xlu0 %2384, %v2284
        %v2386 = vpop.permute.xlu0 %2385
        %2387 = vset.pattern.permute.xlu0 0
        %2388 = vperm.xlu0 %2387, %v2285
        %v2389 = vpop.permute.xlu0 %2388
        %2390 = vset.pattern.permute.xlu0 0
        %2391 = vperm.xlu0 %2390, %v2286
        %v2392 = vpop.permute.xlu0 %2391
        %2393 = vset.pattern.permute.xlu0 0
        %2394 = vperm.xlu0 %2393, %v2287
        %v2395 = vpop.permute.xlu0 %2394
        %2396 = vset.pattern.permute.xlu0 0
        %2397 = vperm.xlu0 %2396, %v2288
        %v2398 = vpop.permute.xlu0 %2397
        %2399 = vset.pattern.permute.xlu0 0
        %2400 = vperm.xlu0 %2399, %v2289
        %v2401 = vpop.permute.xlu0 %2400
        %2402 = vset.pattern.permute.xlu0 0
        %2403 = vperm.xlu0 %2402, %v2290
        %v2404 = vpop.permute.xlu0 %2403
        %2405 = vset.pattern.permute.xlu0 0
        %2406 = vperm.xlu0 %2405, %v2291
        %v2407 = vpop.permute.xlu0 %2406
        %2408 = vset.pattern.permute.xlu0 0
        %2409 = vperm.xlu0 %2408, %v2292
        %v2410 = vpop.permute.xlu0 %2409
        %2411 = vset.pattern.permute.xlu0 0
        %2412 = vperm.xlu0 %2411, %v2293
        %v2413 = vpop.permute.xlu0 %2412
        %2414 = vset.pattern.permute.xlu0 0
        %2415 = vperm.xlu0 %2414, %v2294
        %v2416 = vpop.permute.xlu0 %2415
        %2417 = vset.pattern.permute.xlu0 0
        %2418 = vperm.xlu0 %2417, %v2295
        %v2419 = vpop.permute.xlu0 %2418
        %2420 = vset.pattern.permute.xlu0 0
        %2421 = vperm.xlu0 %2420, %v2296
        %v2422 = vpop.permute.xlu0 %2421
        %2423 = vset.pattern.permute.xlu0 0
        %2424 = vperm.xlu0 %2423, %v2297
        %v2425 = vpop.permute.xlu0 %2424
        %2426 = vset.pattern.permute.xlu0 0
        %2427 = vperm.xlu0 %2426, %v2298
        %v2428 = vpop.permute.xlu0 %2427
        %2429 = vset.pattern.permute.xlu0 0
        %2430 = vperm.xlu0 %2429, %v2299
        %v2431 = vpop.permute.xlu0 %2430
        %2432 = vset.pattern.permute.xlu0 0
        %2433 = vperm.xlu0 %2432, %v2300
        %v2434 = vpop.permute.xlu0 %2433
        %2435 = vset.pattern.permute.xlu0 0
        %2436 = vperm.xlu0 %2435, %v2301
        %v2437 = vpop.permute.xlu0 %2436
        %2438 = vset.pattern.permute.xlu0 0
        %2439 = vperm.xlu0 %2438, %v2302
        %v2440 = vpop.permute.xlu0 %2439
        %2441 = vset.pattern.permute.xlu0 0
        %2442 = vperm.xlu0 %2441, %v2303
        %v2443 = vpop.permute.xlu0 %2442
        %2444 = vset.pattern.permute.xlu0 0
        %2445 = vperm.xlu0 %2444, %v2304
        %v2446 = vpop.permute.xlu0 %2445
        %2447 = vset.pattern.permute.xlu0 0
        %2448 = vperm.xlu0 %2447, %v2305
        %v2449 = vpop.permute.xlu0 %2448
        %2450 = vset.pattern.permute.xlu0 0
        %2451 = vperm.xlu0 %2450, %v2306
        %v2452 = vpop.permute.xlu0 %2451
        %2453 = vset.pattern.permute.xlu0 0
        %2454 = vperm.xlu0 %2453, %v2307
        %v2455 = vpop.permute.xlu0 %2454
        %2456 = vset.pattern.permute.xlu0 0
        %2457 = vperm.xlu0 %2456, %v2308
        %v2458 = vpop.permute.xlu0 %2457
        %2459 = vset.pattern.permute.xlu0 0
        %2460 = vperm.xlu0 %2459, %v2309
        %v2461 = vpop.permute.xlu0 %2460
        %2462 = vset.pattern.permute.xlu0 0
        %2463 = vperm.xlu0 %2462, %v2310
        %v2464 = vpop.permute.xlu0 %2463
        %2465 = vset.pattern.permute.xlu0 0
        %2466 = vperm.xlu0 %2465, %v2311
        %v2467 = vpop.permute.xlu0 %2466
        %2468 = vset.pattern.permute.xlu0 0
        %2469 = vperm.xlu0 %2468, %v2312
        %v2470 = vpop.permute.xlu0 %2469
        %2471 = vset.pattern.permute.xlu0 0
        %2472 = vperm.xlu0 %2471, %v2313
        %v2473 = vpop.permute.xlu0 %2472
        %2474 = vset.pattern.permute.xlu0 0
        %2475 = vperm.xlu0 %2474, %v2314
        %v2476 = vpop.permute.xlu0 %2475
        %2477 = vset.pattern.permute.xlu0 0
        %2478 = vperm.xlu0 %2477, %v2315
        %v2479 = vpop.permute.xlu0 %2478
        %2480 = vset.pattern.permute.xlu0 0
        %2481 = vperm.xlu0 %2480, %v2316
        %v2482 = vpop.permute.xlu0 %2481
        %2483 = vset.pattern.permute.xlu0 0
        %2484 = vperm.xlu0 %2483, %v2317
        %v2485 = vpop.permute.xlu0 %2484
        %2486 = vset.pattern.permute.xlu0 0
        %2487 = vperm.xlu0 %2486, %v2318
        %v2488 = vpop.permute.xlu0 %2487
        %2489 = vset.pattern.permute.xlu0 0
        %2490 = vperm.xlu0 %2489, %v2319
        %v2491 = vpop.permute.xlu0 %2490
        %2492 = vset.pattern.permute.xlu0 0
        %2493 = vperm.xlu0 %2492, %v2320
        %v2494 = vpop.permute.xlu0 %2493
        %2495 = vset.pattern.permute.xlu0 0
        %2496 = vperm.xlu0 %2495, %v2321
        %v2497 = vpop.permute.xlu0 %2496
        %2498 = vset.pattern.permute.xlu0 0
        %2499 = vperm.xlu0 %2498, %v2322
        %v2500 = vpop.permute.xlu0 %2499
        %2501 = vset.pattern.permute.xlu0 0
        %2502 = vperm.xlu0 %2501, %v2323
        %v2503 = vpop.permute.xlu0 %2502
        %2504 = vset.pattern.permute.xlu0 0
        %2505 = vperm.xlu0 %2504, %v2324
        %v2506 = vpop.permute.xlu0 %2505
        %2507 = vset.pattern.permute.xlu0 0
        %2508 = vperm.xlu0 %2507, %v2325
        %v2509 = vpop.permute.xlu0 %2508
        %2510 = vset.pattern.permute.xlu0 0
        %2511 = vperm.xlu0 %2510, %v2326
        %v2512 = vpop.permute.xlu0 %2511
        %2513 = vset.pattern.permute.xlu0 0
        %2514 = vperm.xlu0 %2513, %v2327
        %v2515 = vpop.permute.xlu0 %2514
        %2516 = vset.pattern.permute.xlu0 0
        %2517 = vperm.xlu0 %2516, %v2328
        %v2518 = vpop.permute.xlu0 %2517
        %2519 = vset.pattern.permute.xlu0 0
        %2520 = vperm.xlu0 %2519, %v2329
        %v2521 = vpop.permute.xlu0 %2520
        %vm2522 = vcmp.eq.s32.totalorder %v2332, 1
        %vm2523 = vcmp.eq.s32.totalorder %v2335, 1
        %vm2524 = vcmp.eq.s32.totalorder %v2338, 1
        %vm2525 = vcmp.eq.s32.totalorder %v2341, 1
        %vm2526 = vcmp.eq.s32.totalorder %v2344, 1
        %vm2527 = vcmp.eq.s32.totalorder %v2347, 1
        %vm2528 = vcmp.eq.s32.totalorder %v2350, 1
        %vm2529 = vcmp.eq.s32.totalorder %v2353, 1
        %vm2530 = vcmp.eq.s32.totalorder %v2356, 1
        %vm2531 = vcmp.eq.s32.totalorder %v2359, 1
        %vm2532 = vcmp.eq.s32.totalorder %v2362, 1
        %vm2533 = vcmp.eq.s32.totalorder %v2365, 1
        %vm2534 = vcmp.eq.s32.totalorder %v2368, 1
        %vm2535 = vcmp.eq.s32.totalorder %v2371, 1
        %vm2536 = vcmp.eq.s32.totalorder %v2374, 1
        %vm2537 = vcmp.eq.s32.totalorder %v2377, 1
        %vm2538 = vcmp.eq.s32.totalorder %v2380, 1
        %vm2539 = vcmp.eq.s32.totalorder %v2383, 1
        %vm2540 = vcmp.eq.s32.totalorder %v2386, 1
        %vm2541 = vcmp.eq.s32.totalorder %v2389, 1
        %vm2542 = vcmp.eq.s32.totalorder %v2392, 1
        %vm2543 = vcmp.eq.s32.totalorder %v2395, 1
        %vm2544 = vcmp.eq.s32.totalorder %v2398, 1
        %vm2545 = vcmp.eq.s32.totalorder %v2401, 1
        %vm2546 = vcmp.eq.s32.totalorder %v2404, 1
        %vm2547 = vcmp.eq.s32.totalorder %v2407, 1
        %vm2548 = vcmp.eq.s32.totalorder %v2410, 1
        %vm2549 = vcmp.eq.s32.totalorder %v2413, 1
        %vm2550 = vcmp.eq.s32.totalorder %v2416, 1
        %vm2551 = vcmp.eq.s32.totalorder %v2419, 1
        %vm2552 = vcmp.eq.s32.totalorder %v2422, 1
        %vm2553 = vcmp.eq.s32.totalorder %v2425, 1
        %vm2554 = vcmp.eq.s32.totalorder %v2428, 1
        %vm2555 = vcmp.eq.s32.totalorder %v2431, 1
        %vm2556 = vcmp.eq.s32.totalorder %v2434, 1
        %vm2557 = vcmp.eq.s32.totalorder %v2437, 1
        %vm2558 = vcmp.eq.s32.totalorder %v2440, 1
        %vm2559 = vcmp.eq.s32.totalorder %v2443, 1
        %vm2560 = vcmp.eq.s32.totalorder %v2446, 1
        %vm2561 = vcmp.eq.s32.totalorder %v2449, 1
        %vm2562 = vcmp.eq.s32.totalorder %v2452, 1
        %vm2563 = vcmp.eq.s32.totalorder %v2455, 1
        %vm2564 = vcmp.eq.s32.totalorder %v2458, 1
        %vm2565 = vcmp.eq.s32.totalorder %v2461, 1
        %vm2566 = vcmp.eq.s32.totalorder %v2464, 1
        %vm2567 = vcmp.eq.s32.totalorder %v2467, 1
        %vm2568 = vcmp.eq.s32.totalorder %v2470, 1
        %vm2569 = vcmp.eq.s32.totalorder %v2473, 1
        %vm2570 = vcmp.eq.s32.totalorder %v2476, 1
        %vm2571 = vcmp.eq.s32.totalorder %v2479, 1
        %vm2572 = vcmp.eq.s32.totalorder %v2482, 1
        %vm2573 = vcmp.eq.s32.totalorder %v2485, 1
        %vm2574 = vcmp.eq.s32.totalorder %v2488, 1
        %vm2575 = vcmp.eq.s32.totalorder %v2491, 1
        %vm2576 = vcmp.eq.s32.totalorder %v2494, 1
        %vm2577 = vcmp.eq.s32.totalorder %v2497, 1
        %vm2578 = vcmp.eq.s32.totalorder %v2500, 1
        %vm2579 = vcmp.eq.s32.totalorder %v2503, 1
        %vm2580 = vcmp.eq.s32.totalorder %v2506, 1
        %vm2581 = vcmp.eq.s32.totalorder %v2509, 1
        %vm2582 = vcmp.eq.s32.totalorder %v2512, 1
        %vm2583 = vcmp.eq.s32.totalorder %v2515, 1
        %vm2584 = vcmp.eq.s32.totalorder %v2518, 1
        %vm2585 = vcmp.eq.s32.totalorder %v2521, 1
        %v2586 = vsel %vm2522, %v281, -inf
        %v2587 = vsel %vm2523, %v282, -inf
        %v2588 = vsel %vm2524, %v283, -inf
        %v2589 = vsel %vm2525, %v284, -inf
        %v2590 = vsel %vm2526, %v285, -inf
        %v2591 = vsel %vm2527, %v286, -inf
        %v2592 = vsel %vm2528, %v287, -inf
        %v2593 = vsel %vm2529, %v288, -inf
        %v2594 = vsel %vm2530, %v289, -inf
        %v2595 = vsel %vm2531, %v290, -inf
        %v2596 = vsel %vm2532, %v291, -inf
        %v2597 = vsel %vm2533, %v292, -inf
        %v2598 = vsel %vm2534, %v293, -inf
        %v2599 = vsel %vm2535, %v294, -inf
        %v2600 = vsel %vm2536, %v295, -inf
        %v2601 = vsel %vm2537, %v296, -inf
        %v2602 = vsel %vm2538, %v297, -inf
        %v2603 = vsel %vm2539, %v298, -inf
        %v2604 = vsel %vm2540, %v299, -inf
        %v2605 = vsel %vm2541, %v300, -inf
        %v2606 = vsel %vm2542, %v301, -inf
        %v2607 = vsel %vm2543, %v302, -inf
        %v2608 = vsel %vm2544, %v303, -inf
        %v2609 = vsel %vm2545, %v304, -inf
        %v2610 = vsel %vm2546, %v305, -inf
        %v2611 = vsel %vm2547, %v306, -inf
        %v2612 = vsel %vm2548, %v307, -inf
        %v2613 = vsel %vm2549, %v308, -inf
        %v2614 = vsel %vm2550, %v309, -inf
        %v2615 = vsel %vm2551, %v310, -inf
        %v2616 = vsel %vm2552, %v311, -inf
        %v2617 = vsel %vm2553, %v312, -inf
        %v2618 = vsel %vm2554, %v313, -inf
        %v2619 = vsel %vm2555, %v314, -inf
        %v2620 = vsel %vm2556, %v315, -inf
        %v2621 = vsel %vm2557, %v316, -inf
        %v2622 = vsel %vm2558, %v317, -inf
        %v2623 = vsel %vm2559, %v318, -inf
        %v2624 = vsel %vm2560, %v319, -inf
        %v2625 = vsel %vm2561, %v320, -inf
        %v2626 = vsel %vm2562, %v321, -inf
        %v2627 = vsel %vm2563, %v322, -inf
        %v2628 = vsel %vm2564, %v323, -inf
        %v2629 = vsel %vm2565, %v324, -inf
        %v2630 = vsel %vm2566, %v325, -inf
        %v2631 = vsel %vm2567, %v326, -inf
        %v2632 = vsel %vm2568, %v327, -inf
        %v2633 = vsel %vm2569, %v328, -inf
        %v2634 = vsel %vm2570, %v329, -inf
        %v2635 = vsel %vm2571, %v330, -inf
        %v2636 = vsel %vm2572, %v331, -inf
        %v2637 = vsel %vm2573, %v332, -inf
        %v2638 = vsel %vm2574, %v333, -inf
        %v2639 = vsel %vm2575, %v334, -inf
        %v2640 = vsel %vm2576, %v335, -inf
        %v2641 = vsel %vm2577, %v336, -inf
        %v2642 = vsel %vm2578, %v337, -inf
        %v2643 = vsel %vm2579, %v338, -inf
        %v2644 = vsel %vm2580, %v339, -inf
        %v2645 = vsel %vm2581, %v340, -inf
        %v2646 = vsel %vm2582, %v341, -inf
        %v2647 = vsel %vm2583, %v342, -inf
        %v2648 = vsel %vm2584, %v343, -inf
        %v2649 = vsel %vm2585, %v344, -inf
        %v2650 = vsel %vm1480, %v2586, -inf
        %v2651 = vsel %vm1480, %v2587, -inf
        %v2652 = vsel %vm1480, %v2588, -inf
        %v2653 = vsel %vm1480, %v2589, -inf
        %v2654 = vsel %vm1480, %v2590, -inf
        %v2655 = vmax.f32 %v2650, %v2654
        %v2656 = vsel %vm1480, %v2591, -inf
        %v2657 = vmax.f32 %v2651, %v2656
        %v2658 = vsel %vm1480, %v2592, -inf
        %v2659 = vmax.f32 %v2652, %v2658
        %v2660 = vsel %vm1480, %v2593, -inf
        %v2661 = vmax.f32 %v2653, %v2660
        %v2662 = vsel %vm1480, %v2594, -inf
        %v2663 = vmax.f32 %v2655, %v2662
        %v2664 = vsel %vm1480, %v2595, -inf
        %v2665 = vmax.f32 %v2657, %v2664
        %v2666 = vsel %vm1480, %v2596, -inf
        %v2667 = vmax.f32 %v2659, %v2666
        %v2668 = vsel %vm1480, %v2597, -inf
        %v2669 = vmax.f32 %v2661, %v2668
        %v2670 = vsel %vm1480, %v2598, -inf
        %v2671 = vmax.f32 %v2663, %v2670
        %v2672 = vsel %vm1480, %v2599, -inf
        %v2673 = vmax.f32 %v2665, %v2672
        %v2674 = vsel %vm1480, %v2600, -inf
        %v2675 = vmax.f32 %v2667, %v2674
        %v2676 = vsel %vm1480, %v2601, -inf
        %v2677 = vmax.f32 %v2669, %v2676
        %v2678 = vsel %vm1480, %v2602, -inf
        %v2679 = vmax.f32 %v2671, %v2678
        %v2680 = vsel %vm1480, %v2603, -inf
        %v2681 = vmax.f32 %v2673, %v2680
        %v2682 = vsel %vm1480, %v2604, -inf
        %v2683 = vmax.f32 %v2675, %v2682
        %v2684 = vsel %vm1480, %v2605, -inf
        %v2685 = vmax.f32 %v2677, %v2684
        %v2686 = vsel %vm1480, %v2606, -inf
        %v2687 = vmax.f32 %v2679, %v2686
        %v2688 = vsel %vm1480, %v2607, -inf
        %v2689 = vmax.f32 %v2681, %v2688
        %v2690 = vsel %vm1480, %v2608, -inf
        %v2691 = vmax.f32 %v2683, %v2690
        %v2692 = vsel %vm1480, %v2609, -inf
        %v2693 = vmax.f32 %v2685, %v2692
        %v2694 = vsel %vm1480, %v2610, -inf
        %v2695 = vmax.f32 %v2687, %v2694
        %v2696 = vsel %vm1480, %v2611, -inf
        %v2697 = vmax.f32 %v2689, %v2696
        %v2698 = vsel %vm1480, %v2612, -inf
        %v2699 = vmax.f32 %v2691, %v2698
        %v2700 = vsel %vm1480, %v2613, -inf
        %v2701 = vmax.f32 %v2693, %v2700
        %v2702 = vsel %vm1480, %v2614, -inf
        %v2703 = vmax.f32 %v2695, %v2702
        %v2704 = vsel %vm1480, %v2615, -inf
        %v2705 = vmax.f32 %v2697, %v2704
        %v2706 = vsel %vm1480, %v2616, -inf
        %v2707 = vmax.f32 %v2699, %v2706
        %v2708 = vsel %vm1480, %v2617, -inf
        %v2709 = vmax.f32 %v2701, %v2708
        %v2710 = vsel %vm1480, %v2618, -inf
        %v2711 = vmax.f32 %v2703, %v2710
        %v2712 = vsel %vm1480, %v2619, -inf
        %v2713 = vmax.f32 %v2705, %v2712
        %v2714 = vsel %vm1480, %v2620, -inf
        %v2715 = vmax.f32 %v2707, %v2714
        %v2716 = vsel %vm1480, %v2621, -inf
        %v2717 = vmax.f32 %v2709, %v2716
        %v2718 = vsel %vm1480, %v2622, -inf
        %v2719 = vmax.f32 %v2711, %v2718
        %v2720 = vsel %vm1480, %v2623, -inf
        %v2721 = vmax.f32 %v2713, %v2720
        %v2722 = vsel %vm1480, %v2624, -inf
        %v2723 = vmax.f32 %v2715, %v2722
        %v2724 = vsel %vm1480, %v2625, -inf
        %v2725 = vmax.f32 %v2717, %v2724
        %v2726 = vsel %vm1480, %v2626, -inf
        %v2727 = vmax.f32 %v2719, %v2726
        %v2728 = vsel %vm1480, %v2627, -inf
        %v2729 = vmax.f32 %v2721, %v2728
        %v2730 = vsel %vm1480, %v2628, -inf
        %v2731 = vmax.f32 %v2723, %v2730
        %v2732 = vsel %vm1480, %v2629, -inf
        %v2733 = vmax.f32 %v2725, %v2732
        %v2734 = vsel %vm1480, %v2630, -inf
        %v2735 = vmax.f32 %v2727, %v2734
        %v2736 = vsel %vm1480, %v2631, -inf
        %v2737 = vmax.f32 %v2729, %v2736
        %v2738 = vsel %vm1480, %v2632, -inf
        %v2739 = vmax.f32 %v2731, %v2738
        %v2740 = vsel %vm1480, %v2633, -inf
        %v2741 = vmax.f32 %v2733, %v2740
        %v2742 = vsel %vm1480, %v2634, -inf
        %v2743 = vmax.f32 %v2735, %v2742
        %v2744 = vsel %vm1480, %v2635, -inf
        %v2745 = vmax.f32 %v2737, %v2744
        %v2746 = vsel %vm1480, %v2636, -inf
        %v2747 = vmax.f32 %v2739, %v2746
        %v2748 = vsel %vm1480, %v2637, -inf
        %v2749 = vmax.f32 %v2741, %v2748
        %v2750 = vsel %vm1480, %v2638, -inf
        %v2751 = vmax.f32 %v2743, %v2750
        %v2752 = vsel %vm1480, %v2639, -inf
        %v2753 = vmax.f32 %v2745, %v2752
        %v2754 = vsel %vm1480, %v2640, -inf
        %v2755 = vmax.f32 %v2747, %v2754
        %v2756 = vsel %vm1480, %v2641, -inf
        %v2757 = vmax.f32 %v2749, %v2756
        %v2758 = vsel %vm1480, %v2642, -inf
        %v2759 = vmax.f32 %v2751, %v2758
        %v2760 = vsel %vm1480, %v2643, -inf
        %v2761 = vmax.f32 %v2753, %v2760
        %v2762 = vsel %vm1480, %v2644, -inf
        %v2763 = vmax.f32 %v2755, %v2762
        %v2764 = vsel %vm1480, %v2645, -inf
        %v2765 = vmax.f32 %v2757, %v2764
        %v2766 = vsel %vm1480, %v2646, -inf
        %v2767 = vmax.f32 %v2759, %v2766
        %v2768 = vsel %vm1480, %v2647, -inf
        %v2769 = vmax.f32 %v2761, %v2768
        %v2770 = vsel %vm1480, %v2648, -inf
        %v2771 = vmax.f32 %v2763, %v2770
        %v2772 = vsel %vm1480, %v2649, -inf
        %v2773 = vmax.f32 %v2765, %v2772
        %v2774 = vmax.f32 %v2767, %v2769
        %v2775 = vmax.f32 %v2771, %v2773
        %v2776 = vmax.f32 %v2774, %v2775
        %v2777 = vrot.slane %v2776, 4
        %v2778 = vmax.f32 %v2776, %v2777
        %v2779 = vrot.slane %v2778, 2
        %v2780 = vmax.f32 %v2778, %v2779
        %v2781 = vrot.slane %v2780, 1
        %v2782 = vmax.f32 %v2780, %v2781
        %v2783 = vld [vmem:[#allocation3 + $0x2] sm:$0x1]
        %v2784 = vmax.f32 %v2783, %v2782
        %2785 = vst.msk [vmem:[#allocation3 + $0x2] sm:$0x1] %vm1616, %v2784
        %vm2786 = vcmp.eq.s32.totalorder %v346, 3
        %vm2787 = vcmp.eq.s32.totalorder %v347, 3
        %vm2788 = vcmp.eq.s32.totalorder %v348, 3
        %vm2789 = vcmp.eq.s32.totalorder %v349, 3
        %vm2790 = vcmp.eq.s32.totalorder %v350, 3
        %vm2791 = vcmp.eq.s32.totalorder %v351, 3
        %vm2792 = vcmp.eq.s32.totalorder %v352, 3
        %vm2793 = vcmp.eq.s32.totalorder %v353, 3
        %vm2794 = vcmp.eq.s32.totalorder %v354, 3
        %vm2795 = vcmp.eq.s32.totalorder %v355, 3
        %vm2796 = vcmp.eq.s32.totalorder %v356, 3
        %vm2797 = vcmp.eq.s32.totalorder %v357, 3
        %vm2798 = vcmp.eq.s32.totalorder %v358, 3
        %vm2799 = vcmp.eq.s32.totalorder %v359, 3
        %vm2800 = vcmp.eq.s32.totalorder %v360, 3
        %vm2801 = vcmp.eq.s32.totalorder %v361, 3
        %vm2802 = vcmp.eq.s32.totalorder %v362, 3
        %vm2803 = vcmp.eq.s32.totalorder %v363, 3
        %vm2804 = vcmp.eq.s32.totalorder %v364, 3
        %vm2805 = vcmp.eq.s32.totalorder %v365, 3
        %vm2806 = vcmp.eq.s32.totalorder %v366, 3
        %vm2807 = vcmp.eq.s32.totalorder %v367, 3
        %vm2808 = vcmp.eq.s32.totalorder %v368, 3
        %vm2809 = vcmp.eq.s32.totalorder %v369, 3
        %vm2810 = vcmp.eq.s32.totalorder %v370, 3
        %vm2811 = vcmp.eq.s32.totalorder %v371, 3
        %vm2812 = vcmp.eq.s32.totalorder %v372, 3
        %vm2813 = vcmp.eq.s32.totalorder %v373, 3
        %vm2814 = vcmp.eq.s32.totalorder %v374, 3
        %vm2815 = vcmp.eq.s32.totalorder %v375, 3
        %vm2816 = vcmp.eq.s32.totalorder %v376, 3
        %vm2817 = vcmp.eq.s32.totalorder %v377, 3
        %vm2818 = vcmp.eq.s32.totalorder %v378, 3
        %vm2819 = vcmp.eq.s32.totalorder %v379, 3
        %vm2820 = vcmp.eq.s32.totalorder %v380, 3
        %vm2821 = vcmp.eq.s32.totalorder %v381, 3
        %vm2822 = vcmp.eq.s32.totalorder %v382, 3
        %vm2823 = vcmp.eq.s32.totalorder %v383, 3
        %vm2824 = vcmp.eq.s32.totalorder %v384, 3
        %vm2825 = vcmp.eq.s32.totalorder %v385, 3
        %vm2826 = vcmp.eq.s32.totalorder %v386, 3
        %vm2827 = vcmp.eq.s32.totalorder %v387, 3
        %vm2828 = vcmp.eq.s32.totalorder %v388, 3
        %vm2829 = vcmp.eq.s32.totalorder %v389, 3
        %vm2830 = vcmp.eq.s32.totalorder %v390, 3
        %vm2831 = vcmp.eq.s32.totalorder %v391, 3
        %vm2832 = vcmp.eq.s32.totalorder %v392, 3
        %vm2833 = vcmp.eq.s32.totalorder %v393, 3
        %vm2834 = vcmp.eq.s32.totalorder %v394, 3
        %vm2835 = vcmp.eq.s32.totalorder %v395, 3
        %vm2836 = vcmp.eq.s32.totalorder %v396, 3
        %vm2837 = vcmp.eq.s32.totalorder %v397, 3
        %vm2838 = vcmp.eq.s32.totalorder %v398, 3
        %vm2839 = vcmp.eq.s32.totalorder %v399, 3
        %vm2840 = vcmp.eq.s32.totalorder %v400, 3
        %vm2841 = vcmp.eq.s32.totalorder %v401, 3
        %vm2842 = vcmp.eq.s32.totalorder %v402, 3
        %vm2843 = vcmp.eq.s32.totalorder %v403, 3
        %vm2844 = vcmp.eq.s32.totalorder %v404, 3
        %vm2845 = vcmp.eq.s32.totalorder %v405, 3
        %vm2846 = vcmp.eq.s32.totalorder %v406, 3
        %vm2847 = vcmp.eq.s32.totalorder %v407, 3
        %vm2848 = vcmp.eq.s32.totalorder %v408, 3
        %vm2849 = vcmp.eq.s32.totalorder %v409, 3
        %v2850 = vsel %vm2786, 1, 0
        %v2851 = vsel %vm2787, 1, 0
        %v2852 = vsel %vm2788, 1, 0
        %v2853 = vsel %vm2789, 1, 0
        %v2854 = vsel %vm2790, 1, 0
        %v2855 = vsel %vm2791, 1, 0
        %v2856 = vsel %vm2792, 1, 0
        %v2857 = vsel %vm2793, 1, 0
        %v2858 = vsel %vm2794, 1, 0
        %v2859 = vsel %vm2795, 1, 0
        %v2860 = vsel %vm2796, 1, 0
        %v2861 = vsel %vm2797, 1, 0
        %v2862 = vsel %vm2798, 1, 0
        %v2863 = vsel %vm2799, 1, 0
        %v2864 = vsel %vm2800, 1, 0
        %v2865 = vsel %vm2801, 1, 0
        %v2866 = vsel %vm2802, 1, 0
        %v2867 = vsel %vm2803, 1, 0
        %v2868 = vsel %vm2804, 1, 0
        %v2869 = vsel %vm2805, 1, 0
        %v2870 = vsel %vm2806, 1, 0
        %v2871 = vsel %vm2807, 1, 0
        %v2872 = vsel %vm2808, 1, 0
        %v2873 = vsel %vm2809, 1, 0
        %v2874 = vsel %vm2810, 1, 0
        %v2875 = vsel %vm2811, 1, 0
        %v2876 = vsel %vm2812, 1, 0
        %v2877 = vsel %vm2813, 1, 0
        %v2878 = vsel %vm2814, 1, 0
        %v2879 = vsel %vm2815, 1, 0
        %v2880 = vsel %vm2816, 1, 0
        %v2881 = vsel %vm2817, 1, 0
        %v2882 = vsel %vm2818, 1, 0
        %v2883 = vsel %vm2819, 1, 0
        %v2884 = vsel %vm2820, 1, 0
        %v2885 = vsel %vm2821, 1, 0
        %v2886 = vsel %vm2822, 1, 0
        %v2887 = vsel %vm2823, 1, 0
        %v2888 = vsel %vm2824, 1, 0
        %v2889 = vsel %vm2825, 1, 0
        %v2890 = vsel %vm2826, 1, 0
        %v2891 = vsel %vm2827, 1, 0
        %v2892 = vsel %vm2828, 1, 0
        %v2893 = vsel %vm2829, 1, 0
        %v2894 = vsel %vm2830, 1, 0
        %v2895 = vsel %vm2831, 1, 0
        %v2896 = vsel %vm2832, 1, 0
        %v2897 = vsel %vm2833, 1, 0
        %v2898 = vsel %vm2834, 1, 0
        %v2899 = vsel %vm2835, 1, 0
        %v2900 = vsel %vm2836, 1, 0
        %v2901 = vsel %vm2837, 1, 0
        %v2902 = vsel %vm2838, 1, 0
        %v2903 = vsel %vm2839, 1, 0
        %v2904 = vsel %vm2840, 1, 0
        %v2905 = vsel %vm2841, 1, 0
        %v2906 = vsel %vm2842, 1, 0
        %v2907 = vsel %vm2843, 1, 0
        %v2908 = vsel %vm2844, 1, 0
        %v2909 = vsel %vm2845, 1, 0
        %v2910 = vsel %vm2846, 1, 0
        %v2911 = vsel %vm2847, 1, 0
        %v2912 = vsel %vm2848, 1, 0
        %v2913 = vsel %vm2849, 1, 0
        %2914 = vset.pattern.permute.xlu0 0
        %2915 = vperm.xlu0 %2914, %v2850
        %v2916 = vpop.permute.xlu0 %2915
        %2917 = vset.pattern.permute.xlu0 0
        %2918 = vperm.xlu0 %2917, %v2851
        %v2919 = vpop.permute.xlu0 %2918
        %2920 = vset.pattern.permute.xlu0 0
        %2921 = vperm.xlu0 %2920, %v2852
        %v2922 = vpop.permute.xlu0 %2921
        %2923 = vset.pattern.permute.xlu0 0
        %2924 = vperm.xlu0 %2923, %v2853
        %v2925 = vpop.permute.xlu0 %2924
        %2926 = vset.pattern.permute.xlu0 0
        %2927 = vperm.xlu0 %2926, %v2854
        %v2928 = vpop.permute.xlu0 %2927
        %2929 = vset.pattern.permute.xlu0 0
        %2930 = vperm.xlu0 %2929, %v2855
        %v2931 = vpop.permute.xlu0 %2930
        %2932 = vset.pattern.permute.xlu0 0
        %2933 = vperm.xlu0 %2932, %v2856
        %v2934 = vpop.permute.xlu0 %2933
        %2935 = vset.pattern.permute.xlu0 0
        %2936 = vperm.xlu0 %2935, %v2857
        %v2937 = vpop.permute.xlu0 %2936
        %2938 = vset.pattern.permute.xlu0 0
        %2939 = vperm.xlu0 %2938, %v2858
        %v2940 = vpop.permute.xlu0 %2939
        %2941 = vset.pattern.permute.xlu0 0
        %2942 = vperm.xlu0 %2941, %v2859
        %v2943 = vpop.permute.xlu0 %2942
        %2944 = vset.pattern.permute.xlu0 0
        %2945 = vperm.xlu0 %2944, %v2860
        %v2946 = vpop.permute.xlu0 %2945
        %2947 = vset.pattern.permute.xlu0 0
        %2948 = vperm.xlu0 %2947, %v2861
        %v2949 = vpop.permute.xlu0 %2948
        %2950 = vset.pattern.permute.xlu0 0
        %2951 = vperm.xlu0 %2950, %v2862
        %v2952 = vpop.permute.xlu0 %2951
        %2953 = vset.pattern.permute.xlu0 0
        %2954 = vperm.xlu0 %2953, %v2863
        %v2955 = vpop.permute.xlu0 %2954
        %2956 = vset.pattern.permute.xlu0 0
        %2957 = vperm.xlu0 %2956, %v2864
        %v2958 = vpop.permute.xlu0 %2957
        %2959 = vset.pattern.permute.xlu0 0
        %2960 = vperm.xlu0 %2959, %v2865
        %v2961 = vpop.permute.xlu0 %2960
        %2962 = vset.pattern.permute.xlu0 0
        %2963 = vperm.xlu0 %2962, %v2866
        %v2964 = vpop.permute.xlu0 %2963
        %2965 = vset.pattern.permute.xlu0 0
        %2966 = vperm.xlu0 %2965, %v2867
        %v2967 = vpop.permute.xlu0 %2966
        %2968 = vset.pattern.permute.xlu0 0
        %2969 = vperm.xlu0 %2968, %v2868
        %v2970 = vpop.permute.xlu0 %2969
        %2971 = vset.pattern.permute.xlu0 0
        %2972 = vperm.xlu0 %2971, %v2869
        %v2973 = vpop.permute.xlu0 %2972
        %2974 = vset.pattern.permute.xlu0 0
        %2975 = vperm.xlu0 %2974, %v2870
        %v2976 = vpop.permute.xlu0 %2975
        %2977 = vset.pattern.permute.xlu0 0
        %2978 = vperm.xlu0 %2977, %v2871
        %v2979 = vpop.permute.xlu0 %2978
        %2980 = vset.pattern.permute.xlu0 0
        %2981 = vperm.xlu0 %2980, %v2872
        %v2982 = vpop.permute.xlu0 %2981
        %2983 = vset.pattern.permute.xlu0 0
        %2984 = vperm.xlu0 %2983, %v2873
        %v2985 = vpop.permute.xlu0 %2984
        %2986 = vset.pattern.permute.xlu0 0
        %2987 = vperm.xlu0 %2986, %v2874
        %v2988 = vpop.permute.xlu0 %2987
        %2989 = vset.pattern.permute.xlu0 0
        %2990 = vperm.xlu0 %2989, %v2875
        %v2991 = vpop.permute.xlu0 %2990
        %2992 = vset.pattern.permute.xlu0 0
        %2993 = vperm.xlu0 %2992, %v2876
        %v2994 = vpop.permute.xlu0 %2993
        %2995 = vset.pattern.permute.xlu0 0
        %2996 = vperm.xlu0 %2995, %v2877
        %v2997 = vpop.permute.xlu0 %2996
        %2998 = vset.pattern.permute.xlu0 0
        %2999 = vperm.xlu0 %2998, %v2878
        %v3000 = vpop.permute.xlu0 %2999
        %3001 = vset.pattern.permute.xlu0 0
        %3002 = vperm.xlu0 %3001, %v2879
        %v3003 = vpop.permute.xlu0 %3002
        %3004 = vset.pattern.permute.xlu0 0
        %3005 = vperm.xlu0 %3004, %v2880
        %v3006 = vpop.permute.xlu0 %3005
        %3007 = vset.pattern.permute.xlu0 0
        %3008 = vperm.xlu0 %3007, %v2881
        %v3009 = vpop.permute.xlu0 %3008
        %3010 = vset.pattern.permute.xlu0 0
        %3011 = vperm.xlu0 %3010, %v2882
        %v3012 = vpop.permute.xlu0 %3011
        %3013 = vset.pattern.permute.xlu0 0
        %3014 = vperm.xlu0 %3013, %v2883
        %v3015 = vpop.permute.xlu0 %3014
        %3016 = vset.pattern.permute.xlu0 0
        %3017 = vperm.xlu0 %3016, %v2884
        %v3018 = vpop.permute.xlu0 %3017
        %3019 = vset.pattern.permute.xlu0 0
        %3020 = vperm.xlu0 %3019, %v2885
        %v3021 = vpop.permute.xlu0 %3020
        %3022 = vset.pattern.permute.xlu0 0
        %3023 = vperm.xlu0 %3022, %v2886
        %v3024 = vpop.permute.xlu0 %3023
        %3025 = vset.pattern.permute.xlu0 0
        %3026 = vperm.xlu0 %3025, %v2887
        %v3027 = vpop.permute.xlu0 %3026
        %3028 = vset.pattern.permute.xlu0 0
        %3029 = vperm.xlu0 %3028, %v2888
        %v3030 = vpop.permute.xlu0 %3029
        %3031 = vset.pattern.permute.xlu0 0
        %3032 = vperm.xlu0 %3031, %v2889
        %v3033 = vpop.permute.xlu0 %3032
        %3034 = vset.pattern.permute.xlu0 0
        %3035 = vperm.xlu0 %3034, %v2890
        %v3036 = vpop.permute.xlu0 %3035
        %3037 = vset.pattern.permute.xlu0 0
        %3038 = vperm.xlu0 %3037, %v2891
        %v3039 = vpop.permute.xlu0 %3038
        %3040 = vset.pattern.permute.xlu0 0
        %3041 = vperm.xlu0 %3040, %v2892
        %v3042 = vpop.permute.xlu0 %3041
        %3043 = vset.pattern.permute.xlu0 0
        %3044 = vperm.xlu0 %3043, %v2893
        %v3045 = vpop.permute.xlu0 %3044
        %3046 = vset.pattern.permute.xlu0 0
        %3047 = vperm.xlu0 %3046, %v2894
        %v3048 = vpop.permute.xlu0 %3047
        %3049 = vset.pattern.permute.xlu0 0
        %3050 = vperm.xlu0 %3049, %v2895
        %v3051 = vpop.permute.xlu0 %3050
        %3052 = vset.pattern.permute.xlu0 0
        %3053 = vperm.xlu0 %3052, %v2896
        %v3054 = vpop.permute.xlu0 %3053
        %3055 = vset.pattern.permute.xlu0 0
        %3056 = vperm.xlu0 %3055, %v2897
        %v3057 = vpop.permute.xlu0 %3056
        %3058 = vset.pattern.permute.xlu0 0
        %3059 = vperm.xlu0 %3058, %v2898
        %v3060 = vpop.permute.xlu0 %3059
        %3061 = vset.pattern.permute.xlu0 0
        %3062 = vperm.xlu0 %3061, %v2899
        %v3063 = vpop.permute.xlu0 %3062
        %3064 = vset.pattern.permute.xlu0 0
        %3065 = vperm.xlu0 %3064, %v2900
        %v3066 = vpop.permute.xlu0 %3065
        %3067 = vset.pattern.permute.xlu0 0
        %3068 = vperm.xlu0 %3067, %v2901
        %v3069 = vpop.permute.xlu0 %3068
        %3070 = vset.pattern.permute.xlu0 0
        %3071 = vperm.xlu0 %3070, %v2902
        %v3072 = vpop.permute.xlu0 %3071
        %3073 = vset.pattern.permute.xlu0 0
        %3074 = vperm.xlu0 %3073, %v2903
        %v3075 = vpop.permute.xlu0 %3074
        %3076 = vset.pattern.permute.xlu0 0
        %3077 = vperm.xlu0 %3076, %v2904
        %v3078 = vpop.permute.xlu0 %3077
        %3079 = vset.pattern.permute.xlu0 0
        %3080 = vperm.xlu0 %3079, %v2905
        %v3081 = vpop.permute.xlu0 %3080
        %3082 = vset.pattern.permute.xlu0 0
        %3083 = vperm.xlu0 %3082, %v2906
        %v3084 = vpop.permute.xlu0 %3083
        %3085 = vset.pattern.permute.xlu0 0
        %3086 = vperm.xlu0 %3085, %v2907
        %v3087 = vpop.permute.xlu0 %3086
        %3088 = vset.pattern.permute.xlu0 0
        %3089 = vperm.xlu0 %3088, %v2908
        %v3090 = vpop.permute.xlu0 %3089
        %3091 = vset.pattern.permute.xlu0 0
        %3092 = vperm.xlu0 %3091, %v2909
        %v3093 = vpop.permute.xlu0 %3092
        %3094 = vset.pattern.permute.xlu0 0
        %3095 = vperm.xlu0 %3094, %v2910
        %v3096 = vpop.permute.xlu0 %3095
        %3097 = vset.pattern.permute.xlu0 0
        %3098 = vperm.xlu0 %3097, %v2911
        %v3099 = vpop.permute.xlu0 %3098
        %3100 = vset.pattern.permute.xlu0 0
        %3101 = vperm.xlu0 %3100, %v2912
        %v3102 = vpop.permute.xlu0 %3101
        %3103 = vset.pattern.permute.xlu0 0
        %3104 = vperm.xlu0 %3103, %v2913
        %v3105 = vpop.permute.xlu0 %3104
        %vm3106 = vcmp.eq.s32.totalorder %v2916, 1
        %vm3107 = vcmp.eq.s32.totalorder %v2919, 1
        %vm3108 = vcmp.eq.s32.totalorder %v2922, 1
        %vm3109 = vcmp.eq.s32.totalorder %v2925, 1
        %vm3110 = vcmp.eq.s32.totalorder %v2928, 1
        %vm3111 = vcmp.eq.s32.totalorder %v2931, 1
        %vm3112 = vcmp.eq.s32.totalorder %v2934, 1
        %vm3113 = vcmp.eq.s32.totalorder %v2937, 1
        %vm3114 = vcmp.eq.s32.totalorder %v2940, 1
        %vm3115 = vcmp.eq.s32.totalorder %v2943, 1
        %vm3116 = vcmp.eq.s32.totalorder %v2946, 1
        %vm3117 = vcmp.eq.s32.totalorder %v2949, 1
        %vm3118 = vcmp.eq.s32.totalorder %v2952, 1
        %vm3119 = vcmp.eq.s32.totalorder %v2955, 1
        %vm3120 = vcmp.eq.s32.totalorder %v2958, 1
        %vm3121 = vcmp.eq.s32.totalorder %v2961, 1
        %vm3122 = vcmp.eq.s32.totalorder %v2964, 1
        %vm3123 = vcmp.eq.s32.totalorder %v2967, 1
        %vm3124 = vcmp.eq.s32.totalorder %v2970, 1
        %vm3125 = vcmp.eq.s32.totalorder %v2973, 1
        %vm3126 = vcmp.eq.s32.totalorder %v2976, 1
        %vm3127 = vcmp.eq.s32.totalorder %v2979, 1
        %vm3128 = vcmp.eq.s32.totalorder %v2982, 1
        %vm3129 = vcmp.eq.s32.totalorder %v2985, 1
        %vm3130 = vcmp.eq.s32.totalorder %v2988, 1
        %vm3131 = vcmp.eq.s32.totalorder %v2991, 1
        %vm3132 = vcmp.eq.s32.totalorder %v2994, 1
        %vm3133 = vcmp.eq.s32.totalorder %v2997, 1
        %vm3134 = vcmp.eq.s32.totalorder %v3000, 1
        %vm3135 = vcmp.eq.s32.totalorder %v3003, 1
        %vm3136 = vcmp.eq.s32.totalorder %v3006, 1
        %vm3137 = vcmp.eq.s32.totalorder %v3009, 1
        %vm3138 = vcmp.eq.s32.totalorder %v3012, 1
        %vm3139 = vcmp.eq.s32.totalorder %v3015, 1
        %vm3140 = vcmp.eq.s32.totalorder %v3018, 1
        %vm3141 = vcmp.eq.s32.totalorder %v3021, 1
        %vm3142 = vcmp.eq.s32.totalorder %v3024, 1
        %vm3143 = vcmp.eq.s32.totalorder %v3027, 1
        %vm3144 = vcmp.eq.s32.totalorder %v3030, 1
        %vm3145 = vcmp.eq.s32.totalorder %v3033, 1
        %vm3146 = vcmp.eq.s32.totalorder %v3036, 1
        %vm3147 = vcmp.eq.s32.totalorder %v3039, 1
        %vm3148 = vcmp.eq.s32.totalorder %v3042, 1
        %vm3149 = vcmp.eq.s32.totalorder %v3045, 1
        %vm3150 = vcmp.eq.s32.totalorder %v3048, 1
        %vm3151 = vcmp.eq.s32.totalorder %v3051, 1
        %vm3152 = vcmp.eq.s32.totalorder %v3054, 1
        %vm3153 = vcmp.eq.s32.totalorder %v3057, 1
        %vm3154 = vcmp.eq.s32.totalorder %v3060, 1
        %vm3155 = vcmp.eq.s32.totalorder %v3063, 1
        %vm3156 = vcmp.eq.s32.totalorder %v3066, 1
        %vm3157 = vcmp.eq.s32.totalorder %v3069, 1
        %vm3158 = vcmp.eq.s32.totalorder %v3072, 1
        %vm3159 = vcmp.eq.s32.totalorder %v3075, 1
        %vm3160 = vcmp.eq.s32.totalorder %v3078, 1
        %vm3161 = vcmp.eq.s32.totalorder %v3081, 1
        %vm3162 = vcmp.eq.s32.totalorder %v3084, 1
        %vm3163 = vcmp.eq.s32.totalorder %v3087, 1
        %vm3164 = vcmp.eq.s32.totalorder %v3090, 1
        %vm3165 = vcmp.eq.s32.totalorder %v3093, 1
        %vm3166 = vcmp.eq.s32.totalorder %v3096, 1
        %vm3167 = vcmp.eq.s32.totalorder %v3099, 1
        %vm3168 = vcmp.eq.s32.totalorder %v3102, 1
        %vm3169 = vcmp.eq.s32.totalorder %v3105, 1
        %v3170 = vsel %vm3106, %v281, -inf
        %v3171 = vsel %vm3107, %v282, -inf
        %v3172 = vsel %vm3108, %v283, -inf
        %v3173 = vsel %vm3109, %v284, -inf
        %v3174 = vsel %vm3110, %v285, -inf
        %v3175 = vsel %vm3111, %v286, -inf
        %v3176 = vsel %vm3112, %v287, -inf
        %v3177 = vsel %vm3113, %v288, -inf
        %v3178 = vsel %vm3114, %v289, -inf
        %v3179 = vsel %vm3115, %v290, -inf
        %v3180 = vsel %vm3116, %v291, -inf
        %v3181 = vsel %vm3117, %v292, -inf
        %v3182 = vsel %vm3118, %v293, -inf
        %v3183 = vsel %vm3119, %v294, -inf
        %v3184 = vsel %vm3120, %v295, -inf
        %v3185 = vsel %vm3121, %v296, -inf
        %v3186 = vsel %vm3122, %v297, -inf
        %v3187 = vsel %vm3123, %v298, -inf
        %v3188 = vsel %vm3124, %v299, -inf
        %v3189 = vsel %vm3125, %v300, -inf
        %v3190 = vsel %vm3126, %v301, -inf
        %v3191 = vsel %vm3127, %v302, -inf
        %v3192 = vsel %vm3128, %v303, -inf
        %v3193 = vsel %vm3129, %v304, -inf
        %v3194 = vsel %vm3130, %v305, -inf
        %v3195 = vsel %vm3131, %v306, -inf
        %v3196 = vsel %vm3132, %v307, -inf
        %v3197 = vsel %vm3133, %v308, -inf
        %v3198 = vsel %vm3134, %v309, -inf
        %v3199 = vsel %vm3135, %v310, -inf
        %v3200 = vsel %vm3136, %v311, -inf
        %v3201 = vsel %vm3137, %v312, -inf
        %v3202 = vsel %vm3138, %v313, -inf
        %v3203 = vsel %vm3139, %v314, -inf
        %v3204 = vsel %vm3140, %v315, -inf
        %v3205 = vsel %vm3141, %v316, -inf
        %v3206 = vsel %vm3142, %v317, -inf
        %v3207 = vsel %vm3143, %v318, -inf
        %v3208 = vsel %vm3144, %v319, -inf
        %v3209 = vsel %vm3145, %v320, -inf
        %v3210 = vsel %vm3146, %v321, -inf
        %v3211 = vsel %vm3147, %v322, -inf
        %v3212 = vsel %vm3148, %v323, -inf
        %v3213 = vsel %vm3149, %v324, -inf
        %v3214 = vsel %vm3150, %v325, -inf
        %v3215 = vsel %vm3151, %v326, -inf
        %v3216 = vsel %vm3152, %v327, -inf
        %v3217 = vsel %vm3153, %v328, -inf
        %v3218 = vsel %vm3154, %v329, -inf
        %v3219 = vsel %vm3155, %v330, -inf
        %v3220 = vsel %vm3156, %v331, -inf
        %v3221 = vsel %vm3157, %v332, -inf
        %v3222 = vsel %vm3158, %v333, -inf
        %v3223 = vsel %vm3159, %v334, -inf
        %v3224 = vsel %vm3160, %v335, -inf
        %v3225 = vsel %vm3161, %v336, -inf
        %v3226 = vsel %vm3162, %v337, -inf
        %v3227 = vsel %vm3163, %v338, -inf
        %v3228 = vsel %vm3164, %v339, -inf
        %v3229 = vsel %vm3165, %v340, -inf
        %v3230 = vsel %vm3166, %v341, -inf
        %v3231 = vsel %vm3167, %v342, -inf
        %v3232 = vsel %vm3168, %v343, -inf
        %v3233 = vsel %vm3169, %v344, -inf
        %v3234 = vsel %vm1480, %v3170, -inf
        %v3235 = vsel %vm1480, %v3171, -inf
        %v3236 = vsel %vm1480, %v3172, -inf
        %v3237 = vsel %vm1480, %v3173, -inf
        %v3238 = vsel %vm1480, %v3174, -inf
        %v3239 = vmax.f32 %v3234, %v3238
        %v3240 = vsel %vm1480, %v3175, -inf
        %v3241 = vmax.f32 %v3235, %v3240
        %v3242 = vsel %vm1480, %v3176, -inf
        %v3243 = vmax.f32 %v3236, %v3242
        %v3244 = vsel %vm1480, %v3177, -inf
        %v3245 = vmax.f32 %v3237, %v3244
        %v3246 = vsel %vm1480, %v3178, -inf
        %v3247 = vmax.f32 %v3239, %v3246
        %v3248 = vsel %vm1480, %v3179, -inf
        %v3249 = vmax.f32 %v3241, %v3248
        %v3250 = vsel %vm1480, %v3180, -inf
        %v3251 = vmax.f32 %v3243, %v3250
        %v3252 = vsel %vm1480, %v3181, -inf
        %v3253 = vmax.f32 %v3245, %v3252
        %v3254 = vsel %vm1480, %v3182, -inf
        %v3255 = vmax.f32 %v3247, %v3254
        %v3256 = vsel %vm1480, %v3183, -inf
        %v3257 = vmax.f32 %v3249, %v3256
        %v3258 = vsel %vm1480, %v3184, -inf
        %v3259 = vmax.f32 %v3251, %v3258
        %v3260 = vsel %vm1480, %v3185, -inf
        %v3261 = vmax.f32 %v3253, %v3260
        %v3262 = vsel %vm1480, %v3186, -inf
        %v3263 = vmax.f32 %v3255, %v3262
        %v3264 = vsel %vm1480, %v3187, -inf
        %v3265 = vmax.f32 %v3257, %v3264
        %v3266 = vsel %vm1480, %v3188, -inf
        %v3267 = vmax.f32 %v3259, %v3266
        %v3268 = vsel %vm1480, %v3189, -inf
        %v3269 = vmax.f32 %v3261, %v3268
        %v3270 = vsel %vm1480, %v3190, -inf
        %v3271 = vmax.f32 %v3263, %v3270
        %v3272 = vsel %vm1480, %v3191, -inf
        %v3273 = vmax.f32 %v3265, %v3272
        %v3274 = vsel %vm1480, %v3192, -inf
        %v3275 = vmax.f32 %v3267, %v3274
        %v3276 = vsel %vm1480, %v3193, -inf
        %v3277 = vmax.f32 %v3269, %v3276
        %v3278 = vsel %vm1480, %v3194, -inf
        %v3279 = vmax.f32 %v3271, %v3278
        %v3280 = vsel %vm1480, %v3195, -inf
        %v3281 = vmax.f32 %v3273, %v3280
        %v3282 = vsel %vm1480, %v3196, -inf
        %v3283 = vmax.f32 %v3275, %v3282
        %v3284 = vsel %vm1480, %v3197, -inf
        %v3285 = vmax.f32 %v3277, %v3284
        %v3286 = vsel %vm1480, %v3198, -inf
        %v3287 = vmax.f32 %v3279, %v3286
        %v3288 = vsel %vm1480, %v3199, -inf
        %v3289 = vmax.f32 %v3281, %v3288
        %v3290 = vsel %vm1480, %v3200, -inf
        %v3291 = vmax.f32 %v3283, %v3290
        %v3292 = vsel %vm1480, %v3201, -inf
        %v3293 = vmax.f32 %v3285, %v3292
        %v3294 = vsel %vm1480, %v3202, -inf
        %v3295 = vmax.f32 %v3287, %v3294
        %v3296 = vsel %vm1480, %v3203, -inf
        %v3297 = vmax.f32 %v3289, %v3296
        %v3298 = vsel %vm1480, %v3204, -inf
        %v3299 = vmax.f32 %v3291, %v3298
        %v3300 = vsel %vm1480, %v3205, -inf
        %v3301 = vmax.f32 %v3293, %v3300
        %v3302 = vsel %vm1480, %v3206, -inf
        %v3303 = vmax.f32 %v3295, %v3302
        %v3304 = vsel %vm1480, %v3207, -inf
        %v3305 = vmax.f32 %v3297, %v3304
        %v3306 = vsel %vm1480, %v3208, -inf
        %v3307 = vmax.f32 %v3299, %v3306
        %v3308 = vsel %vm1480, %v3209, -inf
        %v3309 = vmax.f32 %v3301, %v3308
        %v3310 = vsel %vm1480, %v3210, -inf
        %v3311 = vmax.f32 %v3303, %v3310
        %v3312 = vsel %vm1480, %v3211, -inf
        %v3313 = vmax.f32 %v3305, %v3312
        %v3314 = vsel %vm1480, %v3212, -inf
        %v3315 = vmax.f32 %v3307, %v3314
        %v3316 = vsel %vm1480, %v3213, -inf
        %v3317 = vmax.f32 %v3309, %v3316
        %v3318 = vsel %vm1480, %v3214, -inf
        %v3319 = vmax.f32 %v3311, %v3318
        %v3320 = vsel %vm1480, %v3215, -inf
        %v3321 = vmax.f32 %v3313, %v3320
        %v3322 = vsel %vm1480, %v3216, -inf
        %v3323 = vmax.f32 %v3315, %v3322
        %v3324 = vsel %vm1480, %v3217, -inf
        %v3325 = vmax.f32 %v3317, %v3324
        %v3326 = vsel %vm1480, %v3218, -inf
        %v3327 = vmax.f32 %v3319, %v3326
        %v3328 = vsel %vm1480, %v3219, -inf
        %v3329 = vmax.f32 %v3321, %v3328
        %v3330 = vsel %vm1480, %v3220, -inf
        %v3331 = vmax.f32 %v3323, %v3330
        %v3332 = vsel %vm1480, %v3221, -inf
        %v3333 = vmax.f32 %v3325, %v3332
        %v3334 = vsel %vm1480, %v3222, -inf
        %v3335 = vmax.f32 %v3327, %v3334
        %v3336 = vsel %vm1480, %v3223, -inf
        %v3337 = vmax.f32 %v3329, %v3336
        %v3338 = vsel %vm1480, %v3224, -inf
        %v3339 = vmax.f32 %v3331, %v3338
        %v3340 = vsel %vm1480, %v3225, -inf
        %v3341 = vmax.f32 %v3333, %v3340
        %v3342 = vsel %vm1480, %v3226, -inf
        %v3343 = vmax.f32 %v3335, %v3342
        %v3344 = vsel %vm1480, %v3227, -inf
        %v3345 = vmax.f32 %v3337, %v3344
        %v3346 = vsel %vm1480, %v3228, -inf
        %v3347 = vmax.f32 %v3339, %v3346
        %v3348 = vsel %vm1480, %v3229, -inf
        %v3349 = vmax.f32 %v3341, %v3348
        %v3350 = vsel %vm1480, %v3230, -inf
        %v3351 = vmax.f32 %v3343, %v3350
        %v3352 = vsel %vm1480, %v3231, -inf
        %v3353 = vmax.f32 %v3345, %v3352
        %v3354 = vsel %vm1480, %v3232, -inf
        %v3355 = vmax.f32 %v3347, %v3354
        %v3356 = vsel %vm1480, %v3233, -inf
        %v3357 = vmax.f32 %v3349, %v3356
        %v3358 = vmax.f32 %v3351, %v3353
        %v3359 = vmax.f32 %v3355, %v3357
        %v3360 = vmax.f32 %v3358, %v3359
        %v3361 = vrot.slane %v3360, 4
        %v3362 = vmax.f32 %v3360, %v3361
        %v3363 = vrot.slane %v3362, 2
        %v3364 = vmax.f32 %v3362, %v3363
        %v3365 = vrot.slane %v3364, 1
        %v3366 = vmax.f32 %v3364, %v3365
        %v3367 = vld [vmem:[#allocation3 + $0x3] sm:$0x1]
        %v3368 = vmax.f32 %v3367, %v3366
        %3369 = vst.msk [vmem:[#allocation3 + $0x3] sm:$0x1] %vm1616, %v3368
        %p3370 = scmp.eq.s32.totalorder %s17, 2
        // Predicated region
        $region45: #{tpu_custom_call.1} parent=39 // pred_check
          %p3371 = pneg %p3370
        $region46: #{tpu_custom_call.1} parent=39 // pred_check_branch
          %3373 = sbr.rel (%p3371) target = $region48
        $region47: #{tpu_custom_call.1} parent=39 // pred_region
          %v3374 = vld [vmem:[#allocation3] sm:$0xf]
          %vm3375 = vcmp.eq.f32.partialorder %v3374, -inf
          %v3376 = vsel %vm3375, 0.0, %v3374
          %v3377 = vld [vmem:[#allocation2] sm:$0xf]
          %v3379 = vrot.slane %v3377, 4
          %vm3381 = vcmask 1043456
          %v3382 = vsel %vm3381, %v3376, %v3379
          %v3383 = vld [vmem:[%s3] sm:$0xff]
          %v3384 = vld [vmem:[%s3 + $0x8] sm:$0xff]
          %v3385 = vld [vmem:[%s3 + $0x10] sm:$0xff]
          %v3386 = vld [vmem:[%s3 + $0x18] sm:$0xff]
          %v3388 = vsel %vm1480, %v3382, 0
          %3390 = vmatprep.subr.mxu0 0.0
          %3391 = vmatpush1.msra.mxu0 %v3383
          %3392 = vmatprep.subr.mxu0 0.0
          %3393 = vmatpush1.msra.mxu0 %v3384
          %3394 = vmatprep.subr.mxu0 0.0
          %3395 = vmatpush1.msra.mxu0 %v3385
          %3396 = vmatprep.subr.mxu0 0.0
          %3397 = vmatpush1.msra.mxu0 %v3386
          %3398 = vmatprep.subr.mxu0 0.0
          %3399 = vmatpush1.msra.mxu0 0.0
          %3400 = vmatprep.subr.mxu0 0.0
          %3401 = vmatpush1.msra.mxu0 0.0
          %3402 = vmatprep.subr.mxu0 0.0
          %3403 = vmatpush1.msra.mxu0 0.0
          %3404 = vmatprep.subr.mxu0 0.0
          %3405 = vmatpush1.msra.mxu0 0.0
          %3406 = vmatprep.subr.mxu0 0.0
          %3407 = vmatpush1.msra.mxu0 0.0
          %3408 = vmatprep.subr.mxu0 0.0
          %3409 = vmatpush1.msra.mxu0 0.0
          %3410 = vmatprep.subr.mxu0 0.0
          %3411 = vmatpush1.msra.mxu0 0.0
          %3412 = vmatprep.subr.mxu0 0.0
          %3413 = vmatpush1.msra.mxu0 0.0
          %3414 = vmatprep.subr.mxu0 0.0
          %3415 = vmatpush1.msra.mxu0 0.0
          %3416 = vmatprep.subr.mxu0 0.0
          %3417 = vmatpush1.msra.mxu0 0.0
          %3418 = vmatprep.subr.mxu0 0.0
          %3419 = vmatpush1.msra.mxu0 0.0
          %3420 = vmatprep.subr.mxu0 0.0
          %3421 = vmatpush1.msra.mxu0 0.0
          %3422 = vmatprep.subr.mxu0 0.0
          %3423 = vmatpush1.msra.mxu0 0.0
          %3424 = vmatprep.subr.mxu0 0.0
          %3425 = vmatpush1.msra.mxu0 0.0
          %3426 = vmatprep.subr.mxu0 0.0
          %3427 = vmatpush1.msra.mxu0 0.0
          %3428 = vmatprep.subr.mxu0 0.0
          %3429 = vmatpush1.msra.mxu0 0.0
          %3430 = vmatprep.subr.mxu0 0.0
          %3431 = vmatpush1.msra.mxu0 0.0
          %3432 = vmatprep.subr.mxu0 0.0
          %3433 = vmatpush1.msra.mxu0 0.0
          %3434 = vmatprep.subr.mxu0 0.0
          %3435 = vmatpush1.msra.mxu0 0.0
          %3436 = vmatprep.subr.mxu0 0.0
          %3437 = vmatpush1.msra.mxu0 0.0
          %3438 = vmatprep.subr.mxu0 0.0
          %3439 = vmatpush1.msra.mxu0 0.0
          %3440 = vmatprep.subr.mxu0 0.0
          %3441 = vmatpush1.msra.mxu0 0.0
          %3442 = vmatprep.subr.mxu0 0.0
          %3443 = vmatpush1.msra.mxu0 0.0
          %3444 = vmatprep.subr.mxu0 0.0
          %3445 = vmatpush1.msra.mxu0 0.0
          %3446 = vmatprep.subr.mxu0 0.0
          %3447 = vmatpush1.msra.mxu0 0.0
          %3448 = vmatprep.subr.mxu0 0.0
          %3449 = vmatpush1.msra.mxu0 0.0
          %3450 = vmatprep.subr.mxu0 0.0
          %3451 = vmatpush1.msra.mxu0 0.0
          %3452 = vmatprep.subr.mxu0 0.0
          %3453 = vmatpush1.msra.mxu0 0.0
          %3454 = vmatprep.mubr.f32.mxu0 0.0
          %3455 = vmatmul.mubr.f32.gmra.mrb[0].mxu0 %v3388
          %v3456 = vpop.f32.mrb[0].mxu0
          %v3457 = vadd.f32 0.0, %v3456
          %v3458 = vpop.f32.mrb[0].mxu0
          %3459 = vdwg.mxu0
          %v3460 = vmax.f32 %v3457, 0.0
          %v3461 = vld [vmem:[%s4] sm:$0xff]
          %vm3462 = vcmask 64512
          %v3464 = vsel %vm3462, %v3460, 0
          %3466 = vmatprep.subr.mxu0 0.0
          %3467 = vmatpush1.msra.mxu0 %v3461
          %3468 = vmatprep.subr.mxu0 0.0
          %3469 = vmatpush1.msra.mxu0 0.0
          %3470 = vmatprep.subr.mxu0 0.0
          %3471 = vmatpush1.msra.mxu0 0.0
          %3472 = vmatprep.subr.mxu0 0.0
          %3473 = vmatpush1.msra.mxu0 0.0
          %3474 = vmatprep.subr.mxu0 0.0
          %3475 = vmatpush1.msra.mxu0 0.0
          %3476 = vmatprep.subr.mxu0 0.0
          %3477 = vmatpush1.msra.mxu0 0.0
          %3478 = vmatprep.subr.mxu0 0.0
          %3479 = vmatpush1.msra.mxu0 0.0
          %3480 = vmatprep.subr.mxu0 0.0
          %3481 = vmatpush1.msra.mxu0 0.0
          %3482 = vmatprep.subr.mxu0 0.0
          %3483 = vmatpush1.msra.mxu0 0.0
          %3484 = vmatprep.subr.mxu0 0.0
          %3485 = vmatpush1.msra.mxu0 0.0
          %3486 = vmatprep.subr.mxu0 0.0
          %3487 = vmatpush1.msra.mxu0 0.0
          %3488 = vmatprep.subr.mxu0 0.0
          %3489 = vmatpush1.msra.mxu0 0.0
          %3490 = vmatprep.subr.mxu0 0.0
          %3491 = vmatpush1.msra.mxu0 0.0
          %3492 = vmatprep.subr.mxu0 0.0
          %3493 = vmatpush1.msra.mxu0 0.0
          %3494 = vmatprep.subr.mxu0 0.0
          %3495 = vmatpush1.msra.mxu0 0.0
          %3496 = vmatprep.subr.mxu0 0.0
          %3497 = vmatpush1.msra.mxu0 0.0
          %3498 = vmatprep.subr.mxu0 0.0
          %3499 = vmatpush1.msra.mxu0 0.0
          %3500 = vmatprep.subr.mxu0 0.0
          %3501 = vmatpush1.msra.mxu0 0.0
          %3502 = vmatprep.subr.mxu0 0.0
          %3503 = vmatpush1.msra.mxu0 0.0
          %3504 = vmatprep.subr.mxu0 0.0
          %3505 = vmatpush1.msra.mxu0 0.0
          %3506 = vmatprep.subr.mxu0 0.0
          %3507 = vmatpush1.msra.mxu0 0.0
          %3508 = vmatprep.subr.mxu0 0.0
          %3509 = vmatpush1.msra.mxu0 0.0
          %3510 = vmatprep.subr.mxu0 0.0
          %3511 = vmatpush1.msra.mxu0 0.0
          %3512 = vmatprep.subr.mxu0 0.0
          %3513 = vmatpush1.msra.mxu0 0.0
          %3514 = vmatprep.subr.mxu0 0.0
          %3515 = vmatpush1.msra.mxu0 0.0
          %3516 = vmatprep.subr.mxu0 0.0
          %3517 = vmatpush1.msra.mxu0 0.0
          %3518 = vmatprep.subr.mxu0 0.0
          %3519 = vmatpush1.msra.mxu0 0.0
          %3520 = vmatprep.subr.mxu0 0.0
          %3521 = vmatpush1.msra.mxu0 0.0
          %3522 = vmatprep.subr.mxu0 0.0
          %3523 = vmatpush1.msra.mxu0 0.0
          %3524 = vmatprep.subr.mxu0 0.0
          %3525 = vmatpush1.msra.mxu0 0.0
          %3526 = vmatprep.subr.mxu0 0.0
          %3527 = vmatpush1.msra.mxu0 0.0
          %3528 = vmatprep.subr.mxu0 0.0
          %3529 = vmatpush1.msra.mxu0 0.0
          %3530 = vmatprep.mubr.f32.mxu0 0.0
          %3531 = vmatmul.mubr.f32.gmra.mrb[0].mxu0 %v3464
          %v3532 = vpop.f32.mrb[0].mxu0
          %v3533 = vadd.f32 0.0, %v3532
          %v3534 = vpop.f32.mrb[0].mxu0
          %3535 = vdwg.mxu0
          %v3537 = vrot.slane %v3533, 4
          %v3539 = vadd.f32 %v3533, %v3537
          %v3540 = vmax.f32 %v3539, 0.0
          %3541 = vst.msk [vmem:[#allocation4] sm:$0xf] %vm1030, %v3540
        $region48: #{tpu_custom_call.1} parent=39 // pred_fallthru
          _
        // Predicated region
        $region49: #{tpu_custom_call.1} parent=39 // pred_check
          %p3542 = pneg %p150
        $region50: #{tpu_custom_call.1} parent=39 // pred_check_branch
          %3544 = sbr.rel (%p3542) target = $region52
        $region51: #{tpu_custom_call.1} parent=39 // pred_region
          %s3546 = ssub.s32 64, 64
          %3547 = vsyncadd [#allocation5], %s3546
          %s3549 = sshll.u32 [#allocation4], 4
          %s3550 = int_to_ptr.vmem [resolvable:$true] %s3549
          %3552 = dma.vmem_to_hbm [thread:$0]  %s3550, 64, %s5, [#allocation5]
        $region52: #{tpu_custom_call.1} parent=39 // pred_fallthru
          _
        // Predicated region
        $region53: #{tpu_custom_call.1} parent=39 // pred_check
          %p3553 = pneg %p150
        $region54: #{tpu_custom_call.1} parent=39 // pred_check_branch
          %3555 = sbr.rel (%p3553) target = $region56
        $region55: #{tpu_custom_call.1} parent=39 // pred_region
          %3556 = dma.done [#allocation5], 64
        $region56: #{tpu_custom_call.1} parent=39 // pred_fallthru
          _
      $region40: #{tpu_custom_call.1} parent=5 // pred_fallthru
        _
      %p3557 = scmp.le.s32.totalorder 2, %s12
      // Predicated region
      $region57: #{tpu_custom_call.1} parent=5 // pred_check
        %p3558 = pneg %p3557
      $region58: #{tpu_custom_call.1} parent=5 // pred_check_branch
        %3560 = sbr.rel (%p3558) target = $region60
      $region59: #{tpu_custom_call.1} parent=5 // pred_region
        %s3561 = ssub.s32 %s12, 2
      $region60: #{tpu_custom_call.1} parent=5 // pred_fallthru
        _
    $region6: #{tpu_custom_call.1} parent=1 // loop_footer
      %s16 = sadd.s32 1, %s12
    $region7: #{tpu_custom_call.1} parent=1 // loop_footer_branch
      %11 = sbr.rel target = $region3
    $region8: #{tpu_custom_call.1} parent=1 // loop_exit
      _
    %3562 = vsyncpa [#allocation5], 1
    %s3563 = scalar_lea.sflag [#allocation5], 1
    %3564 = vsyncpa %s3563, 1

</llo_original>
